<compile_context>
chip_gen: v7x
topology: tpu7x:2x2x1
jax: 0.10.0
libtpu: 0.0.40
codegen_flags: <defaults>
</compile_context>

<pallas_src>
import math
from functools import partial

import jax
import jax.numpy as jnp
from jax.experimental import pallas as pl
from jax.experimental.pallas import tpu as pltpu

LOGIT_PAD = 128  # lane-dense padded width for the logits output


# -----------------------------------------------------------------------------
# Fused Pallas kernel: embedding-output -> N encoder layers -> classifier logits
# -----------------------------------------------------------------------------
def transformer_kernel(x_ref, mask_ref,
                       wq_ref, bq_ref, wk_ref, bk_ref, wv_ref, bv_ref,
                       wo_ref, bo_ref, w1_ref, b1_ref, w2_ref, b2_ref,
                       g1_ref, be1_ref, g2_ref, be2_ref,
                       fcw_ref, fcb_ref,
                       out_ref, *, num_heads, num_layers):
    x = x_ref[...].astype(jnp.float32)            # (B, S, D)
    B, S, D = x.shape
    dk = D // num_heads
    scale = 1.0 / math.sqrt(dk)
    mask = mask_ref[...].astype(jnp.float32)      # (B, S); 1 = keep, 0 = pad

    x2 = x.reshape(B * S, D)                      # flat token rows for matmuls / LN / FFN

    for li in range(num_layers):                  # static, unrolled layer loop
        wq = wq_ref[li]; bq = bq_ref[li]
        wk = wk_ref[li]; bk = bk_ref[li]
        wv = wv_ref[li]; bv = bv_ref[li]
        wo = wo_ref[li]; bo = bo_ref[li]
        w1 = w1_ref[li]; b1 = b1_ref[li]
        w2 = w2_ref[li]; b2 = b2_ref[li]
        g1 = g1_ref[li]; be1 = be1_ref[li]
        g2 = g2_ref[li]; be2 = be2_ref[li]

        # Q, K, V projections over all tokens at once
        q = jnp.dot(x2, wq, preferred_element_type=jnp.float32) + bq   # (B*S, D)
        k = jnp.dot(x2, wk, preferred_element_type=jnp.float32) + bk
        v = jnp.dot(x2, wv, preferred_element_type=jnp.float32) + bv

        # scaled dot-product attention: static batch loop, heads batched in one einsum
        ctx_rows = []
        for b in range(B):
            q_b = q[b * S:(b + 1) * S]            # (S, D)
            k_b = k[b * S:(b + 1) * S]
            v_b = v[b * S:(b + 1) * S]
            qh = jnp.stack([q_b[:, h * dk:(h + 1) * dk] for h in range(num_heads)], axis=0)
            kh = jnp.stack([k_b[:, h * dk:(h + 1) * dk] for h in range(num_heads)], axis=0)
            vh = jnp.stack([v_b[:, h * dk:(h + 1) * dk] for h in range(num_heads)], axis=0)
            # scores over all heads: (H, S, S)
            s = jnp.einsum('hqd,hkd->hqk', qh, kh,
                           preferred_element_type=jnp.float32) * scale
            kmask = mask[b:b + 1, :]              # (1, S) key mask, broadcast over heads/rows
            s = jnp.where(kmask[None] > 0.5, s, -1e9)
            s = s - jnp.max(s, axis=-1, keepdims=True)
            p = jnp.exp(s)
            p = p * pl.reciprocal(jnp.sum(p, axis=-1, keepdims=True), approx=True)
            cb = jnp.einsum('hqk,hkd->hqd', p, vh,
                            preferred_element_type=jnp.float32)         # (H, S, dk)
            ctx_rows.append(jnp.concatenate([cb[h] for h in range(num_heads)], axis=-1))
        ctx = jnp.concatenate(ctx_rows, axis=0)   # (B*S, D)

        attn = jnp.dot(ctx, wo, preferred_element_type=jnp.float32) + bo

        # residual + LayerNorm 1 (eps = 1e-5, like nn.LayerNorm)
        y = x2 + attn
        mu = jnp.mean(y, axis=-1, keepdims=True)
        var = jnp.mean((y - mu) ** 2, axis=-1, keepdims=True)
        y = (y - mu) * jax.lax.rsqrt(var + 1e-5) * g1 + be1

        # position-wise FFN: ReLU(y W1 + b1) W2 + b2
        h1 = jnp.maximum(
            jnp.dot(y, w1, preferred_element_type=jnp.float32) + b1, 0.0)
        ff = jnp.dot(h1, w2, preferred_element_type=jnp.float32) + b2

        # residual + LayerNorm 2
        z = y + ff
        mu2 = jnp.mean(z, axis=-1, keepdims=True)
        var2 = jnp.mean((z - mu2) ** 2, axis=-1, keepdims=True)
        x2 = (z - mu2) * jax.lax.rsqrt(var2 + 1e-5) * g2 + be2

    # final classifier on the CLS token (position 0 of each sequence)
    x_cls = x2.reshape(B, S, D)[:, 0, :]          # (B, D)
    logits = (jnp.dot(x_cls, fcw_ref[...], preferred_element_type=jnp.float32)
              + fcb_ref[...])                      # (B, LOGIT_PAD) — lane-dense store
    out_ref[...] = logits.astype(out_ref.dtype)


# -----------------------------------------------------------------------------
# Wrapper / params
# -----------------------------------------------------------------------------
def sinusoidal_pe(max_len, d_model):
    pos = jnp.arange(max_len, dtype=jnp.float32)[:, None]
    div = jnp.exp(jnp.arange(0, d_model, 2, dtype=jnp.float32)
                  * (-math.log(10000.0) / d_model))
    pe = jnp.zeros((max_len, d_model), jnp.float32)
    pe = pe.at[:, 0::2].set(jnp.sin(pos * div))
    pe = pe.at[:, 1::2].set(jnp.cos(pos * div))
    return pe


def init_params(key, vocab, d_model, num_layers, d_ff, max_seq):
    ks = jax.random.split(key, 2 + 6 * num_layers)

    def nrm(k, shape):
        return 0.02 * jax.random.normal(k, shape, jnp.float32)

    def stack_w(idx, shape):
        return jnp.stack([nrm(ks[2 + 6 * l + idx], shape) for l in range(num_layers)])

    def zeros(shape):
        return jnp.zeros((num_layers,) + shape, jnp.float32)

    def ones(shape):
        return jnp.ones((num_layers,) + shape, jnp.float32)

    params = {
        "embedding": nrm(ks[0], (vocab, d_model)),
        "pe": sinusoidal_pe(max_seq, d_model),
        "fc_w": nrm(ks[1], (d_model, 2)),
        "fc_b": jnp.zeros((1, 2), jnp.float32),
        "layers": {
            # weights stored as (num_layers, in, out) so the kernel computes x @ W + b
            "wq": stack_w(0, (d_model, d_model)), "bq": zeros((1, d_model)),
            "wk": stack_w(1, (d_model, d_model)), "bk": zeros((1, d_model)),
            "wv": stack_w(2, (d_model, d_model)), "bv": zeros((1, d_model)),
            "wo": stack_w(3, (d_model, d_model)), "bo": zeros((1, d_model)),
            "w1": stack_w(4, (d_model, d_ff)),    "b1": zeros((1, d_ff)),
            "w2": stack_w(5, (d_ff, d_model)),    "b2": zeros((1, d_model)),
            "g1": ones((1, d_model)),  "be1": zeros((1, d_model)),
            "g2": ones((1, d_model)),  "be2": zeros((1, d_model)),
        },
    }
    return params


def transformer_forward(src, attention_mask, params, num_heads):
    B, S = src.shape
    D = params["embedding"].shape[1]
    num_layers = params["layers"]["wq"].shape[0]

    # embedding lookup + positional encoding (glue, plain JAX); dropout = identity (eval)
    x = jnp.take(params["embedding"], src, axis=0) + params["pe"][:S][None, :, :]

    # classifier weights zero-padded to a lane-dense 128-wide output
    fc_w = jnp.zeros((D, LOGIT_PAD), jnp.float32).at[:, :2].set(params["fc_w"])
    fc_b = jnp.zeros((1, LOGIT_PAD), jnp.float32).at[:, :2].set(params["fc_b"])

    lp = params["layers"]
    vmem = pl.BlockSpec(memory_space=pltpu.MemorySpace.VMEM)   # full array, VMEM-resident
    kernel = partial(transformer_kernel, num_heads=num_heads, num_layers=num_layers)

    logits_pad = pl.pallas_call(
        kernel,
        out_shape=jax.ShapeDtypeStruct((B, LOGIT_PAD), jnp.float32),
        in_specs=[vmem] * 20,
        out_specs=vmem,
    )(x, attention_mask.astype(jnp.float32),
      lp["wq"], lp["bq"], lp["wk"], lp["bk"], lp["wv"], lp["bv"],
      lp["wo"], lp["bo"], lp["w1"], lp["b1"], lp["w2"], lp["b2"],
      lp["g1"], lp["be1"], lp["g2"], lp["be2"],
      fc_w, fc_b)

    return logits_pad[:, :2]


# -----------------------------------------------------------------------------
if __name__ == "__main__":
    src_vocab_size = 50
    d_model = 32
    num_heads = 4
    num_layers = 2
    d_ff = 64
    max_seq_length = 16
    batch, seq = 2, 8

    key = jax.random.PRNGKey(0)
    k_param, k_src = jax.random.split(key)
    params = init_params(k_param, src_vocab_size, d_model, num_layers, d_ff,
                         max_seq_length)

    src = jax.random.randint(k_src, (batch, seq), 0, src_vocab_size, dtype=jnp.int32)
    attention_mask = jnp.array([[1, 1, 1, 1, 1, 1, 0, 0],
                                [1, 1, 1, 1, 1, 1, 1, 1]], dtype=jnp.int32)

    logits = transformer_forward(src, attention_mask, params, num_heads)
    logits = jax.block_until_ready(logits)

    assert logits.shape == (batch, 2)
    assert bool(jnp.all(jnp.isfinite(logits)))
    print("KERNEL_OK")
</pallas_src>

<mosaic_0001>
module attributes {stable_mosaic.version = 11 : i64} {
  func.func @transformer_kernel(%arg0: memref<2x8x32xf32, #tpu.memory_space<vmem>>, %arg1: memref<2x8xf32, #tpu.memory_space<vmem>>, %arg2: memref<2x32x32xf32, #tpu.memory_space<vmem>>, %arg3: memref<2x1x32xf32, #tpu.memory_space<vmem>>, %arg4: memref<2x32x32xf32, #tpu.memory_space<vmem>>, %arg5: memref<2x1x32xf32, #tpu.memory_space<vmem>>, %arg6: memref<2x32x32xf32, #tpu.memory_space<vmem>>, %arg7: memref<2x1x32xf32, #tpu.memory_space<vmem>>, %arg8: memref<2x32x32xf32, #tpu.memory_space<vmem>>, %arg9: memref<2x1x32xf32, #tpu.memory_space<vmem>>, %arg10: memref<2x32x64xf32, #tpu.memory_space<vmem>>, %arg11: memref<2x1x64xf32, #tpu.memory_space<vmem>>, %arg12: memref<2x64x32xf32, #tpu.memory_space<vmem>>, %arg13: memref<2x1x32xf32, #tpu.memory_space<vmem>>, %arg14: memref<2x1x32xf32, #tpu.memory_space<vmem>>, %arg15: memref<2x1x32xf32, #tpu.memory_space<vmem>>, %arg16: memref<2x1x32xf32, #tpu.memory_space<vmem>>, %arg17: memref<2x1x32xf32, #tpu.memory_space<vmem>>, %arg18: memref<32x128xf32, #tpu.memory_space<vmem>>, %arg19: memref<1x128xf32, #tpu.memory_space<vmem>>, %arg20: memref<2x128xf32, #tpu.memory_space<vmem>>) attributes {dimension_semantics = [], scalar_prefetch = 0 : i64, scratch_operands = 0 : i64, tpu.core_type = #tpu.core_type<tc>} {
    %c0 = arith.constant 0 : index
    %c0_0 = arith.constant 0 : index
    %c0_1 = arith.constant 0 : index
    %0 = vector.load %arg0[%c0, %c0_0, %c0_1] : memref<2x8x32xf32, #tpu.memory_space<vmem>>, vector<2x8x32xf32>
    %c0_2 = arith.constant 0 : index
    %c0_3 = arith.constant 0 : index
    %1 = vector.load %arg1[%c0_2, %c0_3] : memref<2x8xf32, #tpu.memory_space<vmem>>, vector<2x8xf32>
    %2 = vector.shape_cast %0 : vector<2x8x32xf32> to vector<16x32xf32>
    %c0_4 = arith.constant 0 : index
    %c0_5 = arith.constant 0 : index
    %c0_6 = arith.constant 0 : index
    %3 = vector.load %arg2[%c0_4, %c0_5, %c0_6] : memref<2x32x32xf32, #tpu.memory_space<vmem>>, vector<1x32x32xf32>
    %4 = vector.shape_cast %3 : vector<1x32x32xf32> to vector<32x32xf32>
    %c0_7 = arith.constant 0 : index
    %c0_8 = arith.constant 0 : index
    %c0_9 = arith.constant 0 : index
    %5 = vector.load %arg3[%c0_7, %c0_8, %c0_9] : memref<2x1x32xf32, #tpu.memory_space<vmem>>, vector<1x1x32xf32>
    %6 = vector.shape_cast %5 : vector<1x1x32xf32> to vector<1x32xf32>
    %c0_10 = arith.constant 0 : index
    %c0_11 = arith.constant 0 : index
    %c0_12 = arith.constant 0 : index
    %7 = vector.load %arg4[%c0_10, %c0_11, %c0_12] : memref<2x32x32xf32, #tpu.memory_space<vmem>>, vector<1x32x32xf32>
    %8 = vector.shape_cast %7 : vector<1x32x32xf32> to vector<32x32xf32>
    %c0_13 = arith.constant 0 : index
    %c0_14 = arith.constant 0 : index
    %c0_15 = arith.constant 0 : index
    %9 = vector.load %arg5[%c0_13, %c0_14, %c0_15] : memref<2x1x32xf32, #tpu.memory_space<vmem>>, vector<1x1x32xf32>
    %10 = vector.shape_cast %9 : vector<1x1x32xf32> to vector<1x32xf32>
    %c0_16 = arith.constant 0 : index
    %c0_17 = arith.constant 0 : index
    %c0_18 = arith.constant 0 : index
    %11 = vector.load %arg6[%c0_16, %c0_17, %c0_18] : memref<2x32x32xf32, #tpu.memory_space<vmem>>, vector<1x32x32xf32>
    %12 = vector.shape_cast %11 : vector<1x32x32xf32> to vector<32x32xf32>
    %c0_19 = arith.constant 0 : index
    %c0_20 = arith.constant 0 : index
    %c0_21 = arith.constant 0 : index
    %13 = vector.load %arg7[%c0_19, %c0_20, %c0_21] : memref<2x1x32xf32, #tpu.memory_space<vmem>>, vector<1x1x32xf32>
    %14 = vector.shape_cast %13 : vector<1x1x32xf32> to vector<1x32xf32>
    %c0_22 = arith.constant 0 : index
    %c0_23 = arith.constant 0 : index
    %c0_24 = arith.constant 0 : index
    %15 = vector.load %arg8[%c0_22, %c0_23, %c0_24] : memref<2x32x32xf32, #tpu.memory_space<vmem>>, vector<1x32x32xf32>
    %16 = vector.shape_cast %15 : vector<1x32x32xf32> to vector<32x32xf32>
    %c0_25 = arith.constant 0 : index
    %c0_26 = arith.constant 0 : index
    %c0_27 = arith.constant 0 : index
    %17 = vector.load %arg9[%c0_25, %c0_26, %c0_27] : memref<2x1x32xf32, #tpu.memory_space<vmem>>, vector<1x1x32xf32>
    %18 = vector.shape_cast %17 : vector<1x1x32xf32> to vector<1x32xf32>
    %c0_28 = arith.constant 0 : index
    %c0_29 = arith.constant 0 : index
    %c0_30 = arith.constant 0 : index
    %19 = vector.load %arg10[%c0_28, %c0_29, %c0_30] : memref<2x32x64xf32, #tpu.memory_space<vmem>>, vector<1x32x64xf32>
    %20 = vector.shape_cast %19 : vector<1x32x64xf32> to vector<32x64xf32>
    %c0_31 = arith.constant 0 : index
    %c0_32 = arith.constant 0 : index
    %c0_33 = arith.constant 0 : index
    %21 = vector.load %arg11[%c0_31, %c0_32, %c0_33] : memref<2x1x64xf32, #tpu.memory_space<vmem>>, vector<1x1x64xf32>
    %22 = vector.shape_cast %21 : vector<1x1x64xf32> to vector<1x64xf32>
    %c0_34 = arith.constant 0 : index
    %c0_35 = arith.constant 0 : index
    %c0_36 = arith.constant 0 : index
    %23 = vector.load %arg12[%c0_34, %c0_35, %c0_36] : memref<2x64x32xf32, #tpu.memory_space<vmem>>, vector<1x64x32xf32>
    %24 = vector.shape_cast %23 : vector<1x64x32xf32> to vector<64x32xf32>
    %c0_37 = arith.constant 0 : index
    %c0_38 = arith.constant 0 : index
    %c0_39 = arith.constant 0 : index
    %25 = vector.load %arg13[%c0_37, %c0_38, %c0_39] : memref<2x1x32xf32, #tpu.memory_space<vmem>>, vector<1x1x32xf32>
    %26 = vector.shape_cast %25 : vector<1x1x32xf32> to vector<1x32xf32>
    %c0_40 = arith.constant 0 : index
    %c0_41 = arith.constant 0 : index
    %c0_42 = arith.constant 0 : index
    %27 = vector.load %arg14[%c0_40, %c0_41, %c0_42] : memref<2x1x32xf32, #tpu.memory_space<vmem>>, vector<1x1x32xf32>
    %28 = vector.shape_cast %27 : vector<1x1x32xf32> to vector<1x32xf32>
    %c0_43 = arith.constant 0 : index
    %c0_44 = arith.constant 0 : index
    %c0_45 = arith.constant 0 : index
    %29 = vector.load %arg15[%c0_43, %c0_44, %c0_45] : memref<2x1x32xf32, #tpu.memory_space<vmem>>, vector<1x1x32xf32>
    %30 = vector.shape_cast %29 : vector<1x1x32xf32> to vector<1x32xf32>
    %c0_46 = arith.constant 0 : index
    %c0_47 = arith.constant 0 : index
    %c0_48 = arith.constant 0 : index
    %31 = vector.load %arg16[%c0_46, %c0_47, %c0_48] : memref<2x1x32xf32, #tpu.memory_space<vmem>>, vector<1x1x32xf32>
    %32 = vector.shape_cast %31 : vector<1x1x32xf32> to vector<1x32xf32>
    %c0_49 = arith.constant 0 : index
    %c0_50 = arith.constant 0 : index
    %c0_51 = arith.constant 0 : index
    %33 = vector.load %arg17[%c0_49, %c0_50, %c0_51] : memref<2x1x32xf32, #tpu.memory_space<vmem>>, vector<1x1x32xf32>
    %34 = vector.shape_cast %33 : vector<1x1x32xf32> to vector<1x32xf32>
    %cst = arith.constant dense<0.000000e+00> : vector<16x32xf32>
    %35 = tpu.matmul %2, %4, %cst {dimension_numbers = #tpu.dot_dimension_numbers<[1], [0], [0], [1], [0, 0, 1, 1], [], []>} : vector<16x32xf32>, vector<32x32xf32>, vector<16x32xf32> -> vector<16x32xf32>
    %36 = vector.broadcast %6 : vector<1x32xf32> to vector<16x32xf32>
    %37 = arith.addf %35, %36 : vector<16x32xf32>
    %cst_52 = arith.constant dense<0.000000e+00> : vector<16x32xf32>
    %38 = tpu.matmul %2, %8, %cst_52 {dimension_numbers = #tpu.dot_dimension_numbers<[1], [0], [0], [1], [0, 0, 1, 1], [], []>} : vector<16x32xf32>, vector<32x32xf32>, vector<16x32xf32> -> vector<16x32xf32>
    %39 = vector.broadcast %10 : vector<1x32xf32> to vector<16x32xf32>
    %40 = arith.addf %38, %39 : vector<16x32xf32>
    %cst_53 = arith.constant dense<0.000000e+00> : vector<16x32xf32>
    %41 = tpu.matmul %2, %12, %cst_53 {dimension_numbers = #tpu.dot_dimension_numbers<[1], [0], [0], [1], [0, 0, 1, 1], [], []>} : vector<16x32xf32>, vector<32x32xf32>, vector<16x32xf32> -> vector<16x32xf32>
    %42 = vector.broadcast %14 : vector<1x32xf32> to vector<16x32xf32>
    %43 = arith.addf %41, %42 : vector<16x32xf32>
    %44 = vector.extract_strided_slice %37 {offsets = [0, 0], sizes = [8, 32], strides = [1, 1]} : vector<16x32xf32> to vector<8x32xf32>
    %45 = vector.extract_strided_slice %40 {offsets = [0, 0], sizes = [8, 32], strides = [1, 1]} : vector<16x32xf32> to vector<8x32xf32>
    %46 = vector.extract_strided_slice %43 {offsets = [0, 0], sizes = [8, 32], strides = [1, 1]} : vector<16x32xf32> to vector<8x32xf32>
    %47 = vector.extract_strided_slice %44 {offsets = [0, 0], sizes = [8, 8], strides = [1, 1]} : vector<8x32xf32> to vector<8x8xf32>
    %48 = vector.extract_strided_slice %44 {offsets = [0, 8], sizes = [8, 8], strides = [1, 1]} : vector<8x32xf32> to vector<8x8xf32>
    %49 = vector.extract_strided_slice %44 {offsets = [0, 16], sizes = [8, 8], strides = [1, 1]} : vector<8x32xf32> to vector<8x8xf32>
    %50 = vector.extract_strided_slice %44 {offsets = [0, 24], sizes = [8, 8], strides = [1, 1]} : vector<8x32xf32> to vector<8x8xf32>
    %51 = vector.shape_cast %47 : vector<8x8xf32> to vector<1x8x8xf32>
    %52 = vector.shape_cast %48 : vector<8x8xf32> to vector<1x8x8xf32>
    %53 = vector.shape_cast %49 : vector<8x8xf32> to vector<1x8x8xf32>
    %54 = vector.shape_cast %50 : vector<8x8xf32> to vector<1x8x8xf32>
    %55 = tpu.concatenate %51, %52, %53, %54 in 0 : vector<1x8x8xf32>, vector<1x8x8xf32>, vector<1x8x8xf32>, vector<1x8x8xf32> -> vector<4x8x8xf32>
    %56 = vector.extract_strided_slice %45 {offsets = [0, 0], sizes = [8, 8], strides = [1, 1]} : vector<8x32xf32> to vector<8x8xf32>
    %57 = vector.extract_strided_slice %45 {offsets = [0, 8], sizes = [8, 8], strides = [1, 1]} : vector<8x32xf32> to vector<8x8xf32>
    %58 = vector.extract_strided_slice %45 {offsets = [0, 16], sizes = [8, 8], strides = [1, 1]} : vector<8x32xf32> to vector<8x8xf32>
    %59 = vector.extract_strided_slice %45 {offsets = [0, 24], sizes = [8, 8], strides = [1, 1]} : vector<8x32xf32> to vector<8x8xf32>
    %60 = vector.shape_cast %56 : vector<8x8xf32> to vector<1x8x8xf32>
    %61 = vector.shape_cast %57 : vector<8x8xf32> to vector<1x8x8xf32>
    %62 = vector.shape_cast %58 : vector<8x8xf32> to vector<1x8x8xf32>
    %63 = vector.shape_cast %59 : vector<8x8xf32> to vector<1x8x8xf32>
    %64 = tpu.concatenate %60, %61, %62, %63 in 0 : vector<1x8x8xf32>, vector<1x8x8xf32>, vector<1x8x8xf32>, vector<1x8x8xf32> -> vector<4x8x8xf32>
    %65 = vector.extract_strided_slice %46 {offsets = [0, 0], sizes = [8, 8], strides = [1, 1]} : vector<8x32xf32> to vector<8x8xf32>
    %66 = vector.extract_strided_slice %46 {offsets = [0, 8], sizes = [8, 8], strides = [1, 1]} : vector<8x32xf32> to vector<8x8xf32>
    %67 = vector.extract_strided_slice %46 {offsets = [0, 16], sizes = [8, 8], strides = [1, 1]} : vector<8x32xf32> to vector<8x8xf32>
    %68 = vector.extract_strided_slice %46 {offsets = [0, 24], sizes = [8, 8], strides = [1, 1]} : vector<8x32xf32> to vector<8x8xf32>
    %69 = vector.shape_cast %65 : vector<8x8xf32> to vector<1x8x8xf32>
    %70 = vector.shape_cast %66 : vector<8x8xf32> to vector<1x8x8xf32>
    %71 = vector.shape_cast %67 : vector<8x8xf32> to vector<1x8x8xf32>
    %72 = vector.shape_cast %68 : vector<8x8xf32> to vector<1x8x8xf32>
    %73 = tpu.concatenate %69, %70, %71, %72 in 0 : vector<1x8x8xf32>, vector<1x8x8xf32>, vector<1x8x8xf32>, vector<1x8x8xf32> -> vector<4x8x8xf32>
    "tpu.trace_start"() <{level = 10 : i32, message = "hqd,hkd->hqk"}> : () -> ()
    %cst_54 = arith.constant dense<0.000000e+00> : vector<4x8x8xf32>
    %74 = tpu.matmul %55, %64, %cst_54 {dimension_numbers = #tpu.dot_dimension_numbers<[2], [2], [1], [1], [0, 0, 0, 1, 1, 1], [0], [0]>} : vector<4x8x8xf32>, vector<4x8x8xf32>, vector<4x8x8xf32> -> vector<4x8x8xf32>
    "tpu.trace_stop"() : () -> ()
    %cst_55 = arith.constant 0.353553385 : f32
    %75 = vector.broadcast %cst_55 : f32 to vector<4x8x8xf32>
    %76 = arith.mulf %74, %75 : vector<4x8x8xf32>
    %77 = vector.extract_strided_slice %1 {offsets = [0, 0], sizes = [1, 8], strides = [1, 1]} : vector<2x8xf32> to vector<1x8xf32>
    %78 = vector.shape_cast %77 : vector<1x8xf32> to vector<1x1x8xf32>
    %cst_56 = arith.constant 5.000000e-01 : f32
    %79 = vector.broadcast %cst_56 : f32 to vector<1x1x8xf32>
    %80 = arith.cmpf ogt, %78, %79 : vector<1x1x8xf32>
    %cst_57 = arith.constant -1.000000e+09 : f32
    %81 = vector.shape_cast %80 : vector<1x1x8xi1> to vector<1x1x8xi1>
    %82 = vector.broadcast %81 : vector<1x1x8xi1> to vector<4x8x8xi1>
    %83 = vector.broadcast %cst_57 : f32 to vector<4x8x8xf32>
    %84 = arith.select %82, %76, %83 : vector<4x8x8xi1>, vector<4x8x8xf32>
    %cst_58 = arith.constant dense<0xFF800000> : vector<4x8xf32>
    %85 = vector.multi_reduction <maximumf>, %84, %cst_58 [2] : vector<4x8x8xf32> to vector<4x8xf32>
    %86 = vector.shape_cast %85 : vector<4x8xf32> to vector<4x8x1xf32>
    %87 = vector.broadcast %86 : vector<4x8x1xf32> to vector<4x8x8xf32>
    %88 = arith.subf %84, %87 : vector<4x8x8xf32>
    %89 = math.exp %88 : vector<4x8x8xf32>
    %cst_59 = arith.constant dense<0.000000e+00> : vector<4x8xf32>
    %90 = vector.multi_reduction <add>, %89, %cst_59 [2] : vector<4x8x8xf32> to vector<4x8xf32>
    %91 = vector.shape_cast %90 : vector<4x8xf32> to vector<4x8x1xf32>
    %92 = tpu.reciprocal %91 {approx = true} : vector<4x8x1xf32> -> vector<4x8x1xf32>
    %93 = vector.broadcast %92 : vector<4x8x1xf32> to vector<4x8x8xf32>
    %94 = arith.mulf %89, %93 : vector<4x8x8xf32>
    "tpu.trace_start"() <{level = 10 : i32, message = "hqk,hkd->hqd"}> : () -> ()
    %cst_60 = arith.constant dense<0.000000e+00> : vector<4x8x8xf32>
    %95 = tpu.matmul %94, %73, %cst_60 {dimension_numbers = #tpu.dot_dimension_numbers<[2], [1], [1], [2], [0, 0, 0, 1, 1, 2], [0], [0]>} : vector<4x8x8xf32>, vector<4x8x8xf32>, vector<4x8x8xf32> -> vector<4x8x8xf32>
    "tpu.trace_stop"() : () -> ()
    %96 = vector.extract_strided_slice %95 {offsets = [0, 0, 0], sizes = [1, 8, 8], strides = [1, 1, 1]} : vector<4x8x8xf32> to vector<1x8x8xf32>
    %97 = vector.shape_cast %96 : vector<1x8x8xf32> to vector<8x8xf32>
    %98 = vector.extract_strided_slice %95 {offsets = [1, 0, 0], sizes = [1, 8, 8], strides = [1, 1, 1]} : vector<4x8x8xf32> to vector<1x8x8xf32>
    %99 = vector.shape_cast %98 : vector<1x8x8xf32> to vector<8x8xf32>
    %100 = vector.extract_strided_slice %95 {offsets = [2, 0, 0], sizes = [1, 8, 8], strides = [1, 1, 1]} : vector<4x8x8xf32> to vector<1x8x8xf32>
    %101 = vector.shape_cast %100 : vector<1x8x8xf32> to vector<8x8xf32>
    %102 = vector.extract_strided_slice %95 {offsets = [3, 0, 0], sizes = [1, 8, 8], strides = [1, 1, 1]} : vector<4x8x8xf32> to vector<1x8x8xf32>
    %103 = vector.shape_cast %102 : vector<1x8x8xf32> to vector<8x8xf32>
    %104 = tpu.concatenate %97, %99, %101, %103 in 1 : vector<8x8xf32>, vector<8x8xf32>, vector<8x8xf32>, vector<8x8xf32> -> vector<8x32xf32>
    %105 = vector.extract_strided_slice %37 {offsets = [8, 0], sizes = [8, 32], strides = [1, 1]} : vector<16x32xf32> to vector<8x32xf32>
    %106 = vector.extract_strided_slice %40 {offsets = [8, 0], sizes = [8, 32], strides = [1, 1]} : vector<16x32xf32> to vector<8x32xf32>
    %107 = vector.extract_strided_slice %43 {offsets = [8, 0], sizes = [8, 32], strides = [1, 1]} : vector<16x32xf32> to vector<8x32xf32>
    %108 = vector.extract_strided_slice %105 {offsets = [0, 0], sizes = [8, 8], strides = [1, 1]} : vector<8x32xf32> to vector<8x8xf32>
    %109 = vector.extract_strided_slice %105 {offsets = [0, 8], sizes = [8, 8], strides = [1, 1]} : vector<8x32xf32> to vector<8x8xf32>
    %110 = vector.extract_strided_slice %105 {offsets = [0, 16], sizes = [8, 8], strides = [1, 1]} : vector<8x32xf32> to vector<8x8xf32>
    %111 = vector.extract_strided_slice %105 {offsets = [0, 24], sizes = [8, 8], strides = [1, 1]} : vector<8x32xf32> to vector<8x8xf32>
    %112 = vector.shape_cast %108 : vector<8x8xf32> to vector<1x8x8xf32>
    %113 = vector.shape_cast %109 : vector<8x8xf32> to vector<1x8x8xf32>
    %114 = vector.shape_cast %110 : vector<8x8xf32> to vector<1x8x8xf32>
    %115 = vector.shape_cast %111 : vector<8x8xf32> to vector<1x8x8xf32>
    %116 = tpu.concatenate %112, %113, %114, %115 in 0 : vector<1x8x8xf32>, vector<1x8x8xf32>, vector<1x8x8xf32>, vector<1x8x8xf32> -> vector<4x8x8xf32>
    %117 = vector.extract_strided_slice %106 {offsets = [0, 0], sizes = [8, 8], strides = [1, 1]} : vector<8x32xf32> to vector<8x8xf32>
    %118 = vector.extract_strided_slice %106 {offsets = [0, 8], sizes = [8, 8], strides = [1, 1]} : vector<8x32xf32> to vector<8x8xf32>
    %119 = vector.extract_strided_slice %106 {offsets = [0, 16], sizes = [8, 8], strides = [1, 1]} : vector<8x32xf32> to vector<8x8xf32>
    %120 = vector.extract_strided_slice %106 {offsets = [0, 24], sizes = [8, 8], strides = [1, 1]} : vector<8x32xf32> to vector<8x8xf32>
    %121 = vector.shape_cast %117 : vector<8x8xf32> to vector<1x8x8xf32>
    %122 = vector.shape_cast %118 : vector<8x8xf32> to vector<1x8x8xf32>
    %123 = vector.shape_cast %119 : vector<8x8xf32> to vector<1x8x8xf32>
    %124 = vector.shape_cast %120 : vector<8x8xf32> to vector<1x8x8xf32>
    %125 = tpu.concatenate %121, %122, %123, %124 in 0 : vector<1x8x8xf32>, vector<1x8x8xf32>, vector<1x8x8xf32>, vector<1x8x8xf32> -> vector<4x8x8xf32>
    %126 = vector.extract_strided_slice %107 {offsets = [0, 0], sizes = [8, 8], strides = [1, 1]} : vector<8x32xf32> to vector<8x8xf32>
    %127 = vector.extract_strided_slice %107 {offsets = [0, 8], sizes = [8, 8], strides = [1, 1]} : vector<8x32xf32> to vector<8x8xf32>
    %128 = vector.extract_strided_slice %107 {offsets = [0, 16], sizes = [8, 8], strides = [1, 1]} : vector<8x32xf32> to vector<8x8xf32>
    %129 = vector.extract_strided_slice %107 {offsets = [0, 24], sizes = [8, 8], strides = [1, 1]} : vector<8x32xf32> to vector<8x8xf32>
    %130 = vector.shape_cast %126 : vector<8x8xf32> to vector<1x8x8xf32>
    %131 = vector.shape_cast %127 : vector<8x8xf32> to vector<1x8x8xf32>
    %132 = vector.shape_cast %128 : vector<8x8xf32> to vector<1x8x8xf32>
    %133 = vector.shape_cast %129 : vector<8x8xf32> to vector<1x8x8xf32>
    %134 = tpu.concatenate %130, %131, %132, %133 in 0 : vector<1x8x8xf32>, vector<1x8x8xf32>, vector<1x8x8xf32>, vector<1x8x8xf32> -> vector<4x8x8xf32>
    "tpu.trace_start"() <{level = 10 : i32, message = "hqd,hkd->hqk"}> : () -> ()
    %cst_61 = arith.constant dense<0.000000e+00> : vector<4x8x8xf32>
    %135 = tpu.matmul %116, %125, %cst_61 {dimension_numbers = #tpu.dot_dimension_numbers<[2], [2], [1], [1], [0, 0, 0, 1, 1, 1], [0], [0]>} : vector<4x8x8xf32>, vector<4x8x8xf32>, vector<4x8x8xf32> -> vector<4x8x8xf32>
    "tpu.trace_stop"() : () -> ()
    %cst_62 = arith.constant 0.353553385 : f32
    %136 = vector.broadcast %cst_62 : f32 to vector<4x8x8xf32>
    %137 = arith.mulf %135, %136 : vector<4x8x8xf32>
    %138 = vector.extract_strided_slice %1 {offsets = [1, 0], sizes = [1, 8], strides = [1, 1]} : vector<2x8xf32> to vector<1x8xf32>
    %139 = vector.shape_cast %138 : vector<1x8xf32> to vector<1x1x8xf32>
    %cst_63 = arith.constant 5.000000e-01 : f32
    %140 = vector.broadcast %cst_63 : f32 to vector<1x1x8xf32>
    %141 = arith.cmpf ogt, %139, %140 : vector<1x1x8xf32>
    %cst_64 = arith.constant -1.000000e+09 : f32
    %142 = vector.shape_cast %141 : vector<1x1x8xi1> to vector<1x1x8xi1>
    %143 = vector.broadcast %142 : vector<1x1x8xi1> to vector<4x8x8xi1>
    %144 = vector.broadcast %cst_64 : f32 to vector<4x8x8xf32>
    %145 = arith.select %143, %137, %144 : vector<4x8x8xi1>, vector<4x8x8xf32>
    %cst_65 = arith.constant dense<0xFF800000> : vector<4x8xf32>
    %146 = vector.multi_reduction <maximumf>, %145, %cst_65 [2] : vector<4x8x8xf32> to vector<4x8xf32>
    %147 = vector.shape_cast %146 : vector<4x8xf32> to vector<4x8x1xf32>
    %148 = vector.broadcast %147 : vector<4x8x1xf32> to vector<4x8x8xf32>
    %149 = arith.subf %145, %148 : vector<4x8x8xf32>
    %150 = math.exp %149 : vector<4x8x8xf32>
    %cst_66 = arith.constant dense<0.000000e+00> : vector<4x8xf32>
    %151 = vector.multi_reduction <add>, %150, %cst_66 [2] : vector<4x8x8xf32> to vector<4x8xf32>
    %152 = vector.shape_cast %151 : vector<4x8xf32> to vector<4x8x1xf32>
    %153 = tpu.reciprocal %152 {approx = true} : vector<4x8x1xf32> -> vector<4x8x1xf32>
    %154 = vector.broadcast %153 : vector<4x8x1xf32> to vector<4x8x8xf32>
    %155 = arith.mulf %150, %154 : vector<4x8x8xf32>
    "tpu.trace_start"() <{level = 10 : i32, message = "hqk,hkd->hqd"}> : () -> ()
    %cst_67 = arith.constant dense<0.000000e+00> : vector<4x8x8xf32>
    %156 = tpu.matmul %155, %134, %cst_67 {dimension_numbers = #tpu.dot_dimension_numbers<[2], [1], [1], [2], [0, 0, 0, 1, 1, 2], [0], [0]>} : vector<4x8x8xf32>, vector<4x8x8xf32>, vector<4x8x8xf32> -> vector<4x8x8xf32>
    "tpu.trace_stop"() : () -> ()
    %157 = vector.extract_strided_slice %156 {offsets = [0, 0, 0], sizes = [1, 8, 8], strides = [1, 1, 1]} : vector<4x8x8xf32> to vector<1x8x8xf32>
    %158 = vector.shape_cast %157 : vector<1x8x8xf32> to vector<8x8xf32>
    %159 = vector.extract_strided_slice %156 {offsets = [1, 0, 0], sizes = [1, 8, 8], strides = [1, 1, 1]} : vector<4x8x8xf32> to vector<1x8x8xf32>
    %160 = vector.shape_cast %159 : vector<1x8x8xf32> to vector<8x8xf32>
    %161 = vector.extract_strided_slice %156 {offsets = [2, 0, 0], sizes = [1, 8, 8], strides = [1, 1, 1]} : vector<4x8x8xf32> to vector<1x8x8xf32>
    %162 = vector.shape_cast %161 : vector<1x8x8xf32> to vector<8x8xf32>
    %163 = vector.extract_strided_slice %156 {offsets = [3, 0, 0], sizes = [1, 8, 8], strides = [1, 1, 1]} : vector<4x8x8xf32> to vector<1x8x8xf32>
    %164 = vector.shape_cast %163 : vector<1x8x8xf32> to vector<8x8xf32>
    %165 = tpu.concatenate %158, %160, %162, %164 in 1 : vector<8x8xf32>, vector<8x8xf32>, vector<8x8xf32>, vector<8x8xf32> -> vector<8x32xf32>
    %166 = tpu.concatenate %104, %165 in 0 : vector<8x32xf32>, vector<8x32xf32> -> vector<16x32xf32>
    %cst_68 = arith.constant dense<0.000000e+00> : vector<16x32xf32>
    %167 = tpu.matmul %166, %16, %cst_68 {dimension_numbers = #tpu.dot_dimension_numbers<[1], [0], [0], [1], [0, 0, 1, 1], [], []>} : vector<16x32xf32>, vector<32x32xf32>, vector<16x32xf32> -> vector<16x32xf32>
    %168 = vector.broadcast %18 : vector<1x32xf32> to vector<16x32xf32>
    %169 = arith.addf %167, %168 : vector<16x32xf32>
    %170 = arith.addf %2, %169 : vector<16x32xf32>
    %cst_69 = arith.constant dense<0.000000e+00> : vector<16xf32>
    %171 = vector.multi_reduction <add>, %170, %cst_69 [1] : vector<16x32xf32> to vector<16xf32>
    %172 = vector.shape_cast %171 : vector<16xf32> to vector<16x1xf32>
    %cst_70 = arith.constant 3.200000e+01 : f32
    %173 = vector.broadcast %cst_70 : f32 to vector<16x1xf32>
    %174 = arith.divf %172, %173 : vector<16x1xf32>
    %175 = vector.broadcast %174 : vector<16x1xf32> to vector<16x32xf32>
    %176 = arith.subf %170, %175 : vector<16x32xf32>
    %177 = arith.mulf %176, %176 : vector<16x32xf32>
    %cst_71 = arith.constant dense<0.000000e+00> : vector<16xf32>
    %178 = vector.multi_reduction <add>, %177, %cst_71 [1] : vector<16x32xf32> to vector<16xf32>
    %179 = vector.shape_cast %178 : vector<16xf32> to vector<16x1xf32>
    %cst_72 = arith.constant 3.200000e+01 : f32
    %180 = vector.broadcast %cst_72 : f32 to vector<16x1xf32>
    %181 = arith.divf %179, %180 : vector<16x1xf32>
    %182 = vector.broadcast %174 : vector<16x1xf32> to vector<16x32xf32>
    %183 = arith.subf %170, %182 : vector<16x32xf32>
    %cst_73 = arith.constant 9.99999974E-6 : f32
    %184 = vector.broadcast %cst_73 : f32 to vector<16x1xf32>
    %185 = arith.addf %181, %184 : vector<16x1xf32>
    %186 = math.rsqrt %185 : vector<16x1xf32>
    %187 = vector.broadcast %186 : vector<16x1xf32> to vector<16x32xf32>
    %188 = arith.mulf %183, %187 : vector<16x32xf32>
    %189 = vector.broadcast %28 : vector<1x32xf32> to vector<16x32xf32>
    %190 = arith.mulf %188, %189 : vector<16x32xf32>
    %191 = vector.broadcast %30 : vector<1x32xf32> to vector<16x32xf32>
    %192 = arith.addf %190, %191 : vector<16x32xf32>
    %cst_74 = arith.constant dense<0.000000e+00> : vector<16x64xf32>
    %193 = tpu.matmul %192, %20, %cst_74 {dimension_numbers = #tpu.dot_dimension_numbers<[1], [0], [0], [1], [0, 0, 1, 1], [], []>} : vector<16x32xf32>, vector<32x64xf32>, vector<16x64xf32> -> vector<16x64xf32>
    %194 = vector.broadcast %22 : vector<1x64xf32> to vector<16x64xf32>
    %195 = arith.addf %193, %194 : vector<16x64xf32>
    %cst_75 = arith.constant 0.000000e+00 : f32
    %196 = vector.broadcast %cst_75 : f32 to vector<16x64xf32>
    %197 = arith.maximumf %195, %196 : vector<16x64xf32>
    %cst_76 = arith.constant dense<0.000000e+00> : vector<16x32xf32>
    %198 = tpu.matmul %197, %24, %cst_76 {dimension_numbers = #tpu.dot_dimension_numbers<[1], [0], [0], [1], [0, 0, 1, 1], [], []>} : vector<16x64xf32>, vector<64x32xf32>, vector<16x32xf32> -> vector<16x32xf32>
    %199 = vector.broadcast %26 : vector<1x32xf32> to vector<16x32xf32>
    %200 = arith.addf %198, %199 : vector<16x32xf32>
    %201 = arith.addf %192, %200 : vector<16x32xf32>
    %cst_77 = arith.constant dense<0.000000e+00> : vector<16xf32>
    %202 = vector.multi_reduction <add>, %201, %cst_77 [1] : vector<16x32xf32> to vector<16xf32>
    %203 = vector.shape_cast %202 : vector<16xf32> to vector<16x1xf32>
    %cst_78 = arith.constant 3.200000e+01 : f32
    %204 = vector.broadcast %cst_78 : f32 to vector<16x1xf32>
    %205 = arith.divf %203, %204 : vector<16x1xf32>
    %206 = vector.broadcast %205 : vector<16x1xf32> to vector<16x32xf32>
    %207 = arith.subf %201, %206 : vector<16x32xf32>
    %208 = arith.mulf %207, %207 : vector<16x32xf32>
    %cst_79 = arith.constant dense<0.000000e+00> : vector<16xf32>
    %209 = vector.multi_reduction <add>, %208, %cst_79 [1] : vector<16x32xf32> to vector<16xf32>
    %210 = vector.shape_cast %209 : vector<16xf32> to vector<16x1xf32>
    %cst_80 = arith.constant 3.200000e+01 : f32
    %211 = vector.broadcast %cst_80 : f32 to vector<16x1xf32>
    %212 = arith.divf %210, %211 : vector<16x1xf32>
    %213 = vector.broadcast %205 : vector<16x1xf32> to vector<16x32xf32>
    %214 = arith.subf %201, %213 : vector<16x32xf32>
    %cst_81 = arith.constant 9.99999974E-6 : f32
    %215 = vector.broadcast %cst_81 : f32 to vector<16x1xf32>
    %216 = arith.addf %212, %215 : vector<16x1xf32>
    %217 = math.rsqrt %216 : vector<16x1xf32>
    %218 = vector.broadcast %217 : vector<16x1xf32> to vector<16x32xf32>
    %219 = arith.mulf %214, %218 : vector<16x32xf32>
    %220 = vector.broadcast %32 : vector<1x32xf32> to vector<16x32xf32>
    %221 = arith.mulf %219, %220 : vector<16x32xf32>
    %222 = vector.broadcast %34 : vector<1x32xf32> to vector<16x32xf32>
    %223 = arith.addf %221, %222 : vector<16x32xf32>
    %c1 = arith.constant 1 : index
    %c0_82 = arith.constant 0 : index
    %c0_83 = arith.constant 0 : index
    %224 = vector.load %arg2[%c1, %c0_82, %c0_83] : memref<2x32x32xf32, #tpu.memory_space<vmem>>, vector<1x32x32xf32>
    %225 = vector.shape_cast %224 : vector<1x32x32xf32> to vector<32x32xf32>
    %c1_84 = arith.constant 1 : index
    %c0_85 = arith.constant 0 : index
    %c0_86 = arith.constant 0 : index
    %226 = vector.load %arg3[%c1_84, %c0_85, %c0_86] : memref<2x1x32xf32, #tpu.memory_space<vmem>>, vector<1x1x32xf32>
    %227 = vector.shape_cast %226 : vector<1x1x32xf32> to vector<1x32xf32>
    %c1_87 = arith.constant 1 : index
    %c0_88 = arith.constant 0 : index
    %c0_89 = arith.constant 0 : index
    %228 = vector.load %arg4[%c1_87, %c0_88, %c0_89] : memref<2x32x32xf32, #tpu.memory_space<vmem>>, vector<1x32x32xf32>
    %229 = vector.shape_cast %228 : vector<1x32x32xf32> to vector<32x32xf32>
    %c1_90 = arith.constant 1 : index
    %c0_91 = arith.constant 0 : index
    %c0_92 = arith.constant 0 : index
    %230 = vector.load %arg5[%c1_90, %c0_91, %c0_92] : memref<2x1x32xf32, #tpu.memory_space<vmem>>, vector<1x1x32xf32>
    %231 = vector.shape_cast %230 : vector<1x1x32xf32> to vector<1x32xf32>
    %c1_93 = arith.constant 1 : index
    %c0_94 = arith.constant 0 : index
    %c0_95 = arith.constant 0 : index
    %232 = vector.load %arg6[%c1_93, %c0_94, %c0_95] : memref<2x32x32xf32, #tpu.memory_space<vmem>>, vector<1x32x32xf32>
    %233 = vector.shape_cast %232 : vector<1x32x32xf32> to vector<32x32xf32>
    %c1_96 = arith.constant 1 : index
    %c0_97 = arith.constant 0 : index
    %c0_98 = arith.constant 0 : index
    %234 = vector.load %arg7[%c1_96, %c0_97, %c0_98] : memref<2x1x32xf32, #tpu.memory_space<vmem>>, vector<1x1x32xf32>
    %235 = vector.shape_cast %234 : vector<1x1x32xf32> to vector<1x32xf32>
    %c1_99 = arith.constant 1 : index
    %c0_100 = arith.constant 0 : index
    %c0_101 = arith.constant 0 : index
    %236 = vector.load %arg8[%c1_99, %c0_100, %c0_101] : memref<2x32x32xf32, #tpu.memory_space<vmem>>, vector<1x32x32xf32>
    %237 = vector.shape_cast %236 : vector<1x32x32xf32> to vector<32x32xf32>
    %c1_102 = arith.constant 1 : index
    %c0_103 = arith.constant 0 : index
    %c0_104 = arith.constant 0 : index
    %238 = vector.load %arg9[%c1_102, %c0_103, %c0_104] : memref<2x1x32xf32, #tpu.memory_space<vmem>>, vector<1x1x32xf32>
    %239 = vector.shape_cast %238 : vector<1x1x32xf32> to vector<1x32xf32>
    %c1_105 = arith.constant 1 : index
    %c0_106 = arith.constant 0 : index
    %c0_107 = arith.constant 0 : index
    %240 = vector.load %arg10[%c1_105, %c0_106, %c0_107] : memref<2x32x64xf32, #tpu.memory_space<vmem>>, vector<1x32x64xf32>
    %241 = vector.shape_cast %240 : vector<1x32x64xf32> to vector<32x64xf32>
    %c1_108 = arith.constant 1 : index
    %c0_109 = arith.constant 0 : index
    %c0_110 = arith.constant 0 : index
    %242 = vector.load %arg11[%c1_108, %c0_109, %c0_110] : memref<2x1x64xf32, #tpu.memory_space<vmem>>, vector<1x1x64xf32>
    %243 = vector.shape_cast %242 : vector<1x1x64xf32> to vector<1x64xf32>
    %c1_111 = arith.constant 1 : index
    %c0_112 = arith.constant 0 : index
    %c0_113 = arith.constant 0 : index
    %244 = vector.load %arg12[%c1_111, %c0_112, %c0_113] : memref<2x64x32xf32, #tpu.memory_space<vmem>>, vector<1x64x32xf32>
    %245 = vector.shape_cast %244 : vector<1x64x32xf32> to vector<64x32xf32>
    %c1_114 = arith.constant 1 : index
    %c0_115 = arith.constant 0 : index
    %c0_116 = arith.constant 0 : index
    %246 = vector.load %arg13[%c1_114, %c0_115, %c0_116] : memref<2x1x32xf32, #tpu.memory_space<vmem>>, vector<1x1x32xf32>
    %247 = vector.shape_cast %246 : vector<1x1x32xf32> to vector<1x32xf32>
    %c1_117 = arith.constant 1 : index
    %c0_118 = arith.constant 0 : index
    %c0_119 = arith.constant 0 : index
    %248 = vector.load %arg14[%c1_117, %c0_118, %c0_119] : memref<2x1x32xf32, #tpu.memory_space<vmem>>, vector<1x1x32xf32>
    %249 = vector.shape_cast %248 : vector<1x1x32xf32> to vector<1x32xf32>
    %c1_120 = arith.constant 1 : index
    %c0_121 = arith.constant 0 : index
    %c0_122 = arith.constant 0 : index
    %250 = vector.load %arg15[%c1_120, %c0_121, %c0_122] : memref<2x1x32xf32, #tpu.memory_space<vmem>>, vector<1x1x32xf32>
    %251 = vector.shape_cast %250 : vector<1x1x32xf32> to vector<1x32xf32>
    %c1_123 = arith.constant 1 : index
    %c0_124 = arith.constant 0 : index
    %c0_125 = arith.constant 0 : index
    %252 = vector.load %arg16[%c1_123, %c0_124, %c0_125] : memref<2x1x32xf32, #tpu.memory_space<vmem>>, vector<1x1x32xf32>
    %253 = vector.shape_cast %252 : vector<1x1x32xf32> to vector<1x32xf32>
    %c1_126 = arith.constant 1 : index
    %c0_127 = arith.constant 0 : index
    %c0_128 = arith.constant 0 : index
    %254 = vector.load %arg17[%c1_126, %c0_127, %c0_128] : memref<2x1x32xf32, #tpu.memory_space<vmem>>, vector<1x1x32xf32>
    %255 = vector.shape_cast %254 : vector<1x1x32xf32> to vector<1x32xf32>
    %cst_129 = arith.constant dense<0.000000e+00> : vector<16x32xf32>
    %256 = tpu.matmul %223, %225, %cst_129 {dimension_numbers = #tpu.dot_dimension_numbers<[1], [0], [0], [1], [0, 0, 1, 1], [], []>} : vector<16x32xf32>, vector<32x32xf32>, vector<16x32xf32> -> vector<16x32xf32>
    %257 = vector.broadcast %227 : vector<1x32xf32> to vector<16x32xf32>
    %258 = arith.addf %256, %257 : vector<16x32xf32>
    %cst_130 = arith.constant dense<0.000000e+00> : vector<16x32xf32>
    %259 = tpu.matmul %223, %229, %cst_130 {dimension_numbers = #tpu.dot_dimension_numbers<[1], [0], [0], [1], [0, 0, 1, 1], [], []>} : vector<16x32xf32>, vector<32x32xf32>, vector<16x32xf32> -> vector<16x32xf32>
    %260 = vector.broadcast %231 : vector<1x32xf32> to vector<16x32xf32>
    %261 = arith.addf %259, %260 : vector<16x32xf32>
    %cst_131 = arith.constant dense<0.000000e+00> : vector<16x32xf32>
    %262 = tpu.matmul %223, %233, %cst_131 {dimension_numbers = #tpu.dot_dimension_numbers<[1], [0], [0], [1], [0, 0, 1, 1], [], []>} : vector<16x32xf32>, vector<32x32xf32>, vector<16x32xf32> -> vector<16x32xf32>
    %263 = vector.broadcast %235 : vector<1x32xf32> to vector<16x32xf32>
    %264 = arith.addf %262, %263 : vector<16x32xf32>
    %265 = vector.extract_strided_slice %258 {offsets = [0, 0], sizes = [8, 32], strides = [1, 1]} : vector<16x32xf32> to vector<8x32xf32>
    %266 = vector.extract_strided_slice %261 {offsets = [0, 0], sizes = [8, 32], strides = [1, 1]} : vector<16x32xf32> to vector<8x32xf32>
    %267 = vector.extract_strided_slice %264 {offsets = [0, 0], sizes = [8, 32], strides = [1, 1]} : vector<16x32xf32> to vector<8x32xf32>
    %268 = vector.extract_strided_slice %265 {offsets = [0, 0], sizes = [8, 8], strides = [1, 1]} : vector<8x32xf32> to vector<8x8xf32>
    %269 = vector.extract_strided_slice %265 {offsets = [0, 8], sizes = [8, 8], strides = [1, 1]} : vector<8x32xf32> to vector<8x8xf32>
    %270 = vector.extract_strided_slice %265 {offsets = [0, 16], sizes = [8, 8], strides = [1, 1]} : vector<8x32xf32> to vector<8x8xf32>
    %271 = vector.extract_strided_slice %265 {offsets = [0, 24], sizes = [8, 8], strides = [1, 1]} : vector<8x32xf32> to vector<8x8xf32>
    %272 = vector.shape_cast %268 : vector<8x8xf32> to vector<1x8x8xf32>
    %273 = vector.shape_cast %269 : vector<8x8xf32> to vector<1x8x8xf32>
    %274 = vector.shape_cast %270 : vector<8x8xf32> to vector<1x8x8xf32>
    %275 = vector.shape_cast %271 : vector<8x8xf32> to vector<1x8x8xf32>
    %276 = tpu.concatenate %272, %273, %274, %275 in 0 : vector<1x8x8xf32>, vector<1x8x8xf32>, vector<1x8x8xf32>, vector<1x8x8xf32> -> vector<4x8x8xf32>
    %277 = vector.extract_strided_slice %266 {offsets = [0, 0], sizes = [8, 8], strides = [1, 1]} : vector<8x32xf32> to vector<8x8xf32>
    %278 = vector.extract_strided_slice %266 {offsets = [0, 8], sizes = [8, 8], strides = [1, 1]} : vector<8x32xf32> to vector<8x8xf32>
    %279 = vector.extract_strided_slice %266 {offsets = [0, 16], sizes = [8, 8], strides = [1, 1]} : vector<8x32xf32> to vector<8x8xf32>
    %280 = vector.extract_strided_slice %266 {offsets = [0, 24], sizes = [8, 8], strides = [1, 1]} : vector<8x32xf32> to vector<8x8xf32>
    %281 = vector.shape_cast %277 : vector<8x8xf32> to vector<1x8x8xf32>
    %282 = vector.shape_cast %278 : vector<8x8xf32> to vector<1x8x8xf32>
    %283 = vector.shape_cast %279 : vector<8x8xf32> to vector<1x8x8xf32>
    %284 = vector.shape_cast %280 : vector<8x8xf32> to vector<1x8x8xf32>
    %285 = tpu.concatenate %281, %282, %283, %284 in 0 : vector<1x8x8xf32>, vector<1x8x8xf32>, vector<1x8x8xf32>, vector<1x8x8xf32> -> vector<4x8x8xf32>
    %286 = vector.extract_strided_slice %267 {offsets = [0, 0], sizes = [8, 8], strides = [1, 1]} : vector<8x32xf32> to vector<8x8xf32>
    %287 = vector.extract_strided_slice %267 {offsets = [0, 8], sizes = [8, 8], strides = [1, 1]} : vector<8x32xf32> to vector<8x8xf32>
    %288 = vector.extract_strided_slice %267 {offsets = [0, 16], sizes = [8, 8], strides = [1, 1]} : vector<8x32xf32> to vector<8x8xf32>
    %289 = vector.extract_strided_slice %267 {offsets = [0, 24], sizes = [8, 8], strides = [1, 1]} : vector<8x32xf32> to vector<8x8xf32>
    %290 = vector.shape_cast %286 : vector<8x8xf32> to vector<1x8x8xf32>
    %291 = vector.shape_cast %287 : vector<8x8xf32> to vector<1x8x8xf32>
    %292 = vector.shape_cast %288 : vector<8x8xf32> to vector<1x8x8xf32>
    %293 = vector.shape_cast %289 : vector<8x8xf32> to vector<1x8x8xf32>
    %294 = tpu.concatenate %290, %291, %292, %293 in 0 : vector<1x8x8xf32>, vector<1x8x8xf32>, vector<1x8x8xf32>, vector<1x8x8xf32> -> vector<4x8x8xf32>
    "tpu.trace_start"() <{level = 10 : i32, message = "hqd,hkd->hqk"}> : () -> ()
    %cst_132 = arith.constant dense<0.000000e+00> : vector<4x8x8xf32>
    %295 = tpu.matmul %276, %285, %cst_132 {dimension_numbers = #tpu.dot_dimension_numbers<[2], [2], [1], [1], [0, 0, 0, 1, 1, 1], [0], [0]>} : vector<4x8x8xf32>, vector<4x8x8xf32>, vector<4x8x8xf32> -> vector<4x8x8xf32>
    "tpu.trace_stop"() : () -> ()
    %cst_133 = arith.constant 0.353553385 : f32
    %296 = vector.broadcast %cst_133 : f32 to vector<4x8x8xf32>
    %297 = arith.mulf %295, %296 : vector<4x8x8xf32>
    %298 = vector.extract_strided_slice %1 {offsets = [0, 0], sizes = [1, 8], strides = [1, 1]} : vector<2x8xf32> to vector<1x8xf32>
    %299 = vector.shape_cast %298 : vector<1x8xf32> to vector<1x1x8xf32>
    %cst_134 = arith.constant 5.000000e-01 : f32
    %300 = vector.broadcast %cst_134 : f32 to vector<1x1x8xf32>
    %301 = arith.cmpf ogt, %299, %300 : vector<1x1x8xf32>
    %cst_135 = arith.constant -1.000000e+09 : f32
    %302 = vector.shape_cast %301 : vector<1x1x8xi1> to vector<1x1x8xi1>
    %303 = vector.broadcast %302 : vector<1x1x8xi1> to vector<4x8x8xi1>
    %304 = vector.broadcast %cst_135 : f32 to vector<4x8x8xf32>
    %305 = arith.select %303, %297, %304 : vector<4x8x8xi1>, vector<4x8x8xf32>
    %cst_136 = arith.constant dense<0xFF800000> : vector<4x8xf32>
    %306 = vector.multi_reduction <maximumf>, %305, %cst_136 [2] : vector<4x8x8xf32> to vector<4x8xf32>
    %307 = vector.shape_cast %306 : vector<4x8xf32> to vector<4x8x1xf32>
    %308 = vector.broadcast %307 : vector<4x8x1xf32> to vector<4x8x8xf32>
    %309 = arith.subf %305, %308 : vector<4x8x8xf32>
    %310 = math.exp %309 : vector<4x8x8xf32>
    %cst_137 = arith.constant dense<0.000000e+00> : vector<4x8xf32>
    %311 = vector.multi_reduction <add>, %310, %cst_137 [2] : vector<4x8x8xf32> to vector<4x8xf32>
    %312 = vector.shape_cast %311 : vector<4x8xf32> to vector<4x8x1xf32>
    %313 = tpu.reciprocal %312 {approx = true} : vector<4x8x1xf32> -> vector<4x8x1xf32>
    %314 = vector.broadcast %313 : vector<4x8x1xf32> to vector<4x8x8xf32>
    %315 = arith.mulf %310, %314 : vector<4x8x8xf32>
    "tpu.trace_start"() <{level = 10 : i32, message = "hqk,hkd->hqd"}> : () -> ()
    %cst_138 = arith.constant dense<0.000000e+00> : vector<4x8x8xf32>
    %316 = tpu.matmul %315, %294, %cst_138 {dimension_numbers = #tpu.dot_dimension_numbers<[2], [1], [1], [2], [0, 0, 0, 1, 1, 2], [0], [0]>} : vector<4x8x8xf32>, vector<4x8x8xf32>, vector<4x8x8xf32> -> vector<4x8x8xf32>
    "tpu.trace_stop"() : () -> ()
    %317 = vector.extract_strided_slice %316 {offsets = [0, 0, 0], sizes = [1, 8, 8], strides = [1, 1, 1]} : vector<4x8x8xf32> to vector<1x8x8xf32>
    %318 = vector.shape_cast %317 : vector<1x8x8xf32> to vector<8x8xf32>
    %319 = vector.extract_strided_slice %316 {offsets = [1, 0, 0], sizes = [1, 8, 8], strides = [1, 1, 1]} : vector<4x8x8xf32> to vector<1x8x8xf32>
    %320 = vector.shape_cast %319 : vector<1x8x8xf32> to vector<8x8xf32>
    %321 = vector.extract_strided_slice %316 {offsets = [2, 0, 0], sizes = [1, 8, 8], strides = [1, 1, 1]} : vector<4x8x8xf32> to vector<1x8x8xf32>
    %322 = vector.shape_cast %321 : vector<1x8x8xf32> to vector<8x8xf32>
    %323 = vector.extract_strided_slice %316 {offsets = [3, 0, 0], sizes = [1, 8, 8], strides = [1, 1, 1]} : vector<4x8x8xf32> to vector<1x8x8xf32>
    %324 = vector.shape_cast %323 : vector<1x8x8xf32> to vector<8x8xf32>
    %325 = tpu.concatenate %318, %320, %322, %324 in 1 : vector<8x8xf32>, vector<8x8xf32>, vector<8x8xf32>, vector<8x8xf32> -> vector<8x32xf32>
    %326 = vector.extract_strided_slice %258 {offsets = [8, 0], sizes = [8, 32], strides = [1, 1]} : vector<16x32xf32> to vector<8x32xf32>
    %327 = vector.extract_strided_slice %261 {offsets = [8, 0], sizes = [8, 32], strides = [1, 1]} : vector<16x32xf32> to vector<8x32xf32>
    %328 = vector.extract_strided_slice %264 {offsets = [8, 0], sizes = [8, 32], strides = [1, 1]} : vector<16x32xf32> to vector<8x32xf32>
    %329 = vector.extract_strided_slice %326 {offsets = [0, 0], sizes = [8, 8], strides = [1, 1]} : vector<8x32xf32> to vector<8x8xf32>
    %330 = vector.extract_strided_slice %326 {offsets = [0, 8], sizes = [8, 8], strides = [1, 1]} : vector<8x32xf32> to vector<8x8xf32>
    %331 = vector.extract_strided_slice %326 {offsets = [0, 16], sizes = [8, 8], strides = [1, 1]} : vector<8x32xf32> to vector<8x8xf32>
    %332 = vector.extract_strided_slice %326 {offsets = [0, 24], sizes = [8, 8], strides = [1, 1]} : vector<8x32xf32> to vector<8x8xf32>
    %333 = vector.shape_cast %329 : vector<8x8xf32> to vector<1x8x8xf32>
    %334 = vector.shape_cast %330 : vector<8x8xf32> to vector<1x8x8xf32>
    %335 = vector.shape_cast %331 : vector<8x8xf32> to vector<1x8x8xf32>
    %336 = vector.shape_cast %332 : vector<8x8xf32> to vector<1x8x8xf32>
    %337 = tpu.concatenate %333, %334, %335, %336 in 0 : vector<1x8x8xf32>, vector<1x8x8xf32>, vector<1x8x8xf32>, vector<1x8x8xf32> -> vector<4x8x8xf32>
    %338 = vector.extract_strided_slice %327 {offsets = [0, 0], sizes = [8, 8], strides = [1, 1]} : vector<8x32xf32> to vector<8x8xf32>
    %339 = vector.extract_strided_slice %327 {offsets = [0, 8], sizes = [8, 8], strides = [1, 1]} : vector<8x32xf32> to vector<8x8xf32>
    %340 = vector.extract_strided_slice %327 {offsets = [0, 16], sizes = [8, 8], strides = [1, 1]} : vector<8x32xf32> to vector<8x8xf32>
    %341 = vector.extract_strided_slice %327 {offsets = [0, 24], sizes = [8, 8], strides = [1, 1]} : vector<8x32xf32> to vector<8x8xf32>
    %342 = vector.shape_cast %338 : vector<8x8xf32> to vector<1x8x8xf32>
    %343 = vector.shape_cast %339 : vector<8x8xf32> to vector<1x8x8xf32>
    %344 = vector.shape_cast %340 : vector<8x8xf32> to vector<1x8x8xf32>
    %345 = vector.shape_cast %341 : vector<8x8xf32> to vector<1x8x8xf32>
    %346 = tpu.concatenate %342, %343, %344, %345 in 0 : vector<1x8x8xf32>, vector<1x8x8xf32>, vector<1x8x8xf32>, vector<1x8x8xf32> -> vector<4x8x8xf32>
    %347 = vector.extract_strided_slice %328 {offsets = [0, 0], sizes = [8, 8], strides = [1, 1]} : vector<8x32xf32> to vector<8x8xf32>
    %348 = vector.extract_strided_slice %328 {offsets = [0, 8], sizes = [8, 8], strides = [1, 1]} : vector<8x32xf32> to vector<8x8xf32>
    %349 = vector.extract_strided_slice %328 {offsets = [0, 16], sizes = [8, 8], strides = [1, 1]} : vector<8x32xf32> to vector<8x8xf32>
    %350 = vector.extract_strided_slice %328 {offsets = [0, 24], sizes = [8, 8], strides = [1, 1]} : vector<8x32xf32> to vector<8x8xf32>
    %351 = vector.shape_cast %347 : vector<8x8xf32> to vector<1x8x8xf32>
    %352 = vector.shape_cast %348 : vector<8x8xf32> to vector<1x8x8xf32>
    %353 = vector.shape_cast %349 : vector<8x8xf32> to vector<1x8x8xf32>
    %354 = vector.shape_cast %350 : vector<8x8xf32> to vector<1x8x8xf32>
    %355 = tpu.concatenate %351, %352, %353, %354 in 0 : vector<1x8x8xf32>, vector<1x8x8xf32>, vector<1x8x8xf32>, vector<1x8x8xf32> -> vector<4x8x8xf32>
    "tpu.trace_start"() <{level = 10 : i32, message = "hqd,hkd->hqk"}> : () -> ()
    %cst_139 = arith.constant dense<0.000000e+00> : vector<4x8x8xf32>
    %356 = tpu.matmul %337, %346, %cst_139 {dimension_numbers = #tpu.dot_dimension_numbers<[2], [2], [1], [1], [0, 0, 0, 1, 1, 1], [0], [0]>} : vector<4x8x8xf32>, vector<4x8x8xf32>, vector<4x8x8xf32> -> vector<4x8x8xf32>
    "tpu.trace_stop"() : () -> ()
    %cst_140 = arith.constant 0.353553385 : f32
    %357 = vector.broadcast %cst_140 : f32 to vector<4x8x8xf32>
    %358 = arith.mulf %356, %357 : vector<4x8x8xf32>
    %359 = vector.extract_strided_slice %1 {offsets = [1, 0], sizes = [1, 8], strides = [1, 1]} : vector<2x8xf32> to vector<1x8xf32>
    %360 = vector.shape_cast %359 : vector<1x8xf32> to vector<1x1x8xf32>
    %cst_141 = arith.constant 5.000000e-01 : f32
    %361 = vector.broadcast %cst_141 : f32 to vector<1x1x8xf32>
    %362 = arith.cmpf ogt, %360, %361 : vector<1x1x8xf32>
    %cst_142 = arith.constant -1.000000e+09 : f32
    %363 = vector.shape_cast %362 : vector<1x1x8xi1> to vector<1x1x8xi1>
    %364 = vector.broadcast %363 : vector<1x1x8xi1> to vector<4x8x8xi1>
    %365 = vector.broadcast %cst_142 : f32 to vector<4x8x8xf32>
    %366 = arith.select %364, %358, %365 : vector<4x8x8xi1>, vector<4x8x8xf32>
    %cst_143 = arith.constant dense<0xFF800000> : vector<4x8xf32>
    %367 = vector.multi_reduction <maximumf>, %366, %cst_143 [2] : vector<4x8x8xf32> to vector<4x8xf32>
    %368 = vector.shape_cast %367 : vector<4x8xf32> to vector<4x8x1xf32>
    %369 = vector.broadcast %368 : vector<4x8x1xf32> to vector<4x8x8xf32>
    %370 = arith.subf %366, %369 : vector<4x8x8xf32>
    %371 = math.exp %370 : vector<4x8x8xf32>
    %cst_144 = arith.constant dense<0.000000e+00> : vector<4x8xf32>
    %372 = vector.multi_reduction <add>, %371, %cst_144 [2] : vector<4x8x8xf32> to vector<4x8xf32>
    %373 = vector.shape_cast %372 : vector<4x8xf32> to vector<4x8x1xf32>
    %374 = tpu.reciprocal %373 {approx = true} : vector<4x8x1xf32> -> vector<4x8x1xf32>
    %375 = vector.broadcast %374 : vector<4x8x1xf32> to vector<4x8x8xf32>
    %376 = arith.mulf %371, %375 : vector<4x8x8xf32>
    "tpu.trace_start"() <{level = 10 : i32, message = "hqk,hkd->hqd"}> : () -> ()
    %cst_145 = arith.constant dense<0.000000e+00> : vector<4x8x8xf32>
    %377 = tpu.matmul %376, %355, %cst_145 {dimension_numbers = #tpu.dot_dimension_numbers<[2], [1], [1], [2], [0, 0, 0, 1, 1, 2], [0], [0]>} : vector<4x8x8xf32>, vector<4x8x8xf32>, vector<4x8x8xf32> -> vector<4x8x8xf32>
    "tpu.trace_stop"() : () -> ()
    %378 = vector.extract_strided_slice %377 {offsets = [0, 0, 0], sizes = [1, 8, 8], strides = [1, 1, 1]} : vector<4x8x8xf32> to vector<1x8x8xf32>
    %379 = vector.shape_cast %378 : vector<1x8x8xf32> to vector<8x8xf32>
    %380 = vector.extract_strided_slice %377 {offsets = [1, 0, 0], sizes = [1, 8, 8], strides = [1, 1, 1]} : vector<4x8x8xf32> to vector<1x8x8xf32>
    %381 = vector.shape_cast %380 : vector<1x8x8xf32> to vector<8x8xf32>
    %382 = vector.extract_strided_slice %377 {offsets = [2, 0, 0], sizes = [1, 8, 8], strides = [1, 1, 1]} : vector<4x8x8xf32> to vector<1x8x8xf32>
    %383 = vector.shape_cast %382 : vector<1x8x8xf32> to vector<8x8xf32>
    %384 = vector.extract_strided_slice %377 {offsets = [3, 0, 0], sizes = [1, 8, 8], strides = [1, 1, 1]} : vector<4x8x8xf32> to vector<1x8x8xf32>
    %385 = vector.shape_cast %384 : vector<1x8x8xf32> to vector<8x8xf32>
    %386 = tpu.concatenate %379, %381, %383, %385 in 1 : vector<8x8xf32>, vector<8x8xf32>, vector<8x8xf32>, vector<8x8xf32> -> vector<8x32xf32>
    %387 = tpu.concatenate %325, %386 in 0 : vector<8x32xf32>, vector<8x32xf32> -> vector<16x32xf32>
    %cst_146 = arith.constant dense<0.000000e+00> : vector<16x32xf32>
    %388 = tpu.matmul %387, %237, %cst_146 {dimension_numbers = #tpu.dot_dimension_numbers<[1], [0], [0], [1], [0, 0, 1, 1], [], []>} : vector<16x32xf32>, vector<32x32xf32>, vector<16x32xf32> -> vector<16x32xf32>
    %389 = vector.broadcast %239 : vector<1x32xf32> to vector<16x32xf32>
    %390 = arith.addf %388, %389 : vector<16x32xf32>
    %391 = arith.addf %223, %390 : vector<16x32xf32>
    %cst_147 = arith.constant dense<0.000000e+00> : vector<16xf32>
    %392 = vector.multi_reduction <add>, %391, %cst_147 [1] : vector<16x32xf32> to vector<16xf32>
    %393 = vector.shape_cast %392 : vector<16xf32> to vector<16x1xf32>
    %cst_148 = arith.constant 3.200000e+01 : f32
    %394 = vector.broadcast %cst_148 : f32 to vector<16x1xf32>
    %395 = arith.divf %393, %394 : vector<16x1xf32>
    %396 = vector.broadcast %395 : vector<16x1xf32> to vector<16x32xf32>
    %397 = arith.subf %391, %396 : vector<16x32xf32>
    %398 = arith.mulf %397, %397 : vector<16x32xf32>
    %cst_149 = arith.constant dense<0.000000e+00> : vector<16xf32>
    %399 = vector.multi_reduction <add>, %398, %cst_149 [1] : vector<16x32xf32> to vector<16xf32>
    %400 = vector.shape_cast %399 : vector<16xf32> to vector<16x1xf32>
    %cst_150 = arith.constant 3.200000e+01 : f32
    %401 = vector.broadcast %cst_150 : f32 to vector<16x1xf32>
    %402 = arith.divf %400, %401 : vector<16x1xf32>
    %403 = vector.broadcast %395 : vector<16x1xf32> to vector<16x32xf32>
    %404 = arith.subf %391, %403 : vector<16x32xf32>
    %cst_151 = arith.constant 9.99999974E-6 : f32
    %405 = vector.broadcast %cst_151 : f32 to vector<16x1xf32>
    %406 = arith.addf %402, %405 : vector<16x1xf32>
    %407 = math.rsqrt %406 : vector<16x1xf32>
    %408 = vector.broadcast %407 : vector<16x1xf32> to vector<16x32xf32>
    %409 = arith.mulf %404, %408 : vector<16x32xf32>
    %410 = vector.broadcast %249 : vector<1x32xf32> to vector<16x32xf32>
    %411 = arith.mulf %409, %410 : vector<16x32xf32>
    %412 = vector.broadcast %251 : vector<1x32xf32> to vector<16x32xf32>
    %413 = arith.addf %411, %412 : vector<16x32xf32>
    %cst_152 = arith.constant dense<0.000000e+00> : vector<16x64xf32>
    %414 = tpu.matmul %413, %241, %cst_152 {dimension_numbers = #tpu.dot_dimension_numbers<[1], [0], [0], [1], [0, 0, 1, 1], [], []>} : vector<16x32xf32>, vector<32x64xf32>, vector<16x64xf32> -> vector<16x64xf32>
    %415 = vector.broadcast %243 : vector<1x64xf32> to vector<16x64xf32>
    %416 = arith.addf %414, %415 : vector<16x64xf32>
    %cst_153 = arith.constant 0.000000e+00 : f32
    %417 = vector.broadcast %cst_153 : f32 to vector<16x64xf32>
    %418 = arith.maximumf %416, %417 : vector<16x64xf32>
    %cst_154 = arith.constant dense<0.000000e+00> : vector<16x32xf32>
    %419 = tpu.matmul %418, %245, %cst_154 {dimension_numbers = #tpu.dot_dimension_numbers<[1], [0], [0], [1], [0, 0, 1, 1], [], []>} : vector<16x64xf32>, vector<64x32xf32>, vector<16x32xf32> -> vector<16x32xf32>
    %420 = vector.broadcast %247 : vector<1x32xf32> to vector<16x32xf32>
    %421 = arith.addf %419, %420 : vector<16x32xf32>
    %422 = arith.addf %413, %421 : vector<16x32xf32>
    %cst_155 = arith.constant dense<0.000000e+00> : vector<16xf32>
    %423 = vector.multi_reduction <add>, %422, %cst_155 [1] : vector<16x32xf32> to vector<16xf32>
    %424 = vector.shape_cast %423 : vector<16xf32> to vector<16x1xf32>
    %cst_156 = arith.constant 3.200000e+01 : f32
    %425 = vector.broadcast %cst_156 : f32 to vector<16x1xf32>
    %426 = arith.divf %424, %425 : vector<16x1xf32>
    %427 = vector.broadcast %426 : vector<16x1xf32> to vector<16x32xf32>
    %428 = arith.subf %422, %427 : vector<16x32xf32>
    %429 = arith.mulf %428, %428 : vector<16x32xf32>
    %cst_157 = arith.constant dense<0.000000e+00> : vector<16xf32>
    %430 = vector.multi_reduction <add>, %429, %cst_157 [1] : vector<16x32xf32> to vector<16xf32>
    %431 = vector.shape_cast %430 : vector<16xf32> to vector<16x1xf32>
    %cst_158 = arith.constant 3.200000e+01 : f32
    %432 = vector.broadcast %cst_158 : f32 to vector<16x1xf32>
    %433 = arith.divf %431, %432 : vector<16x1xf32>
    %434 = vector.broadcast %426 : vector<16x1xf32> to vector<16x32xf32>
    %435 = arith.subf %422, %434 : vector<16x32xf32>
    %cst_159 = arith.constant 9.99999974E-6 : f32
    %436 = vector.broadcast %cst_159 : f32 to vector<16x1xf32>
    %437 = arith.addf %433, %436 : vector<16x1xf32>
    %438 = math.rsqrt %437 : vector<16x1xf32>
    %439 = vector.broadcast %438 : vector<16x1xf32> to vector<16x32xf32>
    %440 = arith.mulf %435, %439 : vector<16x32xf32>
    %441 = vector.broadcast %253 : vector<1x32xf32> to vector<16x32xf32>
    %442 = arith.mulf %440, %441 : vector<16x32xf32>
    %443 = vector.broadcast %255 : vector<1x32xf32> to vector<16x32xf32>
    %444 = arith.addf %442, %443 : vector<16x32xf32>
    %445 = vector.shape_cast %444 : vector<16x32xf32> to vector<2x8x32xf32>
    %446 = vector.extract_strided_slice %445 {offsets = [0, 0, 0], sizes = [2, 1, 32], strides = [1, 1, 1]} : vector<2x8x32xf32> to vector<2x1x32xf32>
    %447 = vector.shape_cast %446 : vector<2x1x32xf32> to vector<2x32xf32>
    %c0_160 = arith.constant 0 : index
    %c0_161 = arith.constant 0 : index
    %448 = vector.load %arg18[%c0_160, %c0_161] : memref<32x128xf32, #tpu.memory_space<vmem>>, vector<32x128xf32>
    %cst_162 = arith.constant dense<0.000000e+00> : vector<2x128xf32>
    %449 = tpu.matmul %447, %448, %cst_162 {dimension_numbers = #tpu.dot_dimension_numbers<[1], [0], [0], [1], [0, 0, 1, 1], [], []>} : vector<2x32xf32>, vector<32x128xf32>, vector<2x128xf32> -> vector<2x128xf32>
    %c0_163 = arith.constant 0 : index
    %c0_164 = arith.constant 0 : index
    %450 = vector.load %arg19[%c0_163, %c0_164] : memref<1x128xf32, #tpu.memory_space<vmem>>, vector<1x128xf32>
    %451 = vector.broadcast %450 : vector<1x128xf32> to vector<2x128xf32>
    %452 = arith.addf %449, %451 : vector<2x128xf32>
    %c0_165 = arith.constant 0 : index
    %c0_166 = arith.constant 0 : index
    %453 = vector.load %arg20[%c0_165, %c0_166] : memref<2x128xf32, #tpu.memory_space<vmem>>, vector<2x128xf32>
    tpu.vector_store %arg20[%c0_165, %c0_166], %452 {strides = array<i32>} : memref<2x128xf32, #tpu.memory_space<vmem>>, vector<2x128xf32>,
    return
  }
}

</mosaic_0001>

<llo_original>
// kernel: tpu_custom_call.1
$region0: #{tpu_custom_call.1}
  #allocation0 [shape = 'u32[]', space=smem, size = 0x4, offset = 0x4, fixed_abs, tag = 'smem constant byte address 0x4 - core index']
  #allocation1 [shape = 'u32[144,128]{1,0:T(1,128)}', space=vmem, size = 0x12000, scoped, tag = 'internal scratch']
  %s0 = inlined_call_operand.hbm [shape: f32[2,8,32], index: 0, kind: input, shape index: {}]
  %s1 = inlined_call_operand.vmem [shape: f32[2,8], index: 1, kind: input, shape index: {}]
  %s2 = inlined_call_operand.vmem [shape: f32[2,32,32], index: 2, kind: input, shape index: {}]
  %s3 = inlined_call_operand.hbm [shape: f32[2,1,32], index: 3, kind: input, shape index: {}]
  %s4 = inlined_call_operand.vmem [shape: f32[2,32,32], index: 4, kind: input, shape index: {}]
  %s5 = inlined_call_operand.hbm [shape: f32[2,1,32], index: 5, kind: input, shape index: {}]
  %s6 = inlined_call_operand.vmem [shape: f32[2,32,32], index: 6, kind: input, shape index: {}]
  %s7 = inlined_call_operand.hbm [shape: f32[2,1,32], index: 7, kind: input, shape index: {}]
  %s8 = inlined_call_operand.hbm [shape: f32[2,32,32], index: 8, kind: input, shape index: {}]
  %s9 = inlined_call_operand.hbm [shape: f32[2,1,32], index: 9, kind: input, shape index: {}]
  %s10 = inlined_call_operand.hbm [shape: f32[2,32,64], index: 10, kind: input, shape index: {}]
  %s11 = inlined_call_operand.vmem [shape: f32[2,1,64], index: 11, kind: input, shape index: {}]
  %s12 = inlined_call_operand.vmem [shape: f32[2,64,32], index: 12, kind: input, shape index: {}]
  %s13 = inlined_call_operand.vmem [shape: f32[2,1,32], index: 13, kind: input, shape index: {}]
  %s14 = inlined_call_operand.vmem [shape: f32[2,1,32], index: 14, kind: input, shape index: {}]
  %s15 = inlined_call_operand.vmem [shape: f32[2,1,32], index: 15, kind: input, shape index: {}]
  %s16 = inlined_call_operand.vmem [shape: f32[2,1,32], index: 16, kind: input, shape index: {}]
  %s17 = inlined_call_operand.vmem [shape: f32[2,1,32], index: 17, kind: input, shape index: {}]
  %s18 = inlined_call_operand.vmem [shape: f32[32,128], index: 18, kind: input, shape index: {}]
  %s19 = inlined_call_operand.vmem [shape: f32[1,128], index: 19, kind: input, shape index: {}]
  %s20 = inlined_call_operand.hbm [shape: f32[2,128], index: 20, kind: output, shape index: {}]
  %s21 = sld [smem:[#allocation0]]
  $region118: #{tpu_custom_call.1} parent=0
    _
  %s23 = ssub.s32 1, %s21
  %s24 = scalar_select 0, %s23, %s21
  $region1: #{tpu_custom_call.1} parent=0
    #allocation2 [shape = 'u8[8192]{0}', space=vmem, size = 0x2000, scoped, tag = 'input window, operand 0, single buffered']
    #allocation3 [shape = 's32[1]{0}', space=sflag, size = 0x4, scoped, tag = 'scoped memory for tpu_custom_call.1']
    #allocation4 [shape = 's32[1]{0}', space=sflag, size = 0x4, scoped, tag = 'scoped memory for tpu_custom_call.1']
    #allocation5 [shape = 'u8[1024]{0}', space=vmem, size = 0x400, scoped, tag = 'input window, operand 3, single buffered']
    #allocation6 [shape = 's32[1]{0}', space=sflag, size = 0x4, scoped, tag = 'scoped memory for tpu_custom_call.1']
    #allocation7 [shape = 'u8[1024]{0}', space=vmem, size = 0x400, scoped, tag = 'input window, operand 5, single buffered']
    #allocation8 [shape = 'u8[1024]{0}', space=vmem, size = 0x400, scoped, tag = 'input window, operand 7, single buffered']
    #allocation9 [shape = 's32[1]{0}', space=sflag, size = 0x4, scoped, tag = 'scoped memory for tpu_custom_call.1']
    #allocation10 [shape = 'u8[32768]{0}', space=vmem, size = 0x8000, scoped, tag = 'input window, operand 8, single buffered']
    #allocation11 [shape = 'u8[1024]{0}', space=vmem, size = 0x400, scoped, tag = 'input window, operand 9, single buffered']
    #allocation12 [shape = 's32[1]{0}', space=sflag, size = 0x4, scoped, tag = 'scoped memory for tpu_custom_call.1']
    #allocation13 [shape = 'u8[32768]{0}', space=vmem, size = 0x8000, scoped, tag = 'input window, operand 10, single buffered']
    #allocation14 [shape = 'u8[1024]{0}', space=vmem, size = 0x400, scoped, tag = 'output window, operand 0, single buffered']
    %25 = vsyncpa [#allocation3], 0
    %26 = vsyncpa [#allocation6], 0
    %27 = vsyncpa [#allocation9], 0
    %28 = vsyncpa [#allocation12], 0
    %29 = vsyncpa [#allocation4], 0
    // Predicated region
    $region2: #{tpu_custom_call.1} parent=1 // pred_check
      _
    $region3: #{tpu_custom_call.1} parent=1 // pred_check_branch
      %31 = sbr.rel (0) target = $region5
    $region4: #{tpu_custom_call.1} parent=1 // pred_region
      %s33 = ssub.s32 256, 256
      %34 = vsyncadd [#allocation3], %s33
      %s35 = sshll.u32 [#allocation2], 4
      %s36 = int_to_ptr.vmem [resolvable:$true] %s35
      %41 = dma.hbm_to_vmem [thread:$0]  %s0, 256, %s36, [#allocation3], 128, 128, 8
    $region5: #{tpu_custom_call.1} parent=1 // pred_fallthru
      _
    // Predicated region
    $region6: #{tpu_custom_call.1} parent=1 // pred_check
      _
    $region7: #{tpu_custom_call.1} parent=1 // pred_check_branch
      %43 = sbr.rel (0) target = $region9
    $region8: #{tpu_custom_call.1} parent=1 // pred_region
      _
    $region9: #{tpu_custom_call.1} parent=1 // pred_fallthru
      _
    // Predicated region
    $region10: #{tpu_custom_call.1} parent=1 // pred_check
      _
    $region11: #{tpu_custom_call.1} parent=1 // pred_check_branch
      %45 = sbr.rel (0) target = $region13
    $region12: #{tpu_custom_call.1} parent=1 // pred_region
      _
    $region13: #{tpu_custom_call.1} parent=1 // pred_fallthru
      _
    // Predicated region
    $region14: #{tpu_custom_call.1} parent=1 // pred_check
      _
    $region15: #{tpu_custom_call.1} parent=1 // pred_check_branch
      %47 = sbr.rel (0) target = $region17
    $region16: #{tpu_custom_call.1} parent=1 // pred_region
      %s49 = ssub.s32 32, 32
      %50 = vsyncadd [#allocation6], %s49
      %s51 = sshll.u32 [#allocation5], 4
      %s52 = int_to_ptr.vmem [resolvable:$true] %s51
      %57 = dma.hbm_to_vmem [thread:$0]  %s3, 32, %s52, [#allocation6], 16, 16, 1
    $region17: #{tpu_custom_call.1} parent=1 // pred_fallthru
      _
    // Predicated region
    $region18: #{tpu_custom_call.1} parent=1 // pred_check
      _
    $region19: #{tpu_custom_call.1} parent=1 // pred_check_branch
      %59 = sbr.rel (0) target = $region21
    $region20: #{tpu_custom_call.1} parent=1 // pred_region
      _
    $region21: #{tpu_custom_call.1} parent=1 // pred_fallthru
      _
    // Predicated region
    $region22: #{tpu_custom_call.1} parent=1 // pred_check
      _
    $region23: #{tpu_custom_call.1} parent=1 // pred_check_branch
      %61 = sbr.rel (0) target = $region25
    $region24: #{tpu_custom_call.1} parent=1 // pred_region
      %s63 = ssub.s32 32, 32
      %64 = vsyncadd [#allocation6], %s63
      %s65 = sshll.u32 [#allocation7], 4
      %s66 = int_to_ptr.vmem [resolvable:$true] %s65
      %71 = dma.hbm_to_vmem [thread:$0]  %s5, 32, %s66, [#allocation6], 16, 16, 1
    $region25: #{tpu_custom_call.1} parent=1 // pred_fallthru
      _
    // Predicated region
    $region26: #{tpu_custom_call.1} parent=1 // pred_check
      _
    $region27: #{tpu_custom_call.1} parent=1 // pred_check_branch
      %73 = sbr.rel (0) target = $region29
    $region28: #{tpu_custom_call.1} parent=1 // pred_region
      _
    $region29: #{tpu_custom_call.1} parent=1 // pred_fallthru
      _
    // Predicated region
    $region30: #{tpu_custom_call.1} parent=1 // pred_check
      _
    $region31: #{tpu_custom_call.1} parent=1 // pred_check_branch
      %75 = sbr.rel (0) target = $region33
    $region32: #{tpu_custom_call.1} parent=1 // pred_region
      %s77 = ssub.s32 32, 32
      %78 = vsyncadd [#allocation9], %s77
      %s79 = sshll.u32 [#allocation8], 4
      %s80 = int_to_ptr.vmem [resolvable:$true] %s79
      %85 = dma.hbm_to_vmem [thread:$0]  %s7, 32, %s80, [#allocation9], 16, 16, 1
    $region33: #{tpu_custom_call.1} parent=1 // pred_fallthru
      _
    // Predicated region
    $region34: #{tpu_custom_call.1} parent=1 // pred_check
      _
    $region35: #{tpu_custom_call.1} parent=1 // pred_check_branch
      %87 = sbr.rel (0) target = $region37
    $region36: #{tpu_custom_call.1} parent=1 // pred_region
      %s89 = ssub.s32 1024, 1024
      %90 = vsyncadd [#allocation9], %s89
      %s91 = sshll.u32 [#allocation10], 4
      %s92 = int_to_ptr.vmem [resolvable:$true] %s91
      %97 = dma.hbm_to_vmem [thread:$0]  %s8, 1024, %s92, [#allocation9], 128, 128, 8
    $region37: #{tpu_custom_call.1} parent=1 // pred_fallthru
      _
    // Predicated region
    $region38: #{tpu_custom_call.1} parent=1 // pred_check
      _
    $region39: #{tpu_custom_call.1} parent=1 // pred_check_branch
      %99 = sbr.rel (0) target = $region41
    $region40: #{tpu_custom_call.1} parent=1 // pred_region
      %s101 = ssub.s32 32, 32
      %102 = vsyncadd [#allocation12], %s101
      %s103 = sshll.u32 [#allocation11], 4
      %s104 = int_to_ptr.vmem [resolvable:$true] %s103
      %109 = dma.hbm_to_vmem [thread:$0]  %s9, 32, %s104, [#allocation12], 16, 16, 1
    $region41: #{tpu_custom_call.1} parent=1 // pred_fallthru
      _
    // Predicated region
    $region42: #{tpu_custom_call.1} parent=1 // pred_check
      _
    $region43: #{tpu_custom_call.1} parent=1 // pred_check_branch
      %111 = sbr.rel (0) target = $region45
    $region44: #{tpu_custom_call.1} parent=1 // pred_region
      %s113 = ssub.s32 1024, 1024
      %114 = vsyncadd [#allocation12], %s113
      %s115 = sshll.u32 [#allocation13], 4
      %s116 = int_to_ptr.vmem [resolvable:$true] %s115
      %121 = dma.hbm_to_vmem [thread:$0]  %s10, 1024, %s116, [#allocation12], 128, 128, 8
    $region45: #{tpu_custom_call.1} parent=1 // pred_fallthru
      _
    // Predicated region
    $region46: #{tpu_custom_call.1} parent=1 // pred_check
      _
    $region47: #{tpu_custom_call.1} parent=1 // pred_check_branch
      %123 = sbr.rel (0) target = $region49
    $region48: #{tpu_custom_call.1} parent=1 // pred_region
      _
    $region49: #{tpu_custom_call.1} parent=1 // pred_fallthru
      _
    // Predicated region
    $region50: #{tpu_custom_call.1} parent=1 // pred_check
      _
    $region51: #{tpu_custom_call.1} parent=1 // pred_check_branch
      %125 = sbr.rel (0) target = $region53
    $region52: #{tpu_custom_call.1} parent=1 // pred_region
      _
    $region53: #{tpu_custom_call.1} parent=1 // pred_fallthru
      _
    // Predicated region
    $region54: #{tpu_custom_call.1} parent=1 // pred_check
      _
    $region55: #{tpu_custom_call.1} parent=1 // pred_check_branch
      %127 = sbr.rel (0) target = $region57
    $region56: #{tpu_custom_call.1} parent=1 // pred_region
      _
    $region57: #{tpu_custom_call.1} parent=1 // pred_fallthru
      _
    // Predicated region
    $region58: #{tpu_custom_call.1} parent=1 // pred_check
      _
    $region59: #{tpu_custom_call.1} parent=1 // pred_check_branch
      %129 = sbr.rel (0) target = $region61
    $region60: #{tpu_custom_call.1} parent=1 // pred_region
      _
    $region61: #{tpu_custom_call.1} parent=1 // pred_fallthru
      _
    // Predicated region
    $region62: #{tpu_custom_call.1} parent=1 // pred_check
      _
    $region63: #{tpu_custom_call.1} parent=1 // pred_check_branch
      %131 = sbr.rel (0) target = $region65
    $region64: #{tpu_custom_call.1} parent=1 // pred_region
      _
    $region65: #{tpu_custom_call.1} parent=1 // pred_fallthru
      _
    // Predicated region
    $region66: #{tpu_custom_call.1} parent=1 // pred_check
      _
    $region67: #{tpu_custom_call.1} parent=1 // pred_check_branch
      %133 = sbr.rel (0) target = $region69
    $region68: #{tpu_custom_call.1} parent=1 // pred_region
      _
    $region69: #{tpu_custom_call.1} parent=1 // pred_fallthru
      _
    // Predicated region
    $region70: #{tpu_custom_call.1} parent=1 // pred_check
      _
    $region71: #{tpu_custom_call.1} parent=1 // pred_check_branch
      %135 = sbr.rel (0) target = $region73
    $region72: #{tpu_custom_call.1} parent=1 // pred_region
      _
    $region73: #{tpu_custom_call.1} parent=1 // pred_fallthru
      _
    // Predicated region
    $region74: #{tpu_custom_call.1} parent=1 // pred_check
      _
    $region75: #{tpu_custom_call.1} parent=1 // pred_check_branch
      %137 = sbr.rel (0) target = $region77
    $region76: #{tpu_custom_call.1} parent=1 // pred_region
      _
    $region77: #{tpu_custom_call.1} parent=1 // pred_fallthru
      _
    // Predicated region
    $region78: #{tpu_custom_call.1} parent=1 // pred_check
      _
    $region79: #{tpu_custom_call.1} parent=1 // pred_check_branch
      %139 = sbr.rel (0) target = $region81
    $region80: #{tpu_custom_call.1} parent=1 // pred_region
      _
    $region81: #{tpu_custom_call.1} parent=1 // pred_fallthru
      _
    // Predicated region
    $region82: #{tpu_custom_call.1} parent=1 // pred_check
      _
    $region83: #{tpu_custom_call.1} parent=1 // pred_check_branch
      %141 = sbr.rel (0) target = $region85
    $region84: #{tpu_custom_call.1} parent=1 // pred_region
      %142 = dma.done [#allocation3], 256
    $region85: #{tpu_custom_call.1} parent=1 // pred_fallthru
      _
    // Predicated region
    $region86: #{tpu_custom_call.1} parent=1 // pred_check
      _
    $region87: #{tpu_custom_call.1} parent=1 // pred_check_branch
      %144 = sbr.rel (0) target = $region89
    $region88: #{tpu_custom_call.1} parent=1 // pred_region
      %145 = dma.done [#allocation6], 32
    $region89: #{tpu_custom_call.1} parent=1 // pred_fallthru
      _
    // Predicated region
    $region90: #{tpu_custom_call.1} parent=1 // pred_check
      _
    $region91: #{tpu_custom_call.1} parent=1 // pred_check_branch
      %147 = sbr.rel (0) target = $region93
    $region92: #{tpu_custom_call.1} parent=1 // pred_region
      %148 = dma.done [#allocation6], 32
    $region93: #{tpu_custom_call.1} parent=1 // pred_fallthru
      _
    // Predicated region
    $region94: #{tpu_custom_call.1} parent=1 // pred_check
      _
    $region95: #{tpu_custom_call.1} parent=1 // pred_check_branch
      %150 = sbr.rel (0) target = $region97
    $region96: #{tpu_custom_call.1} parent=1 // pred_region
      %151 = dma.done [#allocation9], 32
    $region97: #{tpu_custom_call.1} parent=1 // pred_fallthru
      _
    // Predicated region
    $region98: #{tpu_custom_call.1} parent=1 // pred_check
      _
    $region99: #{tpu_custom_call.1} parent=1 // pred_check_branch
      %153 = sbr.rel (0) target = $region101
    $region100: #{tpu_custom_call.1} parent=1 // pred_region
      %154 = dma.done [#allocation9], 1024
    $region101: #{tpu_custom_call.1} parent=1 // pred_fallthru
      _
    // Predicated region
    $region102: #{tpu_custom_call.1} parent=1 // pred_check
      _
    $region103: #{tpu_custom_call.1} parent=1 // pred_check_branch
      %156 = sbr.rel (0) target = $region105
    $region104: #{tpu_custom_call.1} parent=1 // pred_region
      %157 = dma.done [#allocation12], 32
    $region105: #{tpu_custom_call.1} parent=1 // pred_fallthru
      _
    // Predicated region
    $region106: #{tpu_custom_call.1} parent=1 // pred_check
      _
    $region107: #{tpu_custom_call.1} parent=1 // pred_check_branch
      %159 = sbr.rel (0) target = $region109
    $region108: #{tpu_custom_call.1} parent=1 // pred_region
      %160 = dma.done [#allocation12], 1024
    $region109: #{tpu_custom_call.1} parent=1 // pred_fallthru
      _
    %v161 = vld [vmem:[#allocation2] sm:$0xff]
    %v162 = vld [vmem:[#allocation2 + $0x8] sm:$0xff]
    %v163 = vld [vmem:[%s1] sm:$0x3]
    %v164 = vld [vmem:[%s2] sm:$0xff]
    %v165 = vld [vmem:[%s2 + $0x8] sm:$0xff]
    %v166 = vld [vmem:[%s2 + $0x10] sm:$0xff]
    %v167 = vld [vmem:[%s2 + $0x18] sm:$0xff]
    %v168 = vld [vmem:[#allocation5] sm:$0x1]
    %v169 = vld [vmem:[%s4] sm:$0xff]
    %v170 = vld [vmem:[%s4 + $0x8] sm:$0xff]
    %v171 = vld [vmem:[%s4 + $0x10] sm:$0xff]
    %v172 = vld [vmem:[%s4 + $0x18] sm:$0xff]
    %v173 = vld [vmem:[#allocation7] sm:$0x1]
    %v174 = vld [vmem:[%s6] sm:$0xff]
    %v175 = vld [vmem:[%s6 + $0x8] sm:$0xff]
    %v176 = vld [vmem:[%s6 + $0x10] sm:$0xff]
    %v177 = vld [vmem:[%s6 + $0x18] sm:$0xff]
    %v178 = vld [vmem:[#allocation8] sm:$0x1]
    %v179 = vld [vmem:[#allocation10] sm:$0xff]
    %v180 = vld [vmem:[#allocation10 + $0x8] sm:$0xff]
    %v181 = vld [vmem:[#allocation10 + $0x10] sm:$0xff]
    %v182 = vld [vmem:[#allocation10 + $0x18] sm:$0xff]
    %v183 = vld [vmem:[#allocation11] sm:$0x1]
    %v184 = vld [vmem:[#allocation13] sm:$0xff]
    %v185 = vld [vmem:[#allocation13 + $0x8] sm:$0xff]
    %v186 = vld [vmem:[#allocation13 + $0x10] sm:$0xff]
    %v187 = vld [vmem:[#allocation13 + $0x18] sm:$0xff]
    %v188 = vld [vmem:[%s11] sm:$0x1]
    %v189 = vld [vmem:[%s12] sm:$0xff]
    %v190 = vld [vmem:[%s12 + $0x8] sm:$0xff]
    %v191 = vld [vmem:[%s12 + $0x10] sm:$0xff]
    %v192 = vld [vmem:[%s12 + $0x18] sm:$0xff]
    %v193 = vld [vmem:[%s12 + $0x20] sm:$0xff]
    %v194 = vld [vmem:[%s12 + $0x28] sm:$0xff]
    %v195 = vld [vmem:[%s12 + $0x30] sm:$0xff]
    %v196 = vld [vmem:[%s12 + $0x38] sm:$0xff]
    %v197 = vld [vmem:[%s13] sm:$0x1]
    %v198 = vld [vmem:[%s14] sm:$0x1]
    %v199 = vld [vmem:[%s15] sm:$0x1]
    %v200 = vld [vmem:[%s16] sm:$0x1]
    %v201 = vld [vmem:[%s17] sm:$0x1]
    %v203 = vlaneseq
    %v204 = vshrl.u32 %v203, 7
    %v205 = vsub.s32 0, %v204
    %v206 = vrot.slane %v168, %v205
    %vm208 = vcmask 261120
    %v210 = vsel %vm208, %v161, 0
    %v213 = vsel %vm208, %v162, 0
    %215 = vmatprep.subr.mxu0 0.0
    %216 = vmatpush1.msra.mxu0 %v164
    %217 = vmatprep.subr.mxu0 0.0
    %218 = vmatpush1.msra.mxu0 %v165
    %219 = vmatprep.subr.mxu0 0.0
    %220 = vmatpush1.msra.mxu0 %v166
    %221 = vmatprep.subr.mxu0 0.0
    %222 = vmatpush1.msra.mxu0 %v167
    %223 = vmatprep.subr.mxu0 0.0
    %224 = vmatpush1.msra.mxu0 0.0
    %225 = vmatprep.subr.mxu0 0.0
    %226 = vmatpush1.msra.mxu0 0.0
    %227 = vmatprep.subr.mxu0 0.0
    %228 = vmatpush1.msra.mxu0 0.0
    %229 = vmatprep.subr.mxu0 0.0
    %230 = vmatpush1.msra.mxu0 0.0
    %231 = vmatprep.subr.mxu0 0.0
    %232 = vmatpush1.msra.mxu0 0.0
    %233 = vmatprep.subr.mxu0 0.0
    %234 = vmatpush1.msra.mxu0 0.0
    %235 = vmatprep.subr.mxu0 0.0
    %236 = vmatpush1.msra.mxu0 0.0
    %237 = vmatprep.subr.mxu0 0.0
    %238 = vmatpush1.msra.mxu0 0.0
    %239 = vmatprep.subr.mxu0 0.0
    %240 = vmatpush1.msra.mxu0 0.0
    %241 = vmatprep.subr.mxu0 0.0
    %242 = vmatpush1.msra.mxu0 0.0
    %243 = vmatprep.subr.mxu0 0.0
    %244 = vmatpush1.msra.mxu0 0.0
    %245 = vmatprep.subr.mxu0 0.0
    %246 = vmatpush1.msra.mxu0 0.0
    %247 = vmatprep.subr.mxu0 0.0
    %248 = vmatpush1.msra.mxu0 0.0
    %249 = vmatprep.subr.mxu0 0.0
    %250 = vmatpush1.msra.mxu0 0.0
    %251 = vmatprep.subr.mxu0 0.0
    %252 = vmatpush1.msra.mxu0 0.0
    %253 = vmatprep.subr.mxu0 0.0
    %254 = vmatpush1.msra.mxu0 0.0
    %255 = vmatprep.subr.mxu0 0.0
    %256 = vmatpush1.msra.mxu0 0.0
    %257 = vmatprep.subr.mxu0 0.0
    %258 = vmatpush1.msra.mxu0 0.0
    %259 = vmatprep.subr.mxu0 0.0
    %260 = vmatpush1.msra.mxu0 0.0
    %261 = vmatprep.subr.mxu0 0.0
    %262 = vmatpush1.msra.mxu0 0.0
    %263 = vmatprep.subr.mxu0 0.0
    %264 = vmatpush1.msra.mxu0 0.0
    %265 = vmatprep.subr.mxu0 0.0
    %266 = vmatpush1.msra.mxu0 0.0
    %267 = vmatprep.subr.mxu0 0.0
    %268 = vmatpush1.msra.mxu0 0.0
    %269 = vmatprep.subr.mxu0 0.0
    %270 = vmatpush1.msra.mxu0 0.0
    %271 = vmatprep.subr.mxu0 0.0
    %272 = vmatpush1.msra.mxu0 0.0
    %273 = vmatprep.subr.mxu0 0.0
    %274 = vmatpush1.msra.mxu0 0.0
    %275 = vmatprep.subr.mxu0 0.0
    %276 = vmatpush1.msra.mxu0 0.0
    %277 = vmatprep.subr.mxu0 0.0
    %278 = vmatpush1.msra.mxu0 0.0
    %279 = vmatprep.mubr.f32.mxu0 0.0
    %280 = vmatmul.mubr.f32.gmra.mrb[0].mxu0 %v210
    %v281 = vpop.f32.mrb[0].mxu0
    %v282 = vadd.f32 %v206, %v281
    %v283 = vpop.f32.mrb[0].mxu0
    %284 = vmatprep.mubr.f32.mxu0 0.0
    %285 = vmatmul.mubr.f32.gmra.mrb[0].mxu0 %v213
    %v286 = vpop.f32.mrb[0].mxu0
    %v287 = vadd.f32 %v206, %v286
    %v288 = vpop.f32.mrb[0].mxu0
    %289 = vdwg.mxu0
    %v291 = vlaneseq
    %v292 = vshrl.u32 %v291, 7
    %v293 = vsub.s32 0, %v292
    %v294 = vrot.slane %v173, %v293
    %296 = vmatprep.subr.mxu0 0.0
    %297 = vmatpush1.msra.mxu0 %v169
    %298 = vmatprep.subr.mxu0 0.0
    %299 = vmatpush1.msra.mxu0 %v170
    %300 = vmatprep.subr.mxu0 0.0
    %301 = vmatpush1.msra.mxu0 %v171
    %302 = vmatprep.subr.mxu0 0.0
    %303 = vmatpush1.msra.mxu0 %v172
    %304 = vmatprep.subr.mxu0 0.0
    %305 = vmatpush1.msra.mxu0 0.0
    %306 = vmatprep.subr.mxu0 0.0
    %307 = vmatpush1.msra.mxu0 0.0
    %308 = vmatprep.subr.mxu0 0.0
    %309 = vmatpush1.msra.mxu0 0.0
    %310 = vmatprep.subr.mxu0 0.0
    %311 = vmatpush1.msra.mxu0 0.0
    %312 = vmatprep.subr.mxu0 0.0
    %313 = vmatpush1.msra.mxu0 0.0
    %314 = vmatprep.subr.mxu0 0.0
    %315 = vmatpush1.msra.mxu0 0.0
    %316 = vmatprep.subr.mxu0 0.0
    %317 = vmatpush1.msra.mxu0 0.0
    %318 = vmatprep.subr.mxu0 0.0
    %319 = vmatpush1.msra.mxu0 0.0
    %320 = vmatprep.subr.mxu0 0.0
    %321 = vmatpush1.msra.mxu0 0.0
    %322 = vmatprep.subr.mxu0 0.0
    %323 = vmatpush1.msra.mxu0 0.0
    %324 = vmatprep.subr.mxu0 0.0
    %325 = vmatpush1.msra.mxu0 0.0
    %326 = vmatprep.subr.mxu0 0.0
    %327 = vmatpush1.msra.mxu0 0.0
    %328 = vmatprep.subr.mxu0 0.0
    %329 = vmatpush1.msra.mxu0 0.0
    %330 = vmatprep.subr.mxu0 0.0
    %331 = vmatpush1.msra.mxu0 0.0
    %332 = vmatprep.subr.mxu0 0.0
    %333 = vmatpush1.msra.mxu0 0.0
    %334 = vmatprep.subr.mxu0 0.0
    %335 = vmatpush1.msra.mxu0 0.0
    %336 = vmatprep.subr.mxu0 0.0
    %337 = vmatpush1.msra.mxu0 0.0
    %338 = vmatprep.subr.mxu0 0.0
    %339 = vmatpush1.msra.mxu0 0.0
    %340 = vmatprep.subr.mxu0 0.0
    %341 = vmatpush1.msra.mxu0 0.0
    %342 = vmatprep.subr.mxu0 0.0
    %343 = vmatpush1.msra.mxu0 0.0
    %344 = vmatprep.subr.mxu0 0.0
    %345 = vmatpush1.msra.mxu0 0.0
    %346 = vmatprep.subr.mxu0 0.0
    %347 = vmatpush1.msra.mxu0 0.0
    %348 = vmatprep.subr.mxu0 0.0
    %349 = vmatpush1.msra.mxu0 0.0
    %350 = vmatprep.subr.mxu0 0.0
    %351 = vmatpush1.msra.mxu0 0.0
    %352 = vmatprep.subr.mxu0 0.0
    %353 = vmatpush1.msra.mxu0 0.0
    %354 = vmatprep.subr.mxu0 0.0
    %355 = vmatpush1.msra.mxu0 0.0
    %356 = vmatprep.subr.mxu0 0.0
    %357 = vmatpush1.msra.mxu0 0.0
    %358 = vmatprep.subr.mxu0 0.0
    %359 = vmatpush1.msra.mxu0 0.0
    %360 = vmatprep.mubr.f32.mxu0 0.0
    %361 = vmatmul.mubr.f32.gmra.mrb[0].mxu0 %v210
    %v362 = vpop.f32.mrb[0].mxu0
    %v363 = vadd.f32 %v294, %v362
    %v364 = vpop.f32.mrb[0].mxu0
    %365 = vmatprep.mubr.f32.mxu0 0.0
    %366 = vmatmul.mubr.f32.gmra.mrb[0].mxu0 %v213
    %v367 = vpop.f32.mrb[0].mxu0
    %v368 = vadd.f32 %v294, %v367
    %v369 = vpop.f32.mrb[0].mxu0
    %370 = vdwg.mxu0
    %v372 = vlaneseq
    %v373 = vshrl.u32 %v372, 7
    %v374 = vsub.s32 0, %v373
    %v375 = vrot.slane %v178, %v374
    %377 = vmatprep.subr.mxu0 0.0
    %378 = vmatpush1.msra.mxu0 %v174
    %379 = vmatprep.subr.mxu0 0.0
    %380 = vmatpush1.msra.mxu0 %v175
    %381 = vmatprep.subr.mxu0 0.0
    %382 = vmatpush1.msra.mxu0 %v176
    %383 = vmatprep.subr.mxu0 0.0
    %384 = vmatpush1.msra.mxu0 %v177
    %385 = vmatprep.subr.mxu0 0.0
    %386 = vmatpush1.msra.mxu0 0.0
    %387 = vmatprep.subr.mxu0 0.0
    %388 = vmatpush1.msra.mxu0 0.0
    %389 = vmatprep.subr.mxu0 0.0
    %390 = vmatpush1.msra.mxu0 0.0
    %391 = vmatprep.subr.mxu0 0.0
    %392 = vmatpush1.msra.mxu0 0.0
    %393 = vmatprep.subr.mxu0 0.0
    %394 = vmatpush1.msra.mxu0 0.0
    %395 = vmatprep.subr.mxu0 0.0
    %396 = vmatpush1.msra.mxu0 0.0
    %397 = vmatprep.subr.mxu0 0.0
    %398 = vmatpush1.msra.mxu0 0.0
    %399 = vmatprep.subr.mxu0 0.0
    %400 = vmatpush1.msra.mxu0 0.0
    %401 = vmatprep.subr.mxu0 0.0
    %402 = vmatpush1.msra.mxu0 0.0
    %403 = vmatprep.subr.mxu0 0.0
    %404 = vmatpush1.msra.mxu0 0.0
    %405 = vmatprep.subr.mxu0 0.0
    %406 = vmatpush1.msra.mxu0 0.0
    %407 = vmatprep.subr.mxu0 0.0
    %408 = vmatpush1.msra.mxu0 0.0
    %409 = vmatprep.subr.mxu0 0.0
    %410 = vmatpush1.msra.mxu0 0.0
    %411 = vmatprep.subr.mxu0 0.0
    %412 = vmatpush1.msra.mxu0 0.0
    %413 = vmatprep.subr.mxu0 0.0
    %414 = vmatpush1.msra.mxu0 0.0
    %415 = vmatprep.subr.mxu0 0.0
    %416 = vmatpush1.msra.mxu0 0.0
    %417 = vmatprep.subr.mxu0 0.0
    %418 = vmatpush1.msra.mxu0 0.0
    %419 = vmatprep.subr.mxu0 0.0
    %420 = vmatpush1.msra.mxu0 0.0
    %421 = vmatprep.subr.mxu0 0.0
    %422 = vmatpush1.msra.mxu0 0.0
    %423 = vmatprep.subr.mxu0 0.0
    %424 = vmatpush1.msra.mxu0 0.0
    %425 = vmatprep.subr.mxu0 0.0
    %426 = vmatpush1.msra.mxu0 0.0
    %427 = vmatprep.subr.mxu0 0.0
    %428 = vmatpush1.msra.mxu0 0.0
    %429 = vmatprep.subr.mxu0 0.0
    %430 = vmatpush1.msra.mxu0 0.0
    %431 = vmatprep.subr.mxu0 0.0
    %432 = vmatpush1.msra.mxu0 0.0
    %433 = vmatprep.subr.mxu0 0.0
    %434 = vmatpush1.msra.mxu0 0.0
    %435 = vmatprep.subr.mxu0 0.0
    %436 = vmatpush1.msra.mxu0 0.0
    %437 = vmatprep.subr.mxu0 0.0
    %438 = vmatpush1.msra.mxu0 0.0
    %439 = vmatprep.subr.mxu0 0.0
    %440 = vmatpush1.msra.mxu0 0.0
    %441 = vmatprep.mubr.f32.mxu0 0.0
    %442 = vmatmul.mubr.f32.gmra.mrb[0].mxu0 %v210
    %v443 = vpop.f32.mrb[0].mxu0
    %v444 = vadd.f32 %v375, %v443
    %v445 = vpop.f32.mrb[0].mxu0
    %446 = vmatprep.mubr.f32.mxu0 0.0
    %447 = vmatmul.mubr.f32.gmra.mrb[0].mxu0 %v213
    %v448 = vpop.f32.mrb[0].mxu0
    %v449 = vadd.f32 %v375, %v448
    %v450 = vpop.f32.mrb[0].mxu0
    %451 = vdwg.mxu0
    %453 = vrot.lane.b32.xlu0 %v282, 120
    %v454 = vpop.permute.xlu0 %453
    %455 = vrot.lane.b32.xlu0 %v282, 112
    %v456 = vpop.permute.xlu0 %455
    %457 = vrot.lane.b32.xlu0 %v282, 104
    %v458 = vpop.permute.xlu0 %457
    %460 = vrot.lane.b32.xlu0 %v363, 120
    %v461 = vpop.permute.xlu0 %460
    %462 = vrot.lane.b32.xlu0 %v363, 112
    %v463 = vpop.permute.xlu0 %462
    %464 = vrot.lane.b32.xlu0 %v363, 104
    %v465 = vpop.permute.xlu0 %464
    %467 = vrot.lane.b32.xlu0 %v444, 120
    %v468 = vpop.permute.xlu0 %467
    %470 = vrot.lane.b32.xlu0 %v444, 112
    %v471 = vpop.permute.xlu0 %470
    %473 = vrot.lane.b32.xlu0 %v444, 104
    %v474 = vpop.permute.xlu0 %473
    %vm476 = vcmask 64512
    %v477 = vsel %vm476, %v282, 0
    %v479 = vsel %vm476, %v363, 0
    %481 = vmatprep.subr.mxu0 0.0
    %482 = vmatpush1.xpose.msra.mxu0 %v479
    %483 = vmatprep.subr.mxu0 0.0
    %484 = vmatpush1.xpose.msra.mxu0 0.0
    %485 = vmatprep.subr.mxu0 0.0
    %486 = vmatpush1.xpose.msra.mxu0 0.0
    %487 = vmatprep.subr.mxu0 0.0
    %488 = vmatpush1.xpose.msra.mxu0 0.0
    %489 = vmatprep.subr.mxu0 0.0
    %490 = vmatpush1.xpose.msra.mxu0 0.0
    %491 = vmatprep.subr.mxu0 0.0
    %492 = vmatpush1.xpose.msra.mxu0 0.0
    %493 = vmatprep.subr.mxu0 0.0
    %494 = vmatpush1.xpose.msra.mxu0 0.0
    %495 = vmatprep.subr.mxu0 0.0
    %496 = vmatpush1.xpose.msra.mxu0 0.0
    %497 = vmatprep.subr.mxu0 0.0
    %498 = vmatpush1.xpose.msra.mxu0 0.0
    %499 = vmatprep.subr.mxu0 0.0
    %500 = vmatpush1.xpose.msra.mxu0 0.0
    %501 = vmatprep.subr.mxu0 0.0
    %502 = vmatpush1.xpose.msra.mxu0 0.0
    %503 = vmatprep.subr.mxu0 0.0
    %504 = vmatpush1.xpose.msra.mxu0 0.0
    %505 = vmatprep.subr.mxu0 0.0
    %506 = vmatpush1.xpose.msra.mxu0 0.0
    %507 = vmatprep.subr.mxu0 0.0
    %508 = vmatpush1.xpose.msra.mxu0 0.0
    %509 = vmatprep.subr.mxu0 0.0
    %510 = vmatpush1.xpose.msra.mxu0 0.0
    %511 = vmatprep.subr.mxu0 0.0
    %512 = vmatpush1.xpose.msra.mxu0 0.0
    %513 = vmatprep.subr.mxu0 0.0
    %514 = vmatpush1.xpose.msra.mxu0 0.0
    %515 = vmatprep.subr.mxu0 0.0
    %516 = vmatpush1.xpose.msra.mxu0 0.0
    %517 = vmatprep.subr.mxu0 0.0
    %518 = vmatpush1.xpose.msra.mxu0 0.0
    %519 = vmatprep.subr.mxu0 0.0
    %520 = vmatpush1.xpose.msra.mxu0 0.0
    %521 = vmatprep.subr.mxu0 0.0
    %522 = vmatpush1.xpose.msra.mxu0 0.0
    %523 = vmatprep.subr.mxu0 0.0
    %524 = vmatpush1.xpose.msra.mxu0 0.0
    %525 = vmatprep.subr.mxu0 0.0
    %526 = vmatpush1.xpose.msra.mxu0 0.0
    %527 = vmatprep.subr.mxu0 0.0
    %528 = vmatpush1.xpose.msra.mxu0 0.0
    %529 = vmatprep.subr.mxu0 0.0
    %530 = vmatpush1.xpose.msra.mxu0 0.0
    %531 = vmatprep.subr.mxu0 0.0
    %532 = vmatpush1.xpose.msra.mxu0 0.0
    %533 = vmatprep.subr.mxu0 0.0
    %534 = vmatpush1.xpose.msra.mxu0 0.0
    %535 = vmatprep.subr.mxu0 0.0
    %536 = vmatpush1.xpose.msra.mxu0 0.0
    %537 = vmatprep.subr.mxu0 0.0
    %538 = vmatpush1.xpose.msra.mxu0 0.0
    %539 = vmatprep.subr.mxu0 0.0
    %540 = vmatpush1.xpose.msra.mxu0 0.0
    %541 = vmatprep.subr.mxu0 0.0
    %542 = vmatpush1.xpose.msra.mxu0 0.0
    %543 = vmatprep.subr.mxu0 0.0
    %544 = vmatpush1.xpose.msra.mxu0 0.0
    %545 = vmatprep.mubr.f32.mxu0 0.0
    %546 = vmatmul.mubr.f32.gmra.mrb[0].mxu0 %v477
    %v547 = vpop.f32.mrb[0].mxu0
    %v548 = vadd.f32 0.0, %v547
    %v549 = vpop.f32.mrb[0].mxu0
    %550 = vdwg.mxu0
    %v551 = vsel %vm476, %v454, 0
    %v553 = vsel %vm476, %v461, 0
    %555 = vmatprep.subr.mxu0 0.0
    %556 = vmatpush1.xpose.msra.mxu0 %v553
    %557 = vmatprep.subr.mxu0 0.0
    %558 = vmatpush1.xpose.msra.mxu0 0.0
    %559 = vmatprep.subr.mxu0 0.0
    %560 = vmatpush1.xpose.msra.mxu0 0.0
    %561 = vmatprep.subr.mxu0 0.0
    %562 = vmatpush1.xpose.msra.mxu0 0.0
    %563 = vmatprep.subr.mxu0 0.0
    %564 = vmatpush1.xpose.msra.mxu0 0.0
    %565 = vmatprep.subr.mxu0 0.0
    %566 = vmatpush1.xpose.msra.mxu0 0.0
    %567 = vmatprep.subr.mxu0 0.0
    %568 = vmatpush1.xpose.msra.mxu0 0.0
    %569 = vmatprep.subr.mxu0 0.0
    %570 = vmatpush1.xpose.msra.mxu0 0.0
    %571 = vmatprep.subr.mxu0 0.0
    %572 = vmatpush1.xpose.msra.mxu0 0.0
    %573 = vmatprep.subr.mxu0 0.0
    %574 = vmatpush1.xpose.msra.mxu0 0.0
    %575 = vmatprep.subr.mxu0 0.0
    %576 = vmatpush1.xpose.msra.mxu0 0.0
    %577 = vmatprep.subr.mxu0 0.0
    %578 = vmatpush1.xpose.msra.mxu0 0.0
    %579 = vmatprep.subr.mxu0 0.0
    %580 = vmatpush1.xpose.msra.mxu0 0.0
    %581 = vmatprep.subr.mxu0 0.0
    %582 = vmatpush1.xpose.msra.mxu0 0.0
    %583 = vmatprep.subr.mxu0 0.0
    %584 = vmatpush1.xpose.msra.mxu0 0.0
    %585 = vmatprep.subr.mxu0 0.0
    %586 = vmatpush1.xpose.msra.mxu0 0.0
    %587 = vmatprep.subr.mxu0 0.0
    %588 = vmatpush1.xpose.msra.mxu0 0.0
    %589 = vmatprep.subr.mxu0 0.0
    %590 = vmatpush1.xpose.msra.mxu0 0.0
    %591 = vmatprep.subr.mxu0 0.0
    %592 = vmatpush1.xpose.msra.mxu0 0.0
    %593 = vmatprep.subr.mxu0 0.0
    %594 = vmatpush1.xpose.msra.mxu0 0.0
    %595 = vmatprep.subr.mxu0 0.0
    %596 = vmatpush1.xpose.msra.mxu0 0.0
    %597 = vmatprep.subr.mxu0 0.0
    %598 = vmatpush1.xpose.msra.mxu0 0.0
    %599 = vmatprep.subr.mxu0 0.0
    %600 = vmatpush1.xpose.msra.mxu0 0.0
    %601 = vmatprep.subr.mxu0 0.0
    %602 = vmatpush1.xpose.msra.mxu0 0.0
    %603 = vmatprep.subr.mxu0 0.0
    %604 = vmatpush1.xpose.msra.mxu0 0.0
    %605 = vmatprep.subr.mxu0 0.0
    %606 = vmatpush1.xpose.msra.mxu0 0.0
    %607 = vmatprep.subr.mxu0 0.0
    %608 = vmatpush1.xpose.msra.mxu0 0.0
    %609 = vmatprep.subr.mxu0 0.0
    %610 = vmatpush1.xpose.msra.mxu0 0.0
    %611 = vmatprep.subr.mxu0 0.0
    %612 = vmatpush1.xpose.msra.mxu0 0.0
    %613 = vmatprep.subr.mxu0 0.0
    %614 = vmatpush1.xpose.msra.mxu0 0.0
    %615 = vmatprep.subr.mxu0 0.0
    %616 = vmatpush1.xpose.msra.mxu0 0.0
    %617 = vmatprep.subr.mxu0 0.0
    %618 = vmatpush1.xpose.msra.mxu0 0.0
    %619 = vmatprep.mubr.f32.mxu0 0.0
    %620 = vmatmul.mubr.f32.gmra.mrb[0].mxu0 %v551
    %v621 = vpop.f32.mrb[0].mxu0
    %v622 = vadd.f32 0.0, %v621
    %v623 = vpop.f32.mrb[0].mxu0
    %624 = vdwg.mxu0
    %v625 = vsel %vm476, %v456, 0
    %v627 = vsel %vm476, %v463, 0
    %629 = vmatprep.subr.mxu0 0.0
    %630 = vmatpush1.xpose.msra.mxu0 %v627
    %631 = vmatprep.subr.mxu0 0.0
    %632 = vmatpush1.xpose.msra.mxu0 0.0
    %633 = vmatprep.subr.mxu0 0.0
    %634 = vmatpush1.xpose.msra.mxu0 0.0
    %635 = vmatprep.subr.mxu0 0.0
    %636 = vmatpush1.xpose.msra.mxu0 0.0
    %637 = vmatprep.subr.mxu0 0.0
    %638 = vmatpush1.xpose.msra.mxu0 0.0
    %639 = vmatprep.subr.mxu0 0.0
    %640 = vmatpush1.xpose.msra.mxu0 0.0
    %641 = vmatprep.subr.mxu0 0.0
    %642 = vmatpush1.xpose.msra.mxu0 0.0
    %643 = vmatprep.subr.mxu0 0.0
    %644 = vmatpush1.xpose.msra.mxu0 0.0
    %645 = vmatprep.subr.mxu0 0.0
    %646 = vmatpush1.xpose.msra.mxu0 0.0
    %647 = vmatprep.subr.mxu0 0.0
    %648 = vmatpush1.xpose.msra.mxu0 0.0
    %649 = vmatprep.subr.mxu0 0.0
    %650 = vmatpush1.xpose.msra.mxu0 0.0
    %651 = vmatprep.subr.mxu0 0.0
    %652 = vmatpush1.xpose.msra.mxu0 0.0
    %653 = vmatprep.subr.mxu0 0.0
    %654 = vmatpush1.xpose.msra.mxu0 0.0
    %655 = vmatprep.subr.mxu0 0.0
    %656 = vmatpush1.xpose.msra.mxu0 0.0
    %657 = vmatprep.subr.mxu0 0.0
    %658 = vmatpush1.xpose.msra.mxu0 0.0
    %659 = vmatprep.subr.mxu0 0.0
    %660 = vmatpush1.xpose.msra.mxu0 0.0
    %661 = vmatprep.subr.mxu0 0.0
    %662 = vmatpush1.xpose.msra.mxu0 0.0
    %663 = vmatprep.subr.mxu0 0.0
    %664 = vmatpush1.xpose.msra.mxu0 0.0
    %665 = vmatprep.subr.mxu0 0.0
    %666 = vmatpush1.xpose.msra.mxu0 0.0
    %667 = vmatprep.subr.mxu0 0.0
    %668 = vmatpush1.xpose.msra.mxu0 0.0
    %669 = vmatprep.subr.mxu0 0.0
    %670 = vmatpush1.xpose.msra.mxu0 0.0
    %671 = vmatprep.subr.mxu0 0.0
    %672 = vmatpush1.xpose.msra.mxu0 0.0
    %673 = vmatprep.subr.mxu0 0.0
    %674 = vmatpush1.xpose.msra.mxu0 0.0
    %675 = vmatprep.subr.mxu0 0.0
    %676 = vmatpush1.xpose.msra.mxu0 0.0
    %677 = vmatprep.subr.mxu0 0.0
    %678 = vmatpush1.xpose.msra.mxu0 0.0
    %679 = vmatprep.subr.mxu0 0.0
    %680 = vmatpush1.xpose.msra.mxu0 0.0
    %681 = vmatprep.subr.mxu0 0.0
    %682 = vmatpush1.xpose.msra.mxu0 0.0
    %683 = vmatprep.subr.mxu0 0.0
    %684 = vmatpush1.xpose.msra.mxu0 0.0
    %685 = vmatprep.subr.mxu0 0.0
    %686 = vmatpush1.xpose.msra.mxu0 0.0
    %687 = vmatprep.subr.mxu0 0.0
    %688 = vmatpush1.xpose.msra.mxu0 0.0
    %689 = vmatprep.subr.mxu0 0.0
    %690 = vmatpush1.xpose.msra.mxu0 0.0
    %691 = vmatprep.subr.mxu0 0.0
    %692 = vmatpush1.xpose.msra.mxu0 0.0
    %693 = vmatprep.mubr.f32.mxu0 0.0
    %694 = vmatmul.mubr.f32.gmra.mrb[0].mxu0 %v625
    %v695 = vpop.f32.mrb[0].mxu0
    %v696 = vadd.f32 0.0, %v695
    %v697 = vpop.f32.mrb[0].mxu0
    %698 = vdwg.mxu0
    %v699 = vsel %vm476, %v458, 0
    %v701 = vsel %vm476, %v465, 0
    %703 = vmatprep.subr.mxu0 0.0
    %704 = vmatpush1.xpose.msra.mxu0 %v701
    %705 = vmatprep.subr.mxu0 0.0
    %706 = vmatpush1.xpose.msra.mxu0 0.0
    %707 = vmatprep.subr.mxu0 0.0
    %708 = vmatpush1.xpose.msra.mxu0 0.0
    %709 = vmatprep.subr.mxu0 0.0
    %710 = vmatpush1.xpose.msra.mxu0 0.0
    %711 = vmatprep.subr.mxu0 0.0
    %712 = vmatpush1.xpose.msra.mxu0 0.0
    %713 = vmatprep.subr.mxu0 0.0
    %714 = vmatpush1.xpose.msra.mxu0 0.0
    %715 = vmatprep.subr.mxu0 0.0
    %716 = vmatpush1.xpose.msra.mxu0 0.0
    %717 = vmatprep.subr.mxu0 0.0
    %718 = vmatpush1.xpose.msra.mxu0 0.0
    %719 = vmatprep.subr.mxu0 0.0
    %720 = vmatpush1.xpose.msra.mxu0 0.0
    %721 = vmatprep.subr.mxu0 0.0
    %722 = vmatpush1.xpose.msra.mxu0 0.0
    %723 = vmatprep.subr.mxu0 0.0
    %724 = vmatpush1.xpose.msra.mxu0 0.0
    %725 = vmatprep.subr.mxu0 0.0
    %726 = vmatpush1.xpose.msra.mxu0 0.0
    %727 = vmatprep.subr.mxu0 0.0
    %728 = vmatpush1.xpose.msra.mxu0 0.0
    %729 = vmatprep.subr.mxu0 0.0
    %730 = vmatpush1.xpose.msra.mxu0 0.0
    %731 = vmatprep.subr.mxu0 0.0
    %732 = vmatpush1.xpose.msra.mxu0 0.0
    %733 = vmatprep.subr.mxu0 0.0
    %734 = vmatpush1.xpose.msra.mxu0 0.0
    %735 = vmatprep.subr.mxu0 0.0
    %736 = vmatpush1.xpose.msra.mxu0 0.0
    %737 = vmatprep.subr.mxu0 0.0
    %738 = vmatpush1.xpose.msra.mxu0 0.0
    %739 = vmatprep.subr.mxu0 0.0
    %740 = vmatpush1.xpose.msra.mxu0 0.0
    %741 = vmatprep.subr.mxu0 0.0
    %742 = vmatpush1.xpose.msra.mxu0 0.0
    %743 = vmatprep.subr.mxu0 0.0
    %744 = vmatpush1.xpose.msra.mxu0 0.0
    %745 = vmatprep.subr.mxu0 0.0
    %746 = vmatpush1.xpose.msra.mxu0 0.0
    %747 = vmatprep.subr.mxu0 0.0
    %748 = vmatpush1.xpose.msra.mxu0 0.0
    %749 = vmatprep.subr.mxu0 0.0
    %750 = vmatpush1.xpose.msra.mxu0 0.0
    %751 = vmatprep.subr.mxu0 0.0
    %752 = vmatpush1.xpose.msra.mxu0 0.0
    %753 = vmatprep.subr.mxu0 0.0
    %754 = vmatpush1.xpose.msra.mxu0 0.0
    %755 = vmatprep.subr.mxu0 0.0
    %756 = vmatpush1.xpose.msra.mxu0 0.0
    %757 = vmatprep.subr.mxu0 0.0
    %758 = vmatpush1.xpose.msra.mxu0 0.0
    %759 = vmatprep.subr.mxu0 0.0
    %760 = vmatpush1.xpose.msra.mxu0 0.0
    %761 = vmatprep.subr.mxu0 0.0
    %762 = vmatpush1.xpose.msra.mxu0 0.0
    %763 = vmatprep.subr.mxu0 0.0
    %764 = vmatpush1.xpose.msra.mxu0 0.0
    %765 = vmatprep.subr.mxu0 0.0
    %766 = vmatpush1.xpose.msra.mxu0 0.0
    %767 = vmatprep.mubr.f32.mxu0 0.0
    %768 = vmatmul.mubr.f32.gmra.mrb[0].mxu0 %v699
    %v769 = vpop.f32.mrb[0].mxu0
    %v770 = vadd.f32 0.0, %v769
    %v771 = vpop.f32.mrb[0].mxu0
    %772 = vdwg.mxu0
    %v773 = vmul.f32 %v548, 0.35355338
    %v774 = vmul.f32 %v622, 0.35355338
    %v775 = vmul.f32 %v696, 0.35355338
    %v776 = vmul.f32 %v770, 0.35355338
    %vm777 = vcmp.gt.f32.partialorder %v163, 0.5
    %v778 = vsel %vm777, 1, 0
    %v779 = vlaneseq
    %v780 = vshrl.u32 %v779, 7
    %v781 = vsub.s32 0, %v780
    %v782 = vrot.slane %v778, %v781
    %vm783 = vcmp.eq.s32.totalorder %v782, 1
    %v784 = vsel %vm783, %v773, -1e+09
    %v785 = vsel %vm783, %v774, -1e+09
    %v786 = vsel %vm783, %v775, -1e+09
    %v787 = vsel %vm783, %v776, -1e+09
    %v788 = vsel %vm476, %v784, -inf
    %789 = vmax.xlane.f32.xlu0 %v788
    %v790 = vpop.xlane.xlu0 %789
    %v791 = vsel %vm476, %v785, -inf
    %792 = vmax.xlane.f32.xlu0 %v791
    %v793 = vpop.xlane.xlu0 %792
    %v794 = vsel %vm476, %v786, -inf
    %795 = vmax.xlane.f32.xlu0 %v794
    %v796 = vpop.xlane.xlu0 %795
    %v797 = vsel %vm476, %v787, -inf
    %798 = vmax.xlane.f32.xlu0 %v797
    %v799 = vpop.xlane.xlu0 %798
    %v800 = vsub.f32 %v784, %v790
    %v801 = vsub.f32 %v785, %v793
    %v802 = vsub.f32 %v786, %v796
    %v803 = vsub.f32 %v787, %v799
    %v804 = vmul.f32 %v800, 1.442695
    %v805 = vpow.pop %v804
    %v806 = vmul.f32 %v801, 1.442695
    %v807 = vpow.pop %v806
    %v808 = vmul.f32 %v802, 1.442695
    %v809 = vpow.pop %v808
    %v810 = vmul.f32 %v803, 1.442695
    %v811 = vpow.pop %v810
    %v812 = vsel %vm476, %v805, 0.0
    %813 = vadd.xlane.f32.xlu0 %v812
    %v814 = vpop.xlane.xlu0 %813
    %v815 = vsel %vm476, %v807, 0.0
    %816 = vadd.xlane.f32.xlu0 %v815
    %v817 = vpop.xlane.xlu0 %816
    %v818 = vsel %vm476, %v809, 0.0
    %819 = vadd.xlane.f32.xlu0 %v818
    %v820 = vpop.xlane.xlu0 %819
    %v821 = vsel %vm476, %v811, 0.0
    %822 = vadd.xlane.f32.xlu0 %v821
    %v823 = vpop.xlane.xlu0 %822
    %v824 = vrcp.pop %v814
    %v825 = vrcp.pop %v817
    %v826 = vrcp.pop %v820
    %v827 = vrcp.pop %v823
    %v828 = vmul.f32 %v805, %v824
    %v829 = vmul.f32 %v807, %v825
    %v830 = vmul.f32 %v809, %v826
    %v831 = vmul.f32 %v811, %v827
    %v833 = vsel %vm476, %v828, 0
    %835 = vmatprep.subr.mxu0 0.0
    %836 = vmatpush1.msra.mxu0 %v444
    %837 = vmatprep.subr.mxu0 0.0
    %838 = vmatpush1.msra.mxu0 0.0
    %839 = vmatprep.subr.mxu0 0.0
    %840 = vmatpush1.msra.mxu0 0.0
    %841 = vmatprep.subr.mxu0 0.0
    %842 = vmatpush1.msra.mxu0 0.0
    %843 = vmatprep.subr.mxu0 0.0
    %844 = vmatpush1.msra.mxu0 0.0
    %845 = vmatprep.subr.mxu0 0.0
    %846 = vmatpush1.msra.mxu0 0.0
    %847 = vmatprep.subr.mxu0 0.0
    %848 = vmatpush1.msra.mxu0 0.0
    %849 = vmatprep.subr.mxu0 0.0
    %850 = vmatpush1.msra.mxu0 0.0
    %851 = vmatprep.subr.mxu0 0.0
    %852 = vmatpush1.msra.mxu0 0.0
    %853 = vmatprep.subr.mxu0 0.0
    %854 = vmatpush1.msra.mxu0 0.0
    %855 = vmatprep.subr.mxu0 0.0
    %856 = vmatpush1.msra.mxu0 0.0
    %857 = vmatprep.subr.mxu0 0.0
    %858 = vmatpush1.msra.mxu0 0.0
    %859 = vmatprep.subr.mxu0 0.0
    %860 = vmatpush1.msra.mxu0 0.0
    %861 = vmatprep.subr.mxu0 0.0
    %862 = vmatpush1.msra.mxu0 0.0
    %863 = vmatprep.subr.mxu0 0.0
    %864 = vmatpush1.msra.mxu0 0.0
    %865 = vmatprep.subr.mxu0 0.0
    %866 = vmatpush1.msra.mxu0 0.0
    %867 = vmatprep.subr.mxu0 0.0
    %868 = vmatpush1.msra.mxu0 0.0
    %869 = vmatprep.subr.mxu0 0.0
    %870 = vmatpush1.msra.mxu0 0.0
    %871 = vmatprep.subr.mxu0 0.0
    %872 = vmatpush1.msra.mxu0 0.0
    %873 = vmatprep.subr.mxu0 0.0
    %874 = vmatpush1.msra.mxu0 0.0
    %875 = vmatprep.subr.mxu0 0.0
    %876 = vmatpush1.msra.mxu0 0.0
    %877 = vmatprep.subr.mxu0 0.0
    %878 = vmatpush1.msra.mxu0 0.0
    %879 = vmatprep.subr.mxu0 0.0
    %880 = vmatpush1.msra.mxu0 0.0
    %881 = vmatprep.subr.mxu0 0.0
    %882 = vmatpush1.msra.mxu0 0.0
    %883 = vmatprep.subr.mxu0 0.0
    %884 = vmatpush1.msra.mxu0 0.0
    %885 = vmatprep.subr.mxu0 0.0
    %886 = vmatpush1.msra.mxu0 0.0
    %887 = vmatprep.subr.mxu0 0.0
    %888 = vmatpush1.msra.mxu0 0.0
    %889 = vmatprep.subr.mxu0 0.0
    %890 = vmatpush1.msra.mxu0 0.0
    %891 = vmatprep.subr.mxu0 0.0
    %892 = vmatpush1.msra.mxu0 0.0
    %893 = vmatprep.subr.mxu0 0.0
    %894 = vmatpush1.msra.mxu0 0.0
    %895 = vmatprep.subr.mxu0 0.0
    %896 = vmatpush1.msra.mxu0 0.0
    %897 = vmatprep.subr.mxu0 0.0
    %898 = vmatpush1.msra.mxu0 0.0
    %899 = vmatprep.mubr.f32.mxu0 0.0
    %900 = vmatmul.mubr.f32.gmra.mrb[0].mxu0 %v833
    %v901 = vpop.f32.mrb[0].mxu0
    %v902 = vadd.f32 0.0, %v901
    %v903 = vpop.f32.mrb[0].mxu0
    %904 = vdwg.mxu0
    %v906 = vsel %vm476, %v829, 0
    %908 = vmatprep.subr.mxu0 0.0
    %909 = vmatpush1.msra.mxu0 %v468
    %910 = vmatprep.subr.mxu0 0.0
    %911 = vmatpush1.msra.mxu0 0.0
    %912 = vmatprep.subr.mxu0 0.0
    %913 = vmatpush1.msra.mxu0 0.0
    %914 = vmatprep.subr.mxu0 0.0
    %915 = vmatpush1.msra.mxu0 0.0
    %916 = vmatprep.subr.mxu0 0.0
    %917 = vmatpush1.msra.mxu0 0.0
    %918 = vmatprep.subr.mxu0 0.0
    %919 = vmatpush1.msra.mxu0 0.0
    %920 = vmatprep.subr.mxu0 0.0
    %921 = vmatpush1.msra.mxu0 0.0
    %922 = vmatprep.subr.mxu0 0.0
    %923 = vmatpush1.msra.mxu0 0.0
    %924 = vmatprep.subr.mxu0 0.0
    %925 = vmatpush1.msra.mxu0 0.0
    %926 = vmatprep.subr.mxu0 0.0
    %927 = vmatpush1.msra.mxu0 0.0
    %928 = vmatprep.subr.mxu0 0.0
    %929 = vmatpush1.msra.mxu0 0.0
    %930 = vmatprep.subr.mxu0 0.0
    %931 = vmatpush1.msra.mxu0 0.0
    %932 = vmatprep.subr.mxu0 0.0
    %933 = vmatpush1.msra.mxu0 0.0
    %934 = vmatprep.subr.mxu0 0.0
    %935 = vmatpush1.msra.mxu0 0.0
    %936 = vmatprep.subr.mxu0 0.0
    %937 = vmatpush1.msra.mxu0 0.0
    %938 = vmatprep.subr.mxu0 0.0
    %939 = vmatpush1.msra.mxu0 0.0
    %940 = vmatprep.subr.mxu0 0.0
    %941 = vmatpush1.msra.mxu0 0.0
    %942 = vmatprep.subr.mxu0 0.0
    %943 = vmatpush1.msra.mxu0 0.0
    %944 = vmatprep.subr.mxu0 0.0
    %945 = vmatpush1.msra.mxu0 0.0
    %946 = vmatprep.subr.mxu0 0.0
    %947 = vmatpush1.msra.mxu0 0.0
    %948 = vmatprep.subr.mxu0 0.0
    %949 = vmatpush1.msra.mxu0 0.0
    %950 = vmatprep.subr.mxu0 0.0
    %951 = vmatpush1.msra.mxu0 0.0
    %952 = vmatprep.subr.mxu0 0.0
    %953 = vmatpush1.msra.mxu0 0.0
    %954 = vmatprep.subr.mxu0 0.0
    %955 = vmatpush1.msra.mxu0 0.0
    %956 = vmatprep.subr.mxu0 0.0
    %957 = vmatpush1.msra.mxu0 0.0
    %958 = vmatprep.subr.mxu0 0.0
    %959 = vmatpush1.msra.mxu0 0.0
    %960 = vmatprep.subr.mxu0 0.0
    %961 = vmatpush1.msra.mxu0 0.0
    %962 = vmatprep.subr.mxu0 0.0
    %963 = vmatpush1.msra.mxu0 0.0
    %964 = vmatprep.subr.mxu0 0.0
    %965 = vmatpush1.msra.mxu0 0.0
    %966 = vmatprep.subr.mxu0 0.0
    %967 = vmatpush1.msra.mxu0 0.0
    %968 = vmatprep.subr.mxu0 0.0
    %969 = vmatpush1.msra.mxu0 0.0
    %970 = vmatprep.subr.mxu0 0.0
    %971 = vmatpush1.msra.mxu0 0.0
    %972 = vmatprep.mubr.f32.mxu0 0.0
    %973 = vmatmul.mubr.f32.gmra.mrb[0].mxu0 %v906
    %v974 = vpop.f32.mrb[0].mxu0
    %v975 = vadd.f32 0.0, %v974
    %v976 = vpop.f32.mrb[0].mxu0
    %977 = vdwg.mxu0
    %v979 = vsel %vm476, %v830, 0
    %981 = vmatprep.subr.mxu0 0.0
    %982 = vmatpush1.msra.mxu0 %v471
    %983 = vmatprep.subr.mxu0 0.0
    %984 = vmatpush1.msra.mxu0 0.0
    %985 = vmatprep.subr.mxu0 0.0
    %986 = vmatpush1.msra.mxu0 0.0
    %987 = vmatprep.subr.mxu0 0.0
    %988 = vmatpush1.msra.mxu0 0.0
    %989 = vmatprep.subr.mxu0 0.0
    %990 = vmatpush1.msra.mxu0 0.0
    %991 = vmatprep.subr.mxu0 0.0
    %992 = vmatpush1.msra.mxu0 0.0
    %993 = vmatprep.subr.mxu0 0.0
    %994 = vmatpush1.msra.mxu0 0.0
    %995 = vmatprep.subr.mxu0 0.0
    %996 = vmatpush1.msra.mxu0 0.0
    %997 = vmatprep.subr.mxu0 0.0
    %998 = vmatpush1.msra.mxu0 0.0
    %999 = vmatprep.subr.mxu0 0.0
    %1000 = vmatpush1.msra.mxu0 0.0
    %1001 = vmatprep.subr.mxu0 0.0
    %1002 = vmatpush1.msra.mxu0 0.0
    %1003 = vmatprep.subr.mxu0 0.0
    %1004 = vmatpush1.msra.mxu0 0.0
    %1005 = vmatprep.subr.mxu0 0.0
    %1006 = vmatpush1.msra.mxu0 0.0
    %1007 = vmatprep.subr.mxu0 0.0
    %1008 = vmatpush1.msra.mxu0 0.0
    %1009 = vmatprep.subr.mxu0 0.0
    %1010 = vmatpush1.msra.mxu0 0.0
    %1011 = vmatprep.subr.mxu0 0.0
    %1012 = vmatpush1.msra.mxu0 0.0
    %1013 = vmatprep.subr.mxu0 0.0
    %1014 = vmatpush1.msra.mxu0 0.0
    %1015 = vmatprep.subr.mxu0 0.0
    %1016 = vmatpush1.msra.mxu0 0.0
    %1017 = vmatprep.subr.mxu0 0.0
    %1018 = vmatpush1.msra.mxu0 0.0
    %1019 = vmatprep.subr.mxu0 0.0
    %1020 = vmatpush1.msra.mxu0 0.0
    %1021 = vmatprep.subr.mxu0 0.0
    %1022 = vmatpush1.msra.mxu0 0.0
    %1023 = vmatprep.subr.mxu0 0.0
    %1024 = vmatpush1.msra.mxu0 0.0
    %1025 = vmatprep.subr.mxu0 0.0
    %1026 = vmatpush1.msra.mxu0 0.0
    %1027 = vmatprep.subr.mxu0 0.0
    %1028 = vmatpush1.msra.mxu0 0.0
    %1029 = vmatprep.subr.mxu0 0.0
    %1030 = vmatpush1.msra.mxu0 0.0
    %1031 = vmatprep.subr.mxu0 0.0
    %1032 = vmatpush1.msra.mxu0 0.0
    %1033 = vmatprep.subr.mxu0 0.0
    %1034 = vmatpush1.msra.mxu0 0.0
    %1035 = vmatprep.subr.mxu0 0.0
    %1036 = vmatpush1.msra.mxu0 0.0
    %1037 = vmatprep.subr.mxu0 0.0
    %1038 = vmatpush1.msra.mxu0 0.0
    %1039 = vmatprep.subr.mxu0 0.0
    %1040 = vmatpush1.msra.mxu0 0.0
    %1041 = vmatprep.subr.mxu0 0.0
    %1042 = vmatpush1.msra.mxu0 0.0
    %1043 = vmatprep.subr.mxu0 0.0
    %1044 = vmatpush1.msra.mxu0 0.0
    %1045 = vmatprep.mubr.f32.mxu0 0.0
    %1046 = vmatmul.mubr.f32.gmra.mrb[0].mxu0 %v979
    %v1047 = vpop.f32.mrb[0].mxu0
    %v1048 = vadd.f32 0.0, %v1047
    %v1049 = vpop.f32.mrb[0].mxu0
    %1050 = vdwg.mxu0
    %v1052 = vsel %vm476, %v831, 0
    %1054 = vmatprep.subr.mxu0 0.0
    %1055 = vmatpush1.msra.mxu0 %v474
    %1056 = vmatprep.subr.mxu0 0.0
    %1057 = vmatpush1.msra.mxu0 0.0
    %1058 = vmatprep.subr.mxu0 0.0
    %1059 = vmatpush1.msra.mxu0 0.0
    %1060 = vmatprep.subr.mxu0 0.0
    %1061 = vmatpush1.msra.mxu0 0.0
    %1062 = vmatprep.subr.mxu0 0.0
    %1063 = vmatpush1.msra.mxu0 0.0
    %1064 = vmatprep.subr.mxu0 0.0
    %1065 = vmatpush1.msra.mxu0 0.0
    %1066 = vmatprep.subr.mxu0 0.0
    %1067 = vmatpush1.msra.mxu0 0.0
    %1068 = vmatprep.subr.mxu0 0.0
    %1069 = vmatpush1.msra.mxu0 0.0
    %1070 = vmatprep.subr.mxu0 0.0
    %1071 = vmatpush1.msra.mxu0 0.0
    %1072 = vmatprep.subr.mxu0 0.0
    %1073 = vmatpush1.msra.mxu0 0.0
    %1074 = vmatprep.subr.mxu0 0.0
    %1075 = vmatpush1.msra.mxu0 0.0
    %1076 = vmatprep.subr.mxu0 0.0
    %1077 = vmatpush1.msra.mxu0 0.0
    %1078 = vmatprep.subr.mxu0 0.0
    %1079 = vmatpush1.msra.mxu0 0.0
    %1080 = vmatprep.subr.mxu0 0.0
    %1081 = vmatpush1.msra.mxu0 0.0
    %1082 = vmatprep.subr.mxu0 0.0
    %1083 = vmatpush1.msra.mxu0 0.0
    %1084 = vmatprep.subr.mxu0 0.0
    %1085 = vmatpush1.msra.mxu0 0.0
    %1086 = vmatprep.subr.mxu0 0.0
    %1087 = vmatpush1.msra.mxu0 0.0
    %1088 = vmatprep.subr.mxu0 0.0
    %1089 = vmatpush1.msra.mxu0 0.0
    %1090 = vmatprep.subr.mxu0 0.0
    %1091 = vmatpush1.msra.mxu0 0.0
    %1092 = vmatprep.subr.mxu0 0.0
    %1093 = vmatpush1.msra.mxu0 0.0
    %1094 = vmatprep.subr.mxu0 0.0
    %1095 = vmatpush1.msra.mxu0 0.0
    %1096 = vmatprep.subr.mxu0 0.0
    %1097 = vmatpush1.msra.mxu0 0.0
    %1098 = vmatprep.subr.mxu0 0.0
    %1099 = vmatpush1.msra.mxu0 0.0
    %1100 = vmatprep.subr.mxu0 0.0
    %1101 = vmatpush1.msra.mxu0 0.0
    %1102 = vmatprep.subr.mxu0 0.0
    %1103 = vmatpush1.msra.mxu0 0.0
    %1104 = vmatprep.subr.mxu0 0.0
    %1105 = vmatpush1.msra.mxu0 0.0
    %1106 = vmatprep.subr.mxu0 0.0
    %1107 = vmatpush1.msra.mxu0 0.0
    %1108 = vmatprep.subr.mxu0 0.0
    %1109 = vmatpush1.msra.mxu0 0.0
    %1110 = vmatprep.subr.mxu0 0.0
    %1111 = vmatpush1.msra.mxu0 0.0
    %1112 = vmatprep.subr.mxu0 0.0
    %1113 = vmatpush1.msra.mxu0 0.0
    %1114 = vmatprep.subr.mxu0 0.0
    %1115 = vmatpush1.msra.mxu0 0.0
    %1116 = vmatprep.subr.mxu0 0.0
    %1117 = vmatpush1.msra.mxu0 0.0
    %1118 = vmatprep.mubr.f32.mxu0 0.0
    %1119 = vmatmul.mubr.f32.gmra.mrb[0].mxu0 %v1052
    %v1120 = vpop.f32.mrb[0].mxu0
    %v1121 = vadd.f32 0.0, %v1120
    %v1122 = vpop.f32.mrb[0].mxu0
    %1123 = vdwg.mxu0
    %1125 = vrot.lane.b32.xlu0 %v975, 8
    %v1126 = vpop.permute.xlu0 %1125
    %1129 = vrot.lane.b32.xlu0 %v1048, 16
    %v1130 = vpop.permute.xlu0 %1129
    %1133 = vrot.lane.b32.xlu0 %v1121, 24
    %v1134 = vpop.permute.xlu0 %1133
    %v1136 = vsel %vm476, %v902, %v1126
    %vm1137 = vcmask 130048
    %v1138 = vsel %vm1137, %v1136, %v1130
    %vm1139 = vcmask 195584
    %v1140 = vsel %vm1139, %v1138, %v1134
    %1142 = vrot.lane.b32.xlu0 %v287, 120
    %v1143 = vpop.permute.xlu0 %1142
    %1144 = vrot.lane.b32.xlu0 %v287, 112
    %v1145 = vpop.permute.xlu0 %1144
    %1146 = vrot.lane.b32.xlu0 %v287, 104
    %v1147 = vpop.permute.xlu0 %1146
    %1149 = vrot.lane.b32.xlu0 %v368, 120
    %v1150 = vpop.permute.xlu0 %1149
    %1151 = vrot.lane.b32.xlu0 %v368, 112
    %v1152 = vpop.permute.xlu0 %1151
    %1153 = vrot.lane.b32.xlu0 %v368, 104
    %v1154 = vpop.permute.xlu0 %1153
    %1156 = vrot.lane.b32.xlu0 %v449, 120
    %v1157 = vpop.permute.xlu0 %1156
    %1159 = vrot.lane.b32.xlu0 %v449, 112
    %v1160 = vpop.permute.xlu0 %1159
    %1162 = vrot.lane.b32.xlu0 %v449, 104
    %v1163 = vpop.permute.xlu0 %1162
    %v1165 = vsel %vm476, %v287, 0
    %v1167 = vsel %vm476, %v368, 0
    %1169 = vmatprep.subr.mxu0 0.0
    %1170 = vmatpush1.xpose.msra.mxu0 %v1167
    %1171 = vmatprep.subr.mxu0 0.0
    %1172 = vmatpush1.xpose.msra.mxu0 0.0
    %1173 = vmatprep.subr.mxu0 0.0
    %1174 = vmatpush1.xpose.msra.mxu0 0.0
    %1175 = vmatprep.subr.mxu0 0.0
    %1176 = vmatpush1.xpose.msra.mxu0 0.0
    %1177 = vmatprep.subr.mxu0 0.0
    %1178 = vmatpush1.xpose.msra.mxu0 0.0
    %1179 = vmatprep.subr.mxu0 0.0
    %1180 = vmatpush1.xpose.msra.mxu0 0.0
    %1181 = vmatprep.subr.mxu0 0.0
    %1182 = vmatpush1.xpose.msra.mxu0 0.0
    %1183 = vmatprep.subr.mxu0 0.0
    %1184 = vmatpush1.xpose.msra.mxu0 0.0
    %1185 = vmatprep.subr.mxu0 0.0
    %1186 = vmatpush1.xpose.msra.mxu0 0.0
    %1187 = vmatprep.subr.mxu0 0.0
    %1188 = vmatpush1.xpose.msra.mxu0 0.0
    %1189 = vmatprep.subr.mxu0 0.0
    %1190 = vmatpush1.xpose.msra.mxu0 0.0
    %1191 = vmatprep.subr.mxu0 0.0
    %1192 = vmatpush1.xpose.msra.mxu0 0.0
    %1193 = vmatprep.subr.mxu0 0.0
    %1194 = vmatpush1.xpose.msra.mxu0 0.0
    %1195 = vmatprep.subr.mxu0 0.0
    %1196 = vmatpush1.xpose.msra.mxu0 0.0
    %1197 = vmatprep.subr.mxu0 0.0
    %1198 = vmatpush1.xpose.msra.mxu0 0.0
    %1199 = vmatprep.subr.mxu0 0.0
    %1200 = vmatpush1.xpose.msra.mxu0 0.0
    %1201 = vmatprep.subr.mxu0 0.0
    %1202 = vmatpush1.xpose.msra.mxu0 0.0
    %1203 = vmatprep.subr.mxu0 0.0
    %1204 = vmatpush1.xpose.msra.mxu0 0.0
    %1205 = vmatprep.subr.mxu0 0.0
    %1206 = vmatpush1.xpose.msra.mxu0 0.0
    %1207 = vmatprep.subr.mxu0 0.0
    %1208 = vmatpush1.xpose.msra.mxu0 0.0
    %1209 = vmatprep.subr.mxu0 0.0
    %1210 = vmatpush1.xpose.msra.mxu0 0.0
    %1211 = vmatprep.subr.mxu0 0.0
    %1212 = vmatpush1.xpose.msra.mxu0 0.0
    %1213 = vmatprep.subr.mxu0 0.0
    %1214 = vmatpush1.xpose.msra.mxu0 0.0
    %1215 = vmatprep.subr.mxu0 0.0
    %1216 = vmatpush1.xpose.msra.mxu0 0.0
    %1217 = vmatprep.subr.mxu0 0.0
    %1218 = vmatpush1.xpose.msra.mxu0 0.0
    %1219 = vmatprep.subr.mxu0 0.0
    %1220 = vmatpush1.xpose.msra.mxu0 0.0
    %1221 = vmatprep.subr.mxu0 0.0
    %1222 = vmatpush1.xpose.msra.mxu0 0.0
    %1223 = vmatprep.subr.mxu0 0.0
    %1224 = vmatpush1.xpose.msra.mxu0 0.0
    %1225 = vmatprep.subr.mxu0 0.0
    %1226 = vmatpush1.xpose.msra.mxu0 0.0
    %1227 = vmatprep.subr.mxu0 0.0
    %1228 = vmatpush1.xpose.msra.mxu0 0.0
    %1229 = vmatprep.subr.mxu0 0.0
    %1230 = vmatpush1.xpose.msra.mxu0 0.0
    %1231 = vmatprep.subr.mxu0 0.0
    %1232 = vmatpush1.xpose.msra.mxu0 0.0
    %1233 = vmatprep.mubr.f32.mxu0 0.0
    %1234 = vmatmul.mubr.f32.gmra.mrb[0].mxu0 %v1165
    %v1235 = vpop.f32.mrb[0].mxu0
    %v1236 = vadd.f32 0.0, %v1235
    %v1237 = vpop.f32.mrb[0].mxu0
    %1238 = vdwg.mxu0
    %v1239 = vsel %vm476, %v1143, 0
    %v1241 = vsel %vm476, %v1150, 0
    %1243 = vmatprep.subr.mxu0 0.0
    %1244 = vmatpush1.xpose.msra.mxu0 %v1241
    %1245 = vmatprep.subr.mxu0 0.0
    %1246 = vmatpush1.xpose.msra.mxu0 0.0
    %1247 = vmatprep.subr.mxu0 0.0
    %1248 = vmatpush1.xpose.msra.mxu0 0.0
    %1249 = vmatprep.subr.mxu0 0.0
    %1250 = vmatpush1.xpose.msra.mxu0 0.0
    %1251 = vmatprep.subr.mxu0 0.0
    %1252 = vmatpush1.xpose.msra.mxu0 0.0
    %1253 = vmatprep.subr.mxu0 0.0
    %1254 = vmatpush1.xpose.msra.mxu0 0.0
    %1255 = vmatprep.subr.mxu0 0.0
    %1256 = vmatpush1.xpose.msra.mxu0 0.0
    %1257 = vmatprep.subr.mxu0 0.0
    %1258 = vmatpush1.xpose.msra.mxu0 0.0
    %1259 = vmatprep.subr.mxu0 0.0
    %1260 = vmatpush1.xpose.msra.mxu0 0.0
    %1261 = vmatprep.subr.mxu0 0.0
    %1262 = vmatpush1.xpose.msra.mxu0 0.0
    %1263 = vmatprep.subr.mxu0 0.0
    %1264 = vmatpush1.xpose.msra.mxu0 0.0
    %1265 = vmatprep.subr.mxu0 0.0
    %1266 = vmatpush1.xpose.msra.mxu0 0.0
    %1267 = vmatprep.subr.mxu0 0.0
    %1268 = vmatpush1.xpose.msra.mxu0 0.0
    %1269 = vmatprep.subr.mxu0 0.0
    %1270 = vmatpush1.xpose.msra.mxu0 0.0
    %1271 = vmatprep.subr.mxu0 0.0
    %1272 = vmatpush1.xpose.msra.mxu0 0.0
    %1273 = vmatprep.subr.mxu0 0.0
    %1274 = vmatpush1.xpose.msra.mxu0 0.0
    %1275 = vmatprep.subr.mxu0 0.0
    %1276 = vmatpush1.xpose.msra.mxu0 0.0
    %1277 = vmatprep.subr.mxu0 0.0
    %1278 = vmatpush1.xpose.msra.mxu0 0.0
    %1279 = vmatprep.subr.mxu0 0.0
    %1280 = vmatpush1.xpose.msra.mxu0 0.0
    %1281 = vmatprep.subr.mxu0 0.0
    %1282 = vmatpush1.xpose.msra.mxu0 0.0
    %1283 = vmatprep.subr.mxu0 0.0
    %1284 = vmatpush1.xpose.msra.mxu0 0.0
    %1285 = vmatprep.subr.mxu0 0.0
    %1286 = vmatpush1.xpose.msra.mxu0 0.0
    %1287 = vmatprep.subr.mxu0 0.0
    %1288 = vmatpush1.xpose.msra.mxu0 0.0
    %1289 = vmatprep.subr.mxu0 0.0
    %1290 = vmatpush1.xpose.msra.mxu0 0.0
    %1291 = vmatprep.subr.mxu0 0.0
    %1292 = vmatpush1.xpose.msra.mxu0 0.0
    %1293 = vmatprep.subr.mxu0 0.0
    %1294 = vmatpush1.xpose.msra.mxu0 0.0
    %1295 = vmatprep.subr.mxu0 0.0
    %1296 = vmatpush1.xpose.msra.mxu0 0.0
    %1297 = vmatprep.subr.mxu0 0.0
    %1298 = vmatpush1.xpose.msra.mxu0 0.0
    %1299 = vmatprep.subr.mxu0 0.0
    %1300 = vmatpush1.xpose.msra.mxu0 0.0
    %1301 = vmatprep.subr.mxu0 0.0
    %1302 = vmatpush1.xpose.msra.mxu0 0.0
    %1303 = vmatprep.subr.mxu0 0.0
    %1304 = vmatpush1.xpose.msra.mxu0 0.0
    %1305 = vmatprep.subr.mxu0 0.0
    %1306 = vmatpush1.xpose.msra.mxu0 0.0
    %1307 = vmatprep.mubr.f32.mxu0 0.0
    %1308 = vmatmul.mubr.f32.gmra.mrb[0].mxu0 %v1239
    %v1309 = vpop.f32.mrb[0].mxu0
    %v1310 = vadd.f32 0.0, %v1309
    %v1311 = vpop.f32.mrb[0].mxu0
    %1312 = vdwg.mxu0
    %v1313 = vsel %vm476, %v1145, 0
    %v1315 = vsel %vm476, %v1152, 0
    %1317 = vmatprep.subr.mxu0 0.0
    %1318 = vmatpush1.xpose.msra.mxu0 %v1315
    %1319 = vmatprep.subr.mxu0 0.0
    %1320 = vmatpush1.xpose.msra.mxu0 0.0
    %1321 = vmatprep.subr.mxu0 0.0
    %1322 = vmatpush1.xpose.msra.mxu0 0.0
    %1323 = vmatprep.subr.mxu0 0.0
    %1324 = vmatpush1.xpose.msra.mxu0 0.0
    %1325 = vmatprep.subr.mxu0 0.0
    %1326 = vmatpush1.xpose.msra.mxu0 0.0
    %1327 = vmatprep.subr.mxu0 0.0
    %1328 = vmatpush1.xpose.msra.mxu0 0.0
    %1329 = vmatprep.subr.mxu0 0.0
    %1330 = vmatpush1.xpose.msra.mxu0 0.0
    %1331 = vmatprep.subr.mxu0 0.0
    %1332 = vmatpush1.xpose.msra.mxu0 0.0
    %1333 = vmatprep.subr.mxu0 0.0
    %1334 = vmatpush1.xpose.msra.mxu0 0.0
    %1335 = vmatprep.subr.mxu0 0.0
    %1336 = vmatpush1.xpose.msra.mxu0 0.0
    %1337 = vmatprep.subr.mxu0 0.0
    %1338 = vmatpush1.xpose.msra.mxu0 0.0
    %1339 = vmatprep.subr.mxu0 0.0
    %1340 = vmatpush1.xpose.msra.mxu0 0.0
    %1341 = vmatprep.subr.mxu0 0.0
    %1342 = vmatpush1.xpose.msra.mxu0 0.0
    %1343 = vmatprep.subr.mxu0 0.0
    %1344 = vmatpush1.xpose.msra.mxu0 0.0
    %1345 = vmatprep.subr.mxu0 0.0
    %1346 = vmatpush1.xpose.msra.mxu0 0.0
    %1347 = vmatprep.subr.mxu0 0.0
    %1348 = vmatpush1.xpose.msra.mxu0 0.0
    %1349 = vmatprep.subr.mxu0 0.0
    %1350 = vmatpush1.xpose.msra.mxu0 0.0
    %1351 = vmatprep.subr.mxu0 0.0
    %1352 = vmatpush1.xpose.msra.mxu0 0.0
    %1353 = vmatprep.subr.mxu0 0.0
    %1354 = vmatpush1.xpose.msra.mxu0 0.0
    %1355 = vmatprep.subr.mxu0 0.0
    %1356 = vmatpush1.xpose.msra.mxu0 0.0
    %1357 = vmatprep.subr.mxu0 0.0
    %1358 = vmatpush1.xpose.msra.mxu0 0.0
    %1359 = vmatprep.subr.mxu0 0.0
    %1360 = vmatpush1.xpose.msra.mxu0 0.0
    %1361 = vmatprep.subr.mxu0 0.0
    %1362 = vmatpush1.xpose.msra.mxu0 0.0
    %1363 = vmatprep.subr.mxu0 0.0
    %1364 = vmatpush1.xpose.msra.mxu0 0.0
    %1365 = vmatprep.subr.mxu0 0.0
    %1366 = vmatpush1.xpose.msra.mxu0 0.0
    %1367 = vmatprep.subr.mxu0 0.0
    %1368 = vmatpush1.xpose.msra.mxu0 0.0
    %1369 = vmatprep.subr.mxu0 0.0
    %1370 = vmatpush1.xpose.msra.mxu0 0.0
    %1371 = vmatprep.subr.mxu0 0.0
    %1372 = vmatpush1.xpose.msra.mxu0 0.0
    %1373 = vmatprep.subr.mxu0 0.0
    %1374 = vmatpush1.xpose.msra.mxu0 0.0
    %1375 = vmatprep.subr.mxu0 0.0
    %1376 = vmatpush1.xpose.msra.mxu0 0.0
    %1377 = vmatprep.subr.mxu0 0.0
    %1378 = vmatpush1.xpose.msra.mxu0 0.0
    %1379 = vmatprep.subr.mxu0 0.0
    %1380 = vmatpush1.xpose.msra.mxu0 0.0
    %1381 = vmatprep.mubr.f32.mxu0 0.0
    %1382 = vmatmul.mubr.f32.gmra.mrb[0].mxu0 %v1313
    %v1383 = vpop.f32.mrb[0].mxu0
    %v1384 = vadd.f32 0.0, %v1383
    %v1385 = vpop.f32.mrb[0].mxu0
    %1386 = vdwg.mxu0
    %v1387 = vsel %vm476, %v1147, 0
    %v1389 = vsel %vm476, %v1154, 0
    %1391 = vmatprep.subr.mxu0 0.0
    %1392 = vmatpush1.xpose.msra.mxu0 %v1389
    %1393 = vmatprep.subr.mxu0 0.0
    %1394 = vmatpush1.xpose.msra.mxu0 0.0
    %1395 = vmatprep.subr.mxu0 0.0
    %1396 = vmatpush1.xpose.msra.mxu0 0.0
    %1397 = vmatprep.subr.mxu0 0.0
    %1398 = vmatpush1.xpose.msra.mxu0 0.0
    %1399 = vmatprep.subr.mxu0 0.0
    %1400 = vmatpush1.xpose.msra.mxu0 0.0
    %1401 = vmatprep.subr.mxu0 0.0
    %1402 = vmatpush1.xpose.msra.mxu0 0.0
    %1403 = vmatprep.subr.mxu0 0.0
    %1404 = vmatpush1.xpose.msra.mxu0 0.0
    %1405 = vmatprep.subr.mxu0 0.0
    %1406 = vmatpush1.xpose.msra.mxu0 0.0
    %1407 = vmatprep.subr.mxu0 0.0
    %1408 = vmatpush1.xpose.msra.mxu0 0.0
    %1409 = vmatprep.subr.mxu0 0.0
    %1410 = vmatpush1.xpose.msra.mxu0 0.0
    %1411 = vmatprep.subr.mxu0 0.0
    %1412 = vmatpush1.xpose.msra.mxu0 0.0
    %1413 = vmatprep.subr.mxu0 0.0
    %1414 = vmatpush1.xpose.msra.mxu0 0.0
    %1415 = vmatprep.subr.mxu0 0.0
    %1416 = vmatpush1.xpose.msra.mxu0 0.0
    %1417 = vmatprep.subr.mxu0 0.0
    %1418 = vmatpush1.xpose.msra.mxu0 0.0
    %1419 = vmatprep.subr.mxu0 0.0
    %1420 = vmatpush1.xpose.msra.mxu0 0.0
    %1421 = vmatprep.subr.mxu0 0.0
    %1422 = vmatpush1.xpose.msra.mxu0 0.0
    %1423 = vmatprep.subr.mxu0 0.0
    %1424 = vmatpush1.xpose.msra.mxu0 0.0
    %1425 = vmatprep.subr.mxu0 0.0
    %1426 = vmatpush1.xpose.msra.mxu0 0.0
    %1427 = vmatprep.subr.mxu0 0.0
    %1428 = vmatpush1.xpose.msra.mxu0 0.0
    %1429 = vmatprep.subr.mxu0 0.0
    %1430 = vmatpush1.xpose.msra.mxu0 0.0
    %1431 = vmatprep.subr.mxu0 0.0
    %1432 = vmatpush1.xpose.msra.mxu0 0.0
    %1433 = vmatprep.subr.mxu0 0.0
    %1434 = vmatpush1.xpose.msra.mxu0 0.0
    %1435 = vmatprep.subr.mxu0 0.0
    %1436 = vmatpush1.xpose.msra.mxu0 0.0
    %1437 = vmatprep.subr.mxu0 0.0
    %1438 = vmatpush1.xpose.msra.mxu0 0.0
    %1439 = vmatprep.subr.mxu0 0.0
    %1440 = vmatpush1.xpose.msra.mxu0 0.0
    %1441 = vmatprep.subr.mxu0 0.0
    %1442 = vmatpush1.xpose.msra.mxu0 0.0
    %1443 = vmatprep.subr.mxu0 0.0
    %1444 = vmatpush1.xpose.msra.mxu0 0.0
    %1445 = vmatprep.subr.mxu0 0.0
    %1446 = vmatpush1.xpose.msra.mxu0 0.0
    %1447 = vmatprep.subr.mxu0 0.0
    %1448 = vmatpush1.xpose.msra.mxu0 0.0
    %1449 = vmatprep.subr.mxu0 0.0
    %1450 = vmatpush1.xpose.msra.mxu0 0.0
    %1451 = vmatprep.subr.mxu0 0.0
    %1452 = vmatpush1.xpose.msra.mxu0 0.0
    %1453 = vmatprep.subr.mxu0 0.0
    %1454 = vmatpush1.xpose.msra.mxu0 0.0
    %1455 = vmatprep.mubr.f32.mxu0 0.0
    %1456 = vmatmul.mubr.f32.gmra.mrb[0].mxu0 %v1387
    %v1457 = vpop.f32.mrb[0].mxu0
    %v1458 = vadd.f32 0.0, %v1457
    %v1459 = vpop.f32.mrb[0].mxu0
    %1460 = vdwg.mxu0
    %v1461 = vmul.f32 %v1236, 0.35355338
    %v1462 = vmul.f32 %v1310, 0.35355338
    %v1463 = vmul.f32 %v1384, 0.35355338
    %v1464 = vmul.f32 %v1458, 0.35355338
    %v1465 = vlaneseq
    %v1466 = vshrl.u32 %v1465, 7
    %v1467 = vsub.s32 1, %v1466
    %v1468 = vrot.slane %v778, %v1467
    %vm1469 = vcmp.eq.s32.totalorder %v1468, 1
    %v1470 = vsel %vm1469, %v1461, -1e+09
    %v1471 = vsel %vm1469, %v1462, -1e+09
    %v1472 = vsel %vm1469, %v1463, -1e+09
    %v1473 = vsel %vm1469, %v1464, -1e+09
    %v1474 = vsel %vm476, %v1470, -inf
    %1475 = vmax.xlane.f32.xlu0 %v1474
    %v1476 = vpop.xlane.xlu0 %1475
    %v1477 = vsel %vm476, %v1471, -inf
    %1478 = vmax.xlane.f32.xlu0 %v1477
    %v1479 = vpop.xlane.xlu0 %1478
    %v1480 = vsel %vm476, %v1472, -inf
    %1481 = vmax.xlane.f32.xlu0 %v1480
    %v1482 = vpop.xlane.xlu0 %1481
    %v1483 = vsel %vm476, %v1473, -inf
    %1484 = vmax.xlane.f32.xlu0 %v1483
    %v1485 = vpop.xlane.xlu0 %1484
    %v1486 = vsub.f32 %v1470, %v1476
    %v1487 = vsub.f32 %v1471, %v1479
    %v1488 = vsub.f32 %v1472, %v1482
    %v1489 = vsub.f32 %v1473, %v1485
    %v1490 = vmul.f32 %v1486, 1.442695
    %v1491 = vpow.pop %v1490
    %v1492 = vmul.f32 %v1487, 1.442695
    %v1493 = vpow.pop %v1492
    %v1494 = vmul.f32 %v1488, 1.442695
    %v1495 = vpow.pop %v1494
    %v1496 = vmul.f32 %v1489, 1.442695
    %v1497 = vpow.pop %v1496
    %v1498 = vsel %vm476, %v1491, 0.0
    %1499 = vadd.xlane.f32.xlu0 %v1498
    %v1500 = vpop.xlane.xlu0 %1499
    %v1501 = vsel %vm476, %v1493, 0.0
    %1502 = vadd.xlane.f32.xlu0 %v1501
    %v1503 = vpop.xlane.xlu0 %1502
    %v1504 = vsel %vm476, %v1495, 0.0
    %1505 = vadd.xlane.f32.xlu0 %v1504
    %v1506 = vpop.xlane.xlu0 %1505
    %v1507 = vsel %vm476, %v1497, 0.0
    %1508 = vadd.xlane.f32.xlu0 %v1507
    %v1509 = vpop.xlane.xlu0 %1508
    %v1510 = vrcp.pop %v1500
    %v1511 = vrcp.pop %v1503
    %v1512 = vrcp.pop %v1506
    %v1513 = vrcp.pop %v1509
    %v1514 = vmul.f32 %v1491, %v1510
    %v1515 = vmul.f32 %v1493, %v1511
    %v1516 = vmul.f32 %v1495, %v1512
    %v1517 = vmul.f32 %v1497, %v1513
    %v1519 = vsel %vm476, %v1514, 0
    %1521 = vmatprep.subr.mxu0 0.0
    %1522 = vmatpush1.msra.mxu0 %v449
    %1523 = vmatprep.subr.mxu0 0.0
    %1524 = vmatpush1.msra.mxu0 0.0
    %1525 = vmatprep.subr.mxu0 0.0
    %1526 = vmatpush1.msra.mxu0 0.0
    %1527 = vmatprep.subr.mxu0 0.0
    %1528 = vmatpush1.msra.mxu0 0.0
    %1529 = vmatprep.subr.mxu0 0.0
    %1530 = vmatpush1.msra.mxu0 0.0
    %1531 = vmatprep.subr.mxu0 0.0
    %1532 = vmatpush1.msra.mxu0 0.0
    %1533 = vmatprep.subr.mxu0 0.0
    %1534 = vmatpush1.msra.mxu0 0.0
    %1535 = vmatprep.subr.mxu0 0.0
    %1536 = vmatpush1.msra.mxu0 0.0
    %1537 = vmatprep.subr.mxu0 0.0
    %1538 = vmatpush1.msra.mxu0 0.0
    %1539 = vmatprep.subr.mxu0 0.0
    %1540 = vmatpush1.msra.mxu0 0.0
    %1541 = vmatprep.subr.mxu0 0.0
    %1542 = vmatpush1.msra.mxu0 0.0
    %1543 = vmatprep.subr.mxu0 0.0
    %1544 = vmatpush1.msra.mxu0 0.0
    %1545 = vmatprep.subr.mxu0 0.0
    %1546 = vmatpush1.msra.mxu0 0.0
    %1547 = vmatprep.subr.mxu0 0.0
    %1548 = vmatpush1.msra.mxu0 0.0
    %1549 = vmatprep.subr.mxu0 0.0
    %1550 = vmatpush1.msra.mxu0 0.0
    %1551 = vmatprep.subr.mxu0 0.0
    %1552 = vmatpush1.msra.mxu0 0.0
    %1553 = vmatprep.subr.mxu0 0.0
    %1554 = vmatpush1.msra.mxu0 0.0
    %1555 = vmatprep.subr.mxu0 0.0
    %1556 = vmatpush1.msra.mxu0 0.0
    %1557 = vmatprep.subr.mxu0 0.0
    %1558 = vmatpush1.msra.mxu0 0.0
    %1559 = vmatprep.subr.mxu0 0.0
    %1560 = vmatpush1.msra.mxu0 0.0
    %1561 = vmatprep.subr.mxu0 0.0
    %1562 = vmatpush1.msra.mxu0 0.0
    %1563 = vmatprep.subr.mxu0 0.0
    %1564 = vmatpush1.msra.mxu0 0.0
    %1565 = vmatprep.subr.mxu0 0.0
    %1566 = vmatpush1.msra.mxu0 0.0
    %1567 = vmatprep.subr.mxu0 0.0
    %1568 = vmatpush1.msra.mxu0 0.0
    %1569 = vmatprep.subr.mxu0 0.0
    %1570 = vmatpush1.msra.mxu0 0.0
    %1571 = vmatprep.subr.mxu0 0.0
    %1572 = vmatpush1.msra.mxu0 0.0
    %1573 = vmatprep.subr.mxu0 0.0
    %1574 = vmatpush1.msra.mxu0 0.0
    %1575 = vmatprep.subr.mxu0 0.0
    %1576 = vmatpush1.msra.mxu0 0.0
    %1577 = vmatprep.subr.mxu0 0.0
    %1578 = vmatpush1.msra.mxu0 0.0
    %1579 = vmatprep.subr.mxu0 0.0
    %1580 = vmatpush1.msra.mxu0 0.0
    %1581 = vmatprep.subr.mxu0 0.0
    %1582 = vmatpush1.msra.mxu0 0.0
    %1583 = vmatprep.subr.mxu0 0.0
    %1584 = vmatpush1.msra.mxu0 0.0
    %1585 = vmatprep.mubr.f32.mxu0 0.0
    %1586 = vmatmul.mubr.f32.gmra.mrb[0].mxu0 %v1519
    %v1587 = vpop.f32.mrb[0].mxu0
    %v1588 = vadd.f32 0.0, %v1587
    %v1589 = vpop.f32.mrb[0].mxu0
    %1590 = vdwg.mxu0
    %v1592 = vsel %vm476, %v1515, 0
    %1594 = vmatprep.subr.mxu0 0.0
    %1595 = vmatpush1.msra.mxu0 %v1157
    %1596 = vmatprep.subr.mxu0 0.0
    %1597 = vmatpush1.msra.mxu0 0.0
    %1598 = vmatprep.subr.mxu0 0.0
    %1599 = vmatpush1.msra.mxu0 0.0
    %1600 = vmatprep.subr.mxu0 0.0
    %1601 = vmatpush1.msra.mxu0 0.0
    %1602 = vmatprep.subr.mxu0 0.0
    %1603 = vmatpush1.msra.mxu0 0.0
    %1604 = vmatprep.subr.mxu0 0.0
    %1605 = vmatpush1.msra.mxu0 0.0
    %1606 = vmatprep.subr.mxu0 0.0
    %1607 = vmatpush1.msra.mxu0 0.0
    %1608 = vmatprep.subr.mxu0 0.0
    %1609 = vmatpush1.msra.mxu0 0.0
    %1610 = vmatprep.subr.mxu0 0.0
    %1611 = vmatpush1.msra.mxu0 0.0
    %1612 = vmatprep.subr.mxu0 0.0
    %1613 = vmatpush1.msra.mxu0 0.0
    %1614 = vmatprep.subr.mxu0 0.0
    %1615 = vmatpush1.msra.mxu0 0.0
    %1616 = vmatprep.subr.mxu0 0.0
    %1617 = vmatpush1.msra.mxu0 0.0
    %1618 = vmatprep.subr.mxu0 0.0
    %1619 = vmatpush1.msra.mxu0 0.0
    %1620 = vmatprep.subr.mxu0 0.0
    %1621 = vmatpush1.msra.mxu0 0.0
    %1622 = vmatprep.subr.mxu0 0.0
    %1623 = vmatpush1.msra.mxu0 0.0
    %1624 = vmatprep.subr.mxu0 0.0
    %1625 = vmatpush1.msra.mxu0 0.0
    %1626 = vmatprep.subr.mxu0 0.0
    %1627 = vmatpush1.msra.mxu0 0.0
    %1628 = vmatprep.subr.mxu0 0.0
    %1629 = vmatpush1.msra.mxu0 0.0
    %1630 = vmatprep.subr.mxu0 0.0
    %1631 = vmatpush1.msra.mxu0 0.0
    %1632 = vmatprep.subr.mxu0 0.0
    %1633 = vmatpush1.msra.mxu0 0.0
    %1634 = vmatprep.subr.mxu0 0.0
    %1635 = vmatpush1.msra.mxu0 0.0
    %1636 = vmatprep.subr.mxu0 0.0
    %1637 = vmatpush1.msra.mxu0 0.0
    %1638 = vmatprep.subr.mxu0 0.0
    %1639 = vmatpush1.msra.mxu0 0.0
    %1640 = vmatprep.subr.mxu0 0.0
    %1641 = vmatpush1.msra.mxu0 0.0
    %1642 = vmatprep.subr.mxu0 0.0
    %1643 = vmatpush1.msra.mxu0 0.0
    %1644 = vmatprep.subr.mxu0 0.0
    %1645 = vmatpush1.msra.mxu0 0.0
    %1646 = vmatprep.subr.mxu0 0.0
    %1647 = vmatpush1.msra.mxu0 0.0
    %1648 = vmatprep.subr.mxu0 0.0
    %1649 = vmatpush1.msra.mxu0 0.0
    %1650 = vmatprep.subr.mxu0 0.0
    %1651 = vmatpush1.msra.mxu0 0.0
    %1652 = vmatprep.subr.mxu0 0.0
    %1653 = vmatpush1.msra.mxu0 0.0
    %1654 = vmatprep.subr.mxu0 0.0
    %1655 = vmatpush1.msra.mxu0 0.0
    %1656 = vmatprep.subr.mxu0 0.0
    %1657 = vmatpush1.msra.mxu0 0.0
    %1658 = vmatprep.mubr.f32.mxu0 0.0
    %1659 = vmatmul.mubr.f32.gmra.mrb[0].mxu0 %v1592
    %v1660 = vpop.f32.mrb[0].mxu0
    %v1661 = vadd.f32 0.0, %v1660
    %v1662 = vpop.f32.mrb[0].mxu0
    %1663 = vdwg.mxu0
    %v1665 = vsel %vm476, %v1516, 0
    %1667 = vmatprep.subr.mxu0 0.0
    %1668 = vmatpush1.msra.mxu0 %v1160
    %1669 = vmatprep.subr.mxu0 0.0
    %1670 = vmatpush1.msra.mxu0 0.0
    %1671 = vmatprep.subr.mxu0 0.0
    %1672 = vmatpush1.msra.mxu0 0.0
    %1673 = vmatprep.subr.mxu0 0.0
    %1674 = vmatpush1.msra.mxu0 0.0
    %1675 = vmatprep.subr.mxu0 0.0
    %1676 = vmatpush1.msra.mxu0 0.0
    %1677 = vmatprep.subr.mxu0 0.0
    %1678 = vmatpush1.msra.mxu0 0.0
    %1679 = vmatprep.subr.mxu0 0.0
    %1680 = vmatpush1.msra.mxu0 0.0
    %1681 = vmatprep.subr.mxu0 0.0
    %1682 = vmatpush1.msra.mxu0 0.0
    %1683 = vmatprep.subr.mxu0 0.0
    %1684 = vmatpush1.msra.mxu0 0.0
    %1685 = vmatprep.subr.mxu0 0.0
    %1686 = vmatpush1.msra.mxu0 0.0
    %1687 = vmatprep.subr.mxu0 0.0
    %1688 = vmatpush1.msra.mxu0 0.0
    %1689 = vmatprep.subr.mxu0 0.0
    %1690 = vmatpush1.msra.mxu0 0.0
    %1691 = vmatprep.subr.mxu0 0.0
    %1692 = vmatpush1.msra.mxu0 0.0
    %1693 = vmatprep.subr.mxu0 0.0
    %1694 = vmatpush1.msra.mxu0 0.0
    %1695 = vmatprep.subr.mxu0 0.0
    %1696 = vmatpush1.msra.mxu0 0.0
    %1697 = vmatprep.subr.mxu0 0.0
    %1698 = vmatpush1.msra.mxu0 0.0
    %1699 = vmatprep.subr.mxu0 0.0
    %1700 = vmatpush1.msra.mxu0 0.0
    %1701 = vmatprep.subr.mxu0 0.0
    %1702 = vmatpush1.msra.mxu0 0.0
    %1703 = vmatprep.subr.mxu0 0.0
    %1704 = vmatpush1.msra.mxu0 0.0
    %1705 = vmatprep.subr.mxu0 0.0
    %1706 = vmatpush1.msra.mxu0 0.0
    %1707 = vmatprep.subr.mxu0 0.0
    %1708 = vmatpush1.msra.mxu0 0.0
    %1709 = vmatprep.subr.mxu0 0.0
    %1710 = vmatpush1.msra.mxu0 0.0
    %1711 = vmatprep.subr.mxu0 0.0
    %1712 = vmatpush1.msra.mxu0 0.0
    %1713 = vmatprep.subr.mxu0 0.0
    %1714 = vmatpush1.msra.mxu0 0.0
    %1715 = vmatprep.subr.mxu0 0.0
    %1716 = vmatpush1.msra.mxu0 0.0
    %1717 = vmatprep.subr.mxu0 0.0
    %1718 = vmatpush1.msra.mxu0 0.0
    %1719 = vmatprep.subr.mxu0 0.0
    %1720 = vmatpush1.msra.mxu0 0.0
    %1721 = vmatprep.subr.mxu0 0.0
    %1722 = vmatpush1.msra.mxu0 0.0
    %1723 = vmatprep.subr.mxu0 0.0
    %1724 = vmatpush1.msra.mxu0 0.0
    %1725 = vmatprep.subr.mxu0 0.0
    %1726 = vmatpush1.msra.mxu0 0.0
    %1727 = vmatprep.subr.mxu0 0.0
    %1728 = vmatpush1.msra.mxu0 0.0
    %1729 = vmatprep.subr.mxu0 0.0
    %1730 = vmatpush1.msra.mxu0 0.0
    %1731 = vmatprep.mubr.f32.mxu0 0.0
    %1732 = vmatmul.mubr.f32.gmra.mrb[0].mxu0 %v1665
    %v1733 = vpop.f32.mrb[0].mxu0
    %v1734 = vadd.f32 0.0, %v1733
    %v1735 = vpop.f32.mrb[0].mxu0
    %1736 = vdwg.mxu0
    %v1738 = vsel %vm476, %v1517, 0
    %1740 = vmatprep.subr.mxu0 0.0
    %1741 = vmatpush1.msra.mxu0 %v1163
    %1742 = vmatprep.subr.mxu0 0.0
    %1743 = vmatpush1.msra.mxu0 0.0
    %1744 = vmatprep.subr.mxu0 0.0
    %1745 = vmatpush1.msra.mxu0 0.0
    %1746 = vmatprep.subr.mxu0 0.0
    %1747 = vmatpush1.msra.mxu0 0.0
    %1748 = vmatprep.subr.mxu0 0.0
    %1749 = vmatpush1.msra.mxu0 0.0
    %1750 = vmatprep.subr.mxu0 0.0
    %1751 = vmatpush1.msra.mxu0 0.0
    %1752 = vmatprep.subr.mxu0 0.0
    %1753 = vmatpush1.msra.mxu0 0.0
    %1754 = vmatprep.subr.mxu0 0.0
    %1755 = vmatpush1.msra.mxu0 0.0
    %1756 = vmatprep.subr.mxu0 0.0
    %1757 = vmatpush1.msra.mxu0 0.0
    %1758 = vmatprep.subr.mxu0 0.0
    %1759 = vmatpush1.msra.mxu0 0.0
    %1760 = vmatprep.subr.mxu0 0.0
    %1761 = vmatpush1.msra.mxu0 0.0
    %1762 = vmatprep.subr.mxu0 0.0
    %1763 = vmatpush1.msra.mxu0 0.0
    %1764 = vmatprep.subr.mxu0 0.0
    %1765 = vmatpush1.msra.mxu0 0.0
    %1766 = vmatprep.subr.mxu0 0.0
    %1767 = vmatpush1.msra.mxu0 0.0
    %1768 = vmatprep.subr.mxu0 0.0
    %1769 = vmatpush1.msra.mxu0 0.0
    %1770 = vmatprep.subr.mxu0 0.0
    %1771 = vmatpush1.msra.mxu0 0.0
    %1772 = vmatprep.subr.mxu0 0.0
    %1773 = vmatpush1.msra.mxu0 0.0
    %1774 = vmatprep.subr.mxu0 0.0
    %1775 = vmatpush1.msra.mxu0 0.0
    %1776 = vmatprep.subr.mxu0 0.0
    %1777 = vmatpush1.msra.mxu0 0.0
    %1778 = vmatprep.subr.mxu0 0.0
    %1779 = vmatpush1.msra.mxu0 0.0
    %1780 = vmatprep.subr.mxu0 0.0
    %1781 = vmatpush1.msra.mxu0 0.0
    %1782 = vmatprep.subr.mxu0 0.0
    %1783 = vmatpush1.msra.mxu0 0.0
    %1784 = vmatprep.subr.mxu0 0.0
    %1785 = vmatpush1.msra.mxu0 0.0
    %1786 = vmatprep.subr.mxu0 0.0
    %1787 = vmatpush1.msra.mxu0 0.0
    %1788 = vmatprep.subr.mxu0 0.0
    %1789 = vmatpush1.msra.mxu0 0.0
    %1790 = vmatprep.subr.mxu0 0.0
    %1791 = vmatpush1.msra.mxu0 0.0
    %1792 = vmatprep.subr.mxu0 0.0
    %1793 = vmatpush1.msra.mxu0 0.0
    %1794 = vmatprep.subr.mxu0 0.0
    %1795 = vmatpush1.msra.mxu0 0.0
    %1796 = vmatprep.subr.mxu0 0.0
    %1797 = vmatpush1.msra.mxu0 0.0
    %1798 = vmatprep.subr.mxu0 0.0
    %1799 = vmatpush1.msra.mxu0 0.0
    %1800 = vmatprep.subr.mxu0 0.0
    %1801 = vmatpush1.msra.mxu0 0.0
    %1802 = vmatprep.subr.mxu0 0.0
    %1803 = vmatpush1.msra.mxu0 0.0
    %1804 = vmatprep.mubr.f32.mxu0 0.0
    %1805 = vmatmul.mubr.f32.gmra.mrb[0].mxu0 %v1738
    %v1806 = vpop.f32.mrb[0].mxu0
    %v1807 = vadd.f32 0.0, %v1806
    %v1808 = vpop.f32.mrb[0].mxu0
    %1809 = vdwg.mxu0
    %1811 = vrot.lane.b32.xlu0 %v1661, 8
    %v1812 = vpop.permute.xlu0 %1811
    %1815 = vrot.lane.b32.xlu0 %v1734, 16
    %v1816 = vpop.permute.xlu0 %1815
    %1819 = vrot.lane.b32.xlu0 %v1807, 24
    %v1820 = vpop.permute.xlu0 %1819
    %v1822 = vsel %vm476, %v1588, %v1812
    %v1823 = vsel %vm1137, %v1822, %v1816
    %v1824 = vsel %vm1139, %v1823, %v1820
    %v1826 = vlaneseq
    %v1827 = vshrl.u32 %v1826, 7
    %v1828 = vsub.s32 0, %v1827
    %v1829 = vrot.slane %v183, %v1828
    %v1832 = vsel %vm208, %v1140, 0
    %v1835 = vsel %vm208, %v1824, 0
    %1837 = vmatprep.subr.mxu0 0.0
    %1838 = vmatpush1.msra.mxu0 %v179
    %1839 = vmatprep.subr.mxu0 0.0
    %1840 = vmatpush1.msra.mxu0 %v180
    %1841 = vmatprep.subr.mxu0 0.0
    %1842 = vmatpush1.msra.mxu0 %v181
    %1843 = vmatprep.subr.mxu0 0.0
    %1844 = vmatpush1.msra.mxu0 %v182
    %1845 = vmatprep.subr.mxu0 0.0
    %1846 = vmatpush1.msra.mxu0 0.0
    %1847 = vmatprep.subr.mxu0 0.0
    %1848 = vmatpush1.msra.mxu0 0.0
    %1849 = vmatprep.subr.mxu0 0.0
    %1850 = vmatpush1.msra.mxu0 0.0
    %1851 = vmatprep.subr.mxu0 0.0
    %1852 = vmatpush1.msra.mxu0 0.0
    %1853 = vmatprep.subr.mxu0 0.0
    %1854 = vmatpush1.msra.mxu0 0.0
    %1855 = vmatprep.subr.mxu0 0.0
    %1856 = vmatpush1.msra.mxu0 0.0
    %1857 = vmatprep.subr.mxu0 0.0
    %1858 = vmatpush1.msra.mxu0 0.0
    %1859 = vmatprep.subr.mxu0 0.0
    %1860 = vmatpush1.msra.mxu0 0.0
    %1861 = vmatprep.subr.mxu0 0.0
    %1862 = vmatpush1.msra.mxu0 0.0
    %1863 = vmatprep.subr.mxu0 0.0
    %1864 = vmatpush1.msra.mxu0 0.0
    %1865 = vmatprep.subr.mxu0 0.0
    %1866 = vmatpush1.msra.mxu0 0.0
    %1867 = vmatprep.subr.mxu0 0.0
    %1868 = vmatpush1.msra.mxu0 0.0
    %1869 = vmatprep.subr.mxu0 0.0
    %1870 = vmatpush1.msra.mxu0 0.0
    %1871 = vmatprep.subr.mxu0 0.0
    %1872 = vmatpush1.msra.mxu0 0.0
    %1873 = vmatprep.subr.mxu0 0.0
    %1874 = vmatpush1.msra.mxu0 0.0
    %1875 = vmatprep.subr.mxu0 0.0
    %1876 = vmatpush1.msra.mxu0 0.0
    %1877 = vmatprep.subr.mxu0 0.0
    %1878 = vmatpush1.msra.mxu0 0.0
    %1879 = vmatprep.subr.mxu0 0.0
    %1880 = vmatpush1.msra.mxu0 0.0
    %1881 = vmatprep.subr.mxu0 0.0
    %1882 = vmatpush1.msra.mxu0 0.0
    %1883 = vmatprep.subr.mxu0 0.0
    %1884 = vmatpush1.msra.mxu0 0.0
    %1885 = vmatprep.subr.mxu0 0.0
    %1886 = vmatpush1.msra.mxu0 0.0
    %1887 = vmatprep.subr.mxu0 0.0
    %1888 = vmatpush1.msra.mxu0 0.0
    %1889 = vmatprep.subr.mxu0 0.0
    %1890 = vmatpush1.msra.mxu0 0.0
    %1891 = vmatprep.subr.mxu0 0.0
    %1892 = vmatpush1.msra.mxu0 0.0
    %1893 = vmatprep.subr.mxu0 0.0
    %1894 = vmatpush1.msra.mxu0 0.0
    %1895 = vmatprep.subr.mxu0 0.0
    %1896 = vmatpush1.msra.mxu0 0.0
    %1897 = vmatprep.subr.mxu0 0.0
    %1898 = vmatpush1.msra.mxu0 0.0
    %1899 = vmatprep.subr.mxu0 0.0
    %1900 = vmatpush1.msra.mxu0 0.0
    %1901 = vmatprep.mubr.f32.mxu0 0.0
    %1902 = vmatmul.mubr.f32.gmra.mrb[0].mxu0 %v1832
    %v1903 = vpop.f32.mrb[0].mxu0
    %v1904 = vadd.f32 %v1829, %v1903
    %v1905 = vpop.f32.mrb[0].mxu0
    %1906 = vmatprep.mubr.f32.mxu0 0.0
    %1907 = vmatmul.mubr.f32.gmra.mrb[0].mxu0 %v1835
    %v1908 = vpop.f32.mrb[0].mxu0
    %v1909 = vadd.f32 %v1829, %v1908
    %v1910 = vpop.f32.mrb[0].mxu0
    %1911 = vdwg.mxu0
    %v1912 = vadd.f32 %v161, %v1904
    %v1913 = vadd.f32 %v162, %v1909
    %v1914 = vsel %vm208, %v1912, 0.0
    %1915 = vadd.xlane.f32.xlu0 %v1914
    %v1916 = vpop.xlane.xlu0 %1915
    %v1917 = vsel %vm208, %v1913, 0.0
    %1918 = vadd.xlane.f32.xlu0 %v1917
    %v1919 = vpop.xlane.xlu0 %1918
    %v1920 = vrcp.pop 32.0
    %v1921 = vmul.f32 %v1916, %v1920
    %v1922 = vmul.f32 %v1919, %v1920
    %v1923 = vsub.f32 %v1912, %v1921
    %v1924 = vsub.f32 %v1913, %v1922
    %v1925 = vmul.f32 %v1923, %v1923
    %v1926 = vmul.f32 %v1924, %v1924
    %v1927 = vsel %vm208, %v1925, 0.0
    %1928 = vadd.xlane.f32.xlu0 %v1927
    %v1929 = vpop.xlane.xlu0 %1928
    %v1930 = vsel %vm208, %v1926, 0.0
    %1931 = vadd.xlane.f32.xlu0 %v1930
    %v1932 = vpop.xlane.xlu0 %1931
    %v1933 = vmul.f32 %v1929, %v1920
    %v1934 = vmul.f32 %v1932, %v1920
    %v1935 = vadd.f32 %v1933, 1e-05
    %v1936 = vadd.f32 %v1934, 1e-05
    %v1937 = vrsqrt.pop %v1935
    %v1938 = vrsqrt.pop %v1936
    %v1939 = vmul.f32 %v1923, %v1937
    %v1940 = vmul.f32 %v1924, %v1938
    %v1942 = vlaneseq
    %v1943 = vshrl.u32 %v1942, 7
    %v1944 = vsub.s32 0, %v1943
    %v1945 = vrot.slane %v198, %v1944
    %v1947 = vmul.f32 %v1939, %v1945
    %v1948 = vmul.f32 %v1940, %v1945
    %v1950 = vlaneseq
    %v1951 = vshrl.u32 %v1950, 7
    %v1952 = vsub.s32 0, %v1951
    %v1953 = vrot.slane %v199, %v1952
    %v1955 = vadd.f32 %v1947, %v1953
    %v1956 = vadd.f32 %v1948, %v1953
    %v1958 = vlaneseq
    %v1959 = vshrl.u32 %v1958, 7
    %v1960 = vsub.s32 0, %v1959
    %v1961 = vrot.slane %v188, %v1960
    %v1964 = vsel %vm208, %v1955, 0
    %v1967 = vsel %vm208, %v1956, 0
    %1969 = vmatprep.subr.mxu0 0.0
    %1970 = vmatpush1.msra.mxu0 %v184
    %1971 = vmatprep.subr.mxu0 0.0
    %1972 = vmatpush1.msra.mxu0 %v185
    %1973 = vmatprep.subr.mxu0 0.0
    %1974 = vmatpush1.msra.mxu0 %v186
    %1975 = vmatprep.subr.mxu0 0.0
    %1976 = vmatpush1.msra.mxu0 %v187
    %1977 = vmatprep.subr.mxu0 0.0
    %1978 = vmatpush1.msra.mxu0 0.0
    %1979 = vmatprep.subr.mxu0 0.0
    %1980 = vmatpush1.msra.mxu0 0.0
    %1981 = vmatprep.subr.mxu0 0.0
    %1982 = vmatpush1.msra.mxu0 0.0
    %1983 = vmatprep.subr.mxu0 0.0
    %1984 = vmatpush1.msra.mxu0 0.0
    %1985 = vmatprep.subr.mxu0 0.0
    %1986 = vmatpush1.msra.mxu0 0.0
    %1987 = vmatprep.subr.mxu0 0.0
    %1988 = vmatpush1.msra.mxu0 0.0
    %1989 = vmatprep.subr.mxu0 0.0
    %1990 = vmatpush1.msra.mxu0 0.0
    %1991 = vmatprep.subr.mxu0 0.0
    %1992 = vmatpush1.msra.mxu0 0.0
    %1993 = vmatprep.subr.mxu0 0.0
    %1994 = vmatpush1.msra.mxu0 0.0
    %1995 = vmatprep.subr.mxu0 0.0
    %1996 = vmatpush1.msra.mxu0 0.0
    %1997 = vmatprep.subr.mxu0 0.0
    %1998 = vmatpush1.msra.mxu0 0.0
    %1999 = vmatprep.subr.mxu0 0.0
    %2000 = vmatpush1.msra.mxu0 0.0
    %2001 = vmatprep.subr.mxu0 0.0
    %2002 = vmatpush1.msra.mxu0 0.0
    %2003 = vmatprep.subr.mxu0 0.0
    %2004 = vmatpush1.msra.mxu0 0.0
    %2005 = vmatprep.subr.mxu0 0.0
    %2006 = vmatpush1.msra.mxu0 0.0
    %2007 = vmatprep.subr.mxu0 0.0
    %2008 = vmatpush1.msra.mxu0 0.0
    %2009 = vmatprep.subr.mxu0 0.0
    %2010 = vmatpush1.msra.mxu0 0.0
    %2011 = vmatprep.subr.mxu0 0.0
    %2012 = vmatpush1.msra.mxu0 0.0
    %2013 = vmatprep.subr.mxu0 0.0
    %2014 = vmatpush1.msra.mxu0 0.0
    %2015 = vmatprep.subr.mxu0 0.0
    %2016 = vmatpush1.msra.mxu0 0.0
    %2017 = vmatprep.subr.mxu0 0.0
    %2018 = vmatpush1.msra.mxu0 0.0
    %2019 = vmatprep.subr.mxu0 0.0
    %2020 = vmatpush1.msra.mxu0 0.0
    %2021 = vmatprep.subr.mxu0 0.0
    %2022 = vmatpush1.msra.mxu0 0.0
    %2023 = vmatprep.subr.mxu0 0.0
    %2024 = vmatpush1.msra.mxu0 0.0
    %2025 = vmatprep.subr.mxu0 0.0
    %2026 = vmatpush1.msra.mxu0 0.0
    %2027 = vmatprep.subr.mxu0 0.0
    %2028 = vmatpush1.msra.mxu0 0.0
    %2029 = vmatprep.subr.mxu0 0.0
    %2030 = vmatpush1.msra.mxu0 0.0
    %2031 = vmatprep.subr.mxu0 0.0
    %2032 = vmatpush1.msra.mxu0 0.0
    %2033 = vmatprep.mubr.f32.mxu0 0.0
    %2034 = vmatmul.mubr.f32.gmra.mrb[0].mxu0 %v1964
    %v2035 = vpop.f32.mrb[0].mxu0
    %v2036 = vadd.f32 %v1961, %v2035
    %v2037 = vpop.f32.mrb[0].mxu0
    %2038 = vmatprep.mubr.f32.mxu0 0.0
    %2039 = vmatmul.mubr.f32.gmra.mrb[0].mxu0 %v1967
    %v2040 = vpop.f32.mrb[0].mxu0
    %v2041 = vadd.f32 %v1961, %v2040
    %v2042 = vpop.f32.mrb[0].mxu0
    %2043 = vdwg.mxu0
    %v2044 = vmax.f32 %v2036, 0.0
    %v2045 = vmax.f32 %v2041, 0.0
    %v2047 = vlaneseq
    %v2048 = vshrl.u32 %v2047, 7
    %v2049 = vsub.s32 0, %v2048
    %v2050 = vrot.slane %v197, %v2049
    %vm2052 = vcmask 523264
    %v2054 = vsel %vm2052, %v2044, 0
    %v2057 = vsel %vm2052, %v2045, 0
    %2059 = vmatprep.subr.mxu0 0.0
    %2060 = vmatpush1.msra.mxu0 %v189
    %2061 = vmatprep.subr.mxu0 0.0
    %2062 = vmatpush1.msra.mxu0 %v190
    %2063 = vmatprep.subr.mxu0 0.0
    %2064 = vmatpush1.msra.mxu0 %v191
    %2065 = vmatprep.subr.mxu0 0.0
    %2066 = vmatpush1.msra.mxu0 %v192
    %2067 = vmatprep.subr.mxu0 0.0
    %2068 = vmatpush1.msra.mxu0 %v193
    %2069 = vmatprep.subr.mxu0 0.0
    %2070 = vmatpush1.msra.mxu0 %v194
    %2071 = vmatprep.subr.mxu0 0.0
    %2072 = vmatpush1.msra.mxu0 %v195
    %2073 = vmatprep.subr.mxu0 0.0
    %2074 = vmatpush1.msra.mxu0 %v196
    %2075 = vmatprep.subr.mxu0 0.0
    %2076 = vmatpush1.msra.mxu0 0.0
    %2077 = vmatprep.subr.mxu0 0.0
    %2078 = vmatpush1.msra.mxu0 0.0
    %2079 = vmatprep.subr.mxu0 0.0
    %2080 = vmatpush1.msra.mxu0 0.0
    %2081 = vmatprep.subr.mxu0 0.0
    %2082 = vmatpush1.msra.mxu0 0.0
    %2083 = vmatprep.subr.mxu0 0.0
    %2084 = vmatpush1.msra.mxu0 0.0
    %2085 = vmatprep.subr.mxu0 0.0
    %2086 = vmatpush1.msra.mxu0 0.0
    %2087 = vmatprep.subr.mxu0 0.0
    %2088 = vmatpush1.msra.mxu0 0.0
    %2089 = vmatprep.subr.mxu0 0.0
    %2090 = vmatpush1.msra.mxu0 0.0
    %2091 = vmatprep.subr.mxu0 0.0
    %2092 = vmatpush1.msra.mxu0 0.0
    %2093 = vmatprep.subr.mxu0 0.0
    %2094 = vmatpush1.msra.mxu0 0.0
    %2095 = vmatprep.subr.mxu0 0.0
    %2096 = vmatpush1.msra.mxu0 0.0
    %2097 = vmatprep.subr.mxu0 0.0
    %2098 = vmatpush1.msra.mxu0 0.0
    %2099 = vmatprep.subr.mxu0 0.0
    %2100 = vmatpush1.msra.mxu0 0.0
    %2101 = vmatprep.subr.mxu0 0.0
    %2102 = vmatpush1.msra.mxu0 0.0
    %2103 = vmatprep.subr.mxu0 0.0
    %2104 = vmatpush1.msra.mxu0 0.0
    %2105 = vmatprep.subr.mxu0 0.0
    %2106 = vmatpush1.msra.mxu0 0.0
    %2107 = vmatprep.subr.mxu0 0.0
    %2108 = vmatpush1.msra.mxu0 0.0
    %2109 = vmatprep.subr.mxu0 0.0
    %2110 = vmatpush1.msra.mxu0 0.0
    %2111 = vmatprep.subr.mxu0 0.0
    %2112 = vmatpush1.msra.mxu0 0.0
    %2113 = vmatprep.subr.mxu0 0.0
    %2114 = vmatpush1.msra.mxu0 0.0
    %2115 = vmatprep.subr.mxu0 0.0
    %2116 = vmatpush1.msra.mxu0 0.0
    %2117 = vmatprep.subr.mxu0 0.0
    %2118 = vmatpush1.msra.mxu0 0.0
    %2119 = vmatprep.subr.mxu0 0.0
    %2120 = vmatpush1.msra.mxu0 0.0
    %2121 = vmatprep.subr.mxu0 0.0
    %2122 = vmatpush1.msra.mxu0 0.0
    %2123 = vmatprep.mubr.f32.mxu0 0.0
    %2124 = vmatmul.mubr.f32.gmra.mrb[0].mxu0 %v2054
    %v2125 = vpop.f32.mrb[0].mxu0
    %v2126 = vadd.f32 %v2050, %v2125
    %v2127 = vpop.f32.mrb[0].mxu0
    %2128 = vmatprep.mubr.f32.mxu0 0.0
    %2129 = vmatmul.mubr.f32.gmra.mrb[0].mxu0 %v2057
    %v2130 = vpop.f32.mrb[0].mxu0
    %v2131 = vadd.f32 %v2050, %v2130
    %v2132 = vpop.f32.mrb[0].mxu0
    %2133 = vdwg.mxu0
    %v2134 = vadd.f32 %v1955, %v2126
    %v2135 = vadd.f32 %v1956, %v2131
    %v2136 = vsel %vm208, %v2134, 0.0
    %2137 = vadd.xlane.f32.xlu0 %v2136
    %v2138 = vpop.xlane.xlu0 %2137
    %v2139 = vsel %vm208, %v2135, 0.0
    %2140 = vadd.xlane.f32.xlu0 %v2139
    %v2141 = vpop.xlane.xlu0 %2140
    %v2142 = vmul.f32 %v2138, %v1920
    %v2143 = vmul.f32 %v2141, %v1920
    %v2144 = vsub.f32 %v2134, %v2142
    %v2145 = vsub.f32 %v2135, %v2143
    %v2146 = vmul.f32 %v2144, %v2144
    %v2147 = vmul.f32 %v2145, %v2145
    %v2148 = vsel %vm208, %v2146, 0.0
    %2149 = vadd.xlane.f32.xlu0 %v2148
    %v2150 = vpop.xlane.xlu0 %2149
    %v2151 = vsel %vm208, %v2147, 0.0
    %2152 = vadd.xlane.f32.xlu0 %v2151
    %v2153 = vpop.xlane.xlu0 %2152
    %v2154 = vmul.f32 %v2150, %v1920
    %v2155 = vmul.f32 %v2153, %v1920
    %v2156 = vadd.f32 %v2154, 1e-05
    %v2157 = vadd.f32 %v2155, 1e-05
    %v2158 = vrsqrt.pop %v2156
    %v2159 = vrsqrt.pop %v2157
    %v2160 = vmul.f32 %v2144, %v2158
    %v2161 = vmul.f32 %v2145, %v2159
    %v2163 = vlaneseq
    %v2164 = vshrl.u32 %v2163, 7
    %v2165 = vsub.s32 0, %v2164
    %v2166 = vrot.slane %v200, %v2165
    %v2168 = vmul.f32 %v2160, %v2166
    %v2169 = vmul.f32 %v2161, %v2166
    %v2171 = vlaneseq
    %v2172 = vshrl.u32 %v2171, 7
    %v2173 = vsub.s32 0, %v2172
    %v2174 = vrot.slane %v201, %v2173
    %v2176 = vadd.f32 %v2168, %v2174
    %v2177 = vadd.f32 %v2169, %v2174
    %s2178 = scalar_lea.vmem %s2, 32
    %v2179 = vld [vmem:[%s2178] sm:$0xff]
    %v2180 = vld [vmem:[%s2178 + $0x8] sm:$0xff]
    %v2181 = vld [vmem:[%s2178 + $0x10] sm:$0xff]
    %v2182 = vld [vmem:[%s2178 + $0x18] sm:$0xff]
    %s2183 = scalar_lea.vmem [#allocation5], 1
    %v2184 = vld [vmem:[%s2183] sm:$0x1]
    %s2185 = scalar_lea.vmem %s4, 32
    %v2186 = vld [vmem:[%s2185] sm:$0xff]
    %v2187 = vld [vmem:[%s2185 + $0x8] sm:$0xff]
    %v2188 = vld [vmem:[%s2185 + $0x10] sm:$0xff]
    %v2189 = vld [vmem:[%s2185 + $0x18] sm:$0xff]
    %s2190 = scalar_lea.vmem [#allocation7], 1
    %v2191 = vld [vmem:[%s2190] sm:$0x1]
    %s2192 = scalar_lea.vmem %s6, 32
    %v2193 = vld [vmem:[%s2192] sm:$0xff]
    %v2194 = vld [vmem:[%s2192 + $0x8] sm:$0xff]
    %v2195 = vld [vmem:[%s2192 + $0x10] sm:$0xff]
    %v2196 = vld [vmem:[%s2192 + $0x18] sm:$0xff]
    %s2197 = scalar_lea.vmem [#allocation8], 1
    %v2198 = vld [vmem:[%s2197] sm:$0x1]
    %s2199 = scalar_lea.vmem [#allocation10], 32
    %v2200 = vld [vmem:[%s2199] sm:$0xff]
    %v2201 = vld [vmem:[%s2199 + $0x8] sm:$0xff]
    %v2202 = vld [vmem:[%s2199 + $0x10] sm:$0xff]
    %v2203 = vld [vmem:[%s2199 + $0x18] sm:$0xff]
    %s2204 = scalar_lea.vmem [#allocation11], 1
    %v2205 = vld [vmem:[%s2204] sm:$0x1]
    %s2206 = scalar_lea.vmem [#allocation13], 32
    %v2207 = vld [vmem:[%s2206] sm:$0xff]
    %v2208 = vld [vmem:[%s2206 + $0x8] sm:$0xff]
    %v2209 = vld [vmem:[%s2206 + $0x10] sm:$0xff]
    %v2210 = vld [vmem:[%s2206 + $0x18] sm:$0xff]
    %s2211 = scalar_lea.vmem %s11, 1
    %v2212 = vld [vmem:[%s2211] sm:$0x1]
    %s2213 = scalar_lea.vmem %s12, 64
    %v2214 = vld [vmem:[%s2213] sm:$0xff]
    %v2215 = vld [vmem:[%s2213 + $0x8] sm:$0xff]
    %v2216 = vld [vmem:[%s2213 + $0x10] sm:$0xff]
    %v2217 = vld [vmem:[%s2213 + $0x18] sm:$0xff]
    %v2218 = vld [vmem:[%s2213 + $0x20] sm:$0xff]
    %v2219 = vld [vmem:[%s2213 + $0x28] sm:$0xff]
    %v2220 = vld [vmem:[%s2213 + $0x30] sm:$0xff]
    %v2221 = vld [vmem:[%s2213 + $0x38] sm:$0xff]
    %s2222 = scalar_lea.vmem %s13, 1
    %v2223 = vld [vmem:[%s2222] sm:$0x1]
    %s2224 = scalar_lea.vmem %s14, 1
    %v2225 = vld [vmem:[%s2224] sm:$0x1]
    %s2226 = scalar_lea.vmem %s15, 1
    %v2227 = vld [vmem:[%s2226] sm:$0x1]
    %s2228 = scalar_lea.vmem %s16, 1
    %v2229 = vld [vmem:[%s2228] sm:$0x1]
    %s2230 = scalar_lea.vmem %s17, 1
    %v2231 = vld [vmem:[%s2230] sm:$0x1]
    %v2233 = vlaneseq
    %v2234 = vshrl.u32 %v2233, 7
    %v2235 = vsub.s32 0, %v2234
    %v2236 = vrot.slane %v2184, %v2235
    %v2239 = vsel %vm208, %v2176, 0
    %v2242 = vsel %vm208, %v2177, 0
    %2244 = vmatprep.subr.mxu0 0.0
    %2245 = vmatpush1.msra.mxu0 %v2179
    %2246 = vmatprep.subr.mxu0 0.0
    %2247 = vmatpush1.msra.mxu0 %v2180
    %2248 = vmatprep.subr.mxu0 0.0
    %2249 = vmatpush1.msra.mxu0 %v2181
    %2250 = vmatprep.subr.mxu0 0.0
    %2251 = vmatpush1.msra.mxu0 %v2182
    %2252 = vmatprep.subr.mxu0 0.0
    %2253 = vmatpush1.msra.mxu0 0.0
    %2254 = vmatprep.subr.mxu0 0.0
    %2255 = vmatpush1.msra.mxu0 0.0
    %2256 = vmatprep.subr.mxu0 0.0
    %2257 = vmatpush1.msra.mxu0 0.0
    %2258 = vmatprep.subr.mxu0 0.0
    %2259 = vmatpush1.msra.mxu0 0.0
    %2260 = vmatprep.subr.mxu0 0.0
    %2261 = vmatpush1.msra.mxu0 0.0
    %2262 = vmatprep.subr.mxu0 0.0
    %2263 = vmatpush1.msra.mxu0 0.0
    %2264 = vmatprep.subr.mxu0 0.0
    %2265 = vmatpush1.msra.mxu0 0.0
    %2266 = vmatprep.subr.mxu0 0.0
    %2267 = vmatpush1.msra.mxu0 0.0
    %2268 = vmatprep.subr.mxu0 0.0
    %2269 = vmatpush1.msra.mxu0 0.0
    %2270 = vmatprep.subr.mxu0 0.0
    %2271 = vmatpush1.msra.mxu0 0.0
    %2272 = vmatprep.subr.mxu0 0.0
    %2273 = vmatpush1.msra.mxu0 0.0
    %2274 = vmatprep.subr.mxu0 0.0
    %2275 = vmatpush1.msra.mxu0 0.0
    %2276 = vmatprep.subr.mxu0 0.0
    %2277 = vmatpush1.msra.mxu0 0.0
    %2278 = vmatprep.subr.mxu0 0.0
    %2279 = vmatpush1.msra.mxu0 0.0
    %2280 = vmatprep.subr.mxu0 0.0
    %2281 = vmatpush1.msra.mxu0 0.0
    %2282 = vmatprep.subr.mxu0 0.0
    %2283 = vmatpush1.msra.mxu0 0.0
    %2284 = vmatprep.subr.mxu0 0.0
    %2285 = vmatpush1.msra.mxu0 0.0
    %2286 = vmatprep.subr.mxu0 0.0
    %2287 = vmatpush1.msra.mxu0 0.0
    %2288 = vmatprep.subr.mxu0 0.0
    %2289 = vmatpush1.msra.mxu0 0.0
    %2290 = vmatprep.subr.mxu0 0.0
    %2291 = vmatpush1.msra.mxu0 0.0
    %2292 = vmatprep.subr.mxu0 0.0
    %2293 = vmatpush1.msra.mxu0 0.0
    %2294 = vmatprep.subr.mxu0 0.0
    %2295 = vmatpush1.msra.mxu0 0.0
    %2296 = vmatprep.subr.mxu0 0.0
    %2297 = vmatpush1.msra.mxu0 0.0
    %2298 = vmatprep.subr.mxu0 0.0
    %2299 = vmatpush1.msra.mxu0 0.0
    %2300 = vmatprep.subr.mxu0 0.0
    %2301 = vmatpush1.msra.mxu0 0.0
    %2302 = vmatprep.subr.mxu0 0.0
    %2303 = vmatpush1.msra.mxu0 0.0
    %2304 = vmatprep.subr.mxu0 0.0
    %2305 = vmatpush1.msra.mxu0 0.0
    %2306 = vmatprep.subr.mxu0 0.0
    %2307 = vmatpush1.msra.mxu0 0.0
    %2308 = vmatprep.mubr.f32.mxu0 0.0
    %2309 = vmatmul.mubr.f32.gmra.mrb[0].mxu0 %v2239
    %v2310 = vpop.f32.mrb[0].mxu0
    %v2311 = vadd.f32 %v2236, %v2310
    %v2312 = vpop.f32.mrb[0].mxu0
    %2313 = vmatprep.mubr.f32.mxu0 0.0
    %2314 = vmatmul.mubr.f32.gmra.mrb[0].mxu0 %v2242
    %v2315 = vpop.f32.mrb[0].mxu0
    %v2316 = vadd.f32 %v2236, %v2315
    %v2317 = vpop.f32.mrb[0].mxu0
    %2318 = vdwg.mxu0
    %v2320 = vlaneseq
    %v2321 = vshrl.u32 %v2320, 7
    %v2322 = vsub.s32 0, %v2321
    %v2323 = vrot.slane %v2191, %v2322
    %2325 = vmatprep.subr.mxu0 0.0
    %2326 = vmatpush1.msra.mxu0 %v2186
    %2327 = vmatprep.subr.mxu0 0.0
    %2328 = vmatpush1.msra.mxu0 %v2187
    %2329 = vmatprep.subr.mxu0 0.0
    %2330 = vmatpush1.msra.mxu0 %v2188
    %2331 = vmatprep.subr.mxu0 0.0
    %2332 = vmatpush1.msra.mxu0 %v2189
    %2333 = vmatprep.subr.mxu0 0.0
    %2334 = vmatpush1.msra.mxu0 0.0
    %2335 = vmatprep.subr.mxu0 0.0
    %2336 = vmatpush1.msra.mxu0 0.0
    %2337 = vmatprep.subr.mxu0 0.0
    %2338 = vmatpush1.msra.mxu0 0.0
    %2339 = vmatprep.subr.mxu0 0.0
    %2340 = vmatpush1.msra.mxu0 0.0
    %2341 = vmatprep.subr.mxu0 0.0
    %2342 = vmatpush1.msra.mxu0 0.0
    %2343 = vmatprep.subr.mxu0 0.0
    %2344 = vmatpush1.msra.mxu0 0.0
    %2345 = vmatprep.subr.mxu0 0.0
    %2346 = vmatpush1.msra.mxu0 0.0
    %2347 = vmatprep.subr.mxu0 0.0
    %2348 = vmatpush1.msra.mxu0 0.0
    %2349 = vmatprep.subr.mxu0 0.0
    %2350 = vmatpush1.msra.mxu0 0.0
    %2351 = vmatprep.subr.mxu0 0.0
    %2352 = vmatpush1.msra.mxu0 0.0
    %2353 = vmatprep.subr.mxu0 0.0
    %2354 = vmatpush1.msra.mxu0 0.0
    %2355 = vmatprep.subr.mxu0 0.0
    %2356 = vmatpush1.msra.mxu0 0.0
    %2357 = vmatprep.subr.mxu0 0.0
    %2358 = vmatpush1.msra.mxu0 0.0
    %2359 = vmatprep.subr.mxu0 0.0
    %2360 = vmatpush1.msra.mxu0 0.0
    %2361 = vmatprep.subr.mxu0 0.0
    %2362 = vmatpush1.msra.mxu0 0.0
    %2363 = vmatprep.subr.mxu0 0.0
    %2364 = vmatpush1.msra.mxu0 0.0
    %2365 = vmatprep.subr.mxu0 0.0
    %2366 = vmatpush1.msra.mxu0 0.0
    %2367 = vmatprep.subr.mxu0 0.0
    %2368 = vmatpush1.msra.mxu0 0.0
    %2369 = vmatprep.subr.mxu0 0.0
    %2370 = vmatpush1.msra.mxu0 0.0
    %2371 = vmatprep.subr.mxu0 0.0
    %2372 = vmatpush1.msra.mxu0 0.0
    %2373 = vmatprep.subr.mxu0 0.0
    %2374 = vmatpush1.msra.mxu0 0.0
    %2375 = vmatprep.subr.mxu0 0.0
    %2376 = vmatpush1.msra.mxu0 0.0
    %2377 = vmatprep.subr.mxu0 0.0
    %2378 = vmatpush1.msra.mxu0 0.0
    %2379 = vmatprep.subr.mxu0 0.0
    %2380 = vmatpush1.msra.mxu0 0.0
    %2381 = vmatprep.subr.mxu0 0.0
    %2382 = vmatpush1.msra.mxu0 0.0
    %2383 = vmatprep.subr.mxu0 0.0
    %2384 = vmatpush1.msra.mxu0 0.0
    %2385 = vmatprep.subr.mxu0 0.0
    %2386 = vmatpush1.msra.mxu0 0.0
    %2387 = vmatprep.subr.mxu0 0.0
    %2388 = vmatpush1.msra.mxu0 0.0
    %2389 = vmatprep.mubr.f32.mxu0 0.0
    %2390 = vmatmul.mubr.f32.gmra.mrb[0].mxu0 %v2239
    %v2391 = vpop.f32.mrb[0].mxu0
    %v2392 = vadd.f32 %v2323, %v2391
    %v2393 = vpop.f32.mrb[0].mxu0
    %2394 = vmatprep.mubr.f32.mxu0 0.0
    %2395 = vmatmul.mubr.f32.gmra.mrb[0].mxu0 %v2242
    %v2396 = vpop.f32.mrb[0].mxu0
    %v2397 = vadd.f32 %v2323, %v2396
    %v2398 = vpop.f32.mrb[0].mxu0
    %2399 = vdwg.mxu0
    %v2401 = vlaneseq
    %v2402 = vshrl.u32 %v2401, 7
    %v2403 = vsub.s32 0, %v2402
    %v2404 = vrot.slane %v2198, %v2403
    %2406 = vmatprep.subr.mxu0 0.0
    %2407 = vmatpush1.msra.mxu0 %v2193
    %2408 = vmatprep.subr.mxu0 0.0
    %2409 = vmatpush1.msra.mxu0 %v2194
    %2410 = vmatprep.subr.mxu0 0.0
    %2411 = vmatpush1.msra.mxu0 %v2195
    %2412 = vmatprep.subr.mxu0 0.0
    %2413 = vmatpush1.msra.mxu0 %v2196
    %2414 = vmatprep.subr.mxu0 0.0
    %2415 = vmatpush1.msra.mxu0 0.0
    %2416 = vmatprep.subr.mxu0 0.0
    %2417 = vmatpush1.msra.mxu0 0.0
    %2418 = vmatprep.subr.mxu0 0.0
    %2419 = vmatpush1.msra.mxu0 0.0
    %2420 = vmatprep.subr.mxu0 0.0
    %2421 = vmatpush1.msra.mxu0 0.0
    %2422 = vmatprep.subr.mxu0 0.0
    %2423 = vmatpush1.msra.mxu0 0.0
    %2424 = vmatprep.subr.mxu0 0.0
    %2425 = vmatpush1.msra.mxu0 0.0
    %2426 = vmatprep.subr.mxu0 0.0
    %2427 = vmatpush1.msra.mxu0 0.0
    %2428 = vmatprep.subr.mxu0 0.0
    %2429 = vmatpush1.msra.mxu0 0.0
    %2430 = vmatprep.subr.mxu0 0.0
    %2431 = vmatpush1.msra.mxu0 0.0
    %2432 = vmatprep.subr.mxu0 0.0
    %2433 = vmatpush1.msra.mxu0 0.0
    %2434 = vmatprep.subr.mxu0 0.0
    %2435 = vmatpush1.msra.mxu0 0.0
    %2436 = vmatprep.subr.mxu0 0.0
    %2437 = vmatpush1.msra.mxu0 0.0
    %2438 = vmatprep.subr.mxu0 0.0
    %2439 = vmatpush1.msra.mxu0 0.0
    %2440 = vmatprep.subr.mxu0 0.0
    %2441 = vmatpush1.msra.mxu0 0.0
    %2442 = vmatprep.subr.mxu0 0.0
    %2443 = vmatpush1.msra.mxu0 0.0
    %2444 = vmatprep.subr.mxu0 0.0
    %2445 = vmatpush1.msra.mxu0 0.0
    %2446 = vmatprep.subr.mxu0 0.0
    %2447 = vmatpush1.msra.mxu0 0.0
    %2448 = vmatprep.subr.mxu0 0.0
    %2449 = vmatpush1.msra.mxu0 0.0
    %2450 = vmatprep.subr.mxu0 0.0
    %2451 = vmatpush1.msra.mxu0 0.0
    %2452 = vmatprep.subr.mxu0 0.0
    %2453 = vmatpush1.msra.mxu0 0.0
    %2454 = vmatprep.subr.mxu0 0.0
    %2455 = vmatpush1.msra.mxu0 0.0
    %2456 = vmatprep.subr.mxu0 0.0
    %2457 = vmatpush1.msra.mxu0 0.0
    %2458 = vmatprep.subr.mxu0 0.0
    %2459 = vmatpush1.msra.mxu0 0.0
    %2460 = vmatprep.subr.mxu0 0.0
    %2461 = vmatpush1.msra.mxu0 0.0
    %2462 = vmatprep.subr.mxu0 0.0
    %2463 = vmatpush1.msra.mxu0 0.0
    %2464 = vmatprep.subr.mxu0 0.0
    %2465 = vmatpush1.msra.mxu0 0.0
    %2466 = vmatprep.subr.mxu0 0.0
    %2467 = vmatpush1.msra.mxu0 0.0
    %2468 = vmatprep.subr.mxu0 0.0
    %2469 = vmatpush1.msra.mxu0 0.0
    %2470 = vmatprep.mubr.f32.mxu0 0.0
    %2471 = vmatmul.mubr.f32.gmra.mrb[0].mxu0 %v2239
    %v2472 = vpop.f32.mrb[0].mxu0
    %v2473 = vadd.f32 %v2404, %v2472
    %v2474 = vpop.f32.mrb[0].mxu0
    %2475 = vmatprep.mubr.f32.mxu0 0.0
    %2476 = vmatmul.mubr.f32.gmra.mrb[0].mxu0 %v2242
    %v2477 = vpop.f32.mrb[0].mxu0
    %v2478 = vadd.f32 %v2404, %v2477
    %v2479 = vpop.f32.mrb[0].mxu0
    %2480 = vdwg.mxu0
    %2482 = vrot.lane.b32.xlu0 %v2311, 120
    %v2483 = vpop.permute.xlu0 %2482
    %2484 = vrot.lane.b32.xlu0 %v2311, 112
    %v2485 = vpop.permute.xlu0 %2484
    %2486 = vrot.lane.b32.xlu0 %v2311, 104
    %v2487 = vpop.permute.xlu0 %2486
    %2489 = vrot.lane.b32.xlu0 %v2392, 120
    %v2490 = vpop.permute.xlu0 %2489
    %2491 = vrot.lane.b32.xlu0 %v2392, 112
    %v2492 = vpop.permute.xlu0 %2491
    %2493 = vrot.lane.b32.xlu0 %v2392, 104
    %v2494 = vpop.permute.xlu0 %2493
    %2496 = vrot.lane.b32.xlu0 %v2473, 120
    %v2497 = vpop.permute.xlu0 %2496
    %2499 = vrot.lane.b32.xlu0 %v2473, 112
    %v2500 = vpop.permute.xlu0 %2499
    %2502 = vrot.lane.b32.xlu0 %v2473, 104
    %v2503 = vpop.permute.xlu0 %2502
    %v2505 = vsel %vm476, %v2311, 0
    %v2507 = vsel %vm476, %v2392, 0
    %2509 = vmatprep.subr.mxu0 0.0
    %2510 = vmatpush1.xpose.msra.mxu0 %v2507
    %2511 = vmatprep.subr.mxu0 0.0
    %2512 = vmatpush1.xpose.msra.mxu0 0.0
    %2513 = vmatprep.subr.mxu0 0.0
    %2514 = vmatpush1.xpose.msra.mxu0 0.0
    %2515 = vmatprep.subr.mxu0 0.0
    %2516 = vmatpush1.xpose.msra.mxu0 0.0
    %2517 = vmatprep.subr.mxu0 0.0
    %2518 = vmatpush1.xpose.msra.mxu0 0.0
    %2519 = vmatprep.subr.mxu0 0.0
    %2520 = vmatpush1.xpose.msra.mxu0 0.0
    %2521 = vmatprep.subr.mxu0 0.0
    %2522 = vmatpush1.xpose.msra.mxu0 0.0
    %2523 = vmatprep.subr.mxu0 0.0
    %2524 = vmatpush1.xpose.msra.mxu0 0.0
    %2525 = vmatprep.subr.mxu0 0.0
    %2526 = vmatpush1.xpose.msra.mxu0 0.0
    %2527 = vmatprep.subr.mxu0 0.0
    %2528 = vmatpush1.xpose.msra.mxu0 0.0
    %2529 = vmatprep.subr.mxu0 0.0
    %2530 = vmatpush1.xpose.msra.mxu0 0.0
    %2531 = vmatprep.subr.mxu0 0.0
    %2532 = vmatpush1.xpose.msra.mxu0 0.0
    %2533 = vmatprep.subr.mxu0 0.0
    %2534 = vmatpush1.xpose.msra.mxu0 0.0
    %2535 = vmatprep.subr.mxu0 0.0
    %2536 = vmatpush1.xpose.msra.mxu0 0.0
    %2537 = vmatprep.subr.mxu0 0.0
    %2538 = vmatpush1.xpose.msra.mxu0 0.0
    %2539 = vmatprep.subr.mxu0 0.0
    %2540 = vmatpush1.xpose.msra.mxu0 0.0
    %2541 = vmatprep.subr.mxu0 0.0
    %2542 = vmatpush1.xpose.msra.mxu0 0.0
    %2543 = vmatprep.subr.mxu0 0.0
    %2544 = vmatpush1.xpose.msra.mxu0 0.0
    %2545 = vmatprep.subr.mxu0 0.0
    %2546 = vmatpush1.xpose.msra.mxu0 0.0
    %2547 = vmatprep.subr.mxu0 0.0
    %2548 = vmatpush1.xpose.msra.mxu0 0.0
    %2549 = vmatprep.subr.mxu0 0.0
    %2550 = vmatpush1.xpose.msra.mxu0 0.0
    %2551 = vmatprep.subr.mxu0 0.0
    %2552 = vmatpush1.xpose.msra.mxu0 0.0
    %2553 = vmatprep.subr.mxu0 0.0
    %2554 = vmatpush1.xpose.msra.mxu0 0.0
    %2555 = vmatprep.subr.mxu0 0.0
    %2556 = vmatpush1.xpose.msra.mxu0 0.0
    %2557 = vmatprep.subr.mxu0 0.0
    %2558 = vmatpush1.xpose.msra.mxu0 0.0
    %2559 = vmatprep.subr.mxu0 0.0
    %2560 = vmatpush1.xpose.msra.mxu0 0.0
    %2561 = vmatprep.subr.mxu0 0.0
    %2562 = vmatpush1.xpose.msra.mxu0 0.0
    %2563 = vmatprep.subr.mxu0 0.0
    %2564 = vmatpush1.xpose.msra.mxu0 0.0
    %2565 = vmatprep.subr.mxu0 0.0
    %2566 = vmatpush1.xpose.msra.mxu0 0.0
    %2567 = vmatprep.subr.mxu0 0.0
    %2568 = vmatpush1.xpose.msra.mxu0 0.0
    %2569 = vmatprep.subr.mxu0 0.0
    %2570 = vmatpush1.xpose.msra.mxu0 0.0
    %2571 = vmatprep.subr.mxu0 0.0
    %2572 = vmatpush1.xpose.msra.mxu0 0.0
    %2573 = vmatprep.mubr.f32.mxu0 0.0
    %2574 = vmatmul.mubr.f32.gmra.mrb[0].mxu0 %v2505
    %v2575 = vpop.f32.mrb[0].mxu0
    %v2576 = vadd.f32 0.0, %v2575
    %v2577 = vpop.f32.mrb[0].mxu0
    %2578 = vdwg.mxu0
    %v2579 = vsel %vm476, %v2483, 0
    %v2581 = vsel %vm476, %v2490, 0
    %2583 = vmatprep.subr.mxu0 0.0
    %2584 = vmatpush1.xpose.msra.mxu0 %v2581
    %2585 = vmatprep.subr.mxu0 0.0
    %2586 = vmatpush1.xpose.msra.mxu0 0.0
    %2587 = vmatprep.subr.mxu0 0.0
    %2588 = vmatpush1.xpose.msra.mxu0 0.0
    %2589 = vmatprep.subr.mxu0 0.0
    %2590 = vmatpush1.xpose.msra.mxu0 0.0
    %2591 = vmatprep.subr.mxu0 0.0
    %2592 = vmatpush1.xpose.msra.mxu0 0.0
    %2593 = vmatprep.subr.mxu0 0.0
    %2594 = vmatpush1.xpose.msra.mxu0 0.0
    %2595 = vmatprep.subr.mxu0 0.0
    %2596 = vmatpush1.xpose.msra.mxu0 0.0
    %2597 = vmatprep.subr.mxu0 0.0
    %2598 = vmatpush1.xpose.msra.mxu0 0.0
    %2599 = vmatprep.subr.mxu0 0.0
    %2600 = vmatpush1.xpose.msra.mxu0 0.0
    %2601 = vmatprep.subr.mxu0 0.0
    %2602 = vmatpush1.xpose.msra.mxu0 0.0
    %2603 = vmatprep.subr.mxu0 0.0
    %2604 = vmatpush1.xpose.msra.mxu0 0.0
    %2605 = vmatprep.subr.mxu0 0.0
    %2606 = vmatpush1.xpose.msra.mxu0 0.0
    %2607 = vmatprep.subr.mxu0 0.0
    %2608 = vmatpush1.xpose.msra.mxu0 0.0
    %2609 = vmatprep.subr.mxu0 0.0
    %2610 = vmatpush1.xpose.msra.mxu0 0.0
    %2611 = vmatprep.subr.mxu0 0.0
    %2612 = vmatpush1.xpose.msra.mxu0 0.0
    %2613 = vmatprep.subr.mxu0 0.0
    %2614 = vmatpush1.xpose.msra.mxu0 0.0
    %2615 = vmatprep.subr.mxu0 0.0
    %2616 = vmatpush1.xpose.msra.mxu0 0.0
    %2617 = vmatprep.subr.mxu0 0.0
    %2618 = vmatpush1.xpose.msra.mxu0 0.0
    %2619 = vmatprep.subr.mxu0 0.0
    %2620 = vmatpush1.xpose.msra.mxu0 0.0
    %2621 = vmatprep.subr.mxu0 0.0
    %2622 = vmatpush1.xpose.msra.mxu0 0.0
    %2623 = vmatprep.subr.mxu0 0.0
    %2624 = vmatpush1.xpose.msra.mxu0 0.0
    %2625 = vmatprep.subr.mxu0 0.0
    %2626 = vmatpush1.xpose.msra.mxu0 0.0
    %2627 = vmatprep.subr.mxu0 0.0
    %2628 = vmatpush1.xpose.msra.mxu0 0.0
    %2629 = vmatprep.subr.mxu0 0.0
    %2630 = vmatpush1.xpose.msra.mxu0 0.0
    %2631 = vmatprep.subr.mxu0 0.0
    %2632 = vmatpush1.xpose.msra.mxu0 0.0
    %2633 = vmatprep.subr.mxu0 0.0
    %2634 = vmatpush1.xpose.msra.mxu0 0.0
    %2635 = vmatprep.subr.mxu0 0.0
    %2636 = vmatpush1.xpose.msra.mxu0 0.0
    %2637 = vmatprep.subr.mxu0 0.0
    %2638 = vmatpush1.xpose.msra.mxu0 0.0
    %2639 = vmatprep.subr.mxu0 0.0
    %2640 = vmatpush1.xpose.msra.mxu0 0.0
    %2641 = vmatprep.subr.mxu0 0.0
    %2642 = vmatpush1.xpose.msra.mxu0 0.0
    %2643 = vmatprep.subr.mxu0 0.0
    %2644 = vmatpush1.xpose.msra.mxu0 0.0
    %2645 = vmatprep.subr.mxu0 0.0
    %2646 = vmatpush1.xpose.msra.mxu0 0.0
    %2647 = vmatprep.mubr.f32.mxu0 0.0
    %2648 = vmatmul.mubr.f32.gmra.mrb[0].mxu0 %v2579
    %v2649 = vpop.f32.mrb[0].mxu0
    %v2650 = vadd.f32 0.0, %v2649
    %v2651 = vpop.f32.mrb[0].mxu0
    %2652 = vdwg.mxu0
    %v2653 = vsel %vm476, %v2485, 0
    %v2655 = vsel %vm476, %v2492, 0
    %2657 = vmatprep.subr.mxu0 0.0
    %2658 = vmatpush1.xpose.msra.mxu0 %v2655
    %2659 = vmatprep.subr.mxu0 0.0
    %2660 = vmatpush1.xpose.msra.mxu0 0.0
    %2661 = vmatprep.subr.mxu0 0.0
    %2662 = vmatpush1.xpose.msra.mxu0 0.0
    %2663 = vmatprep.subr.mxu0 0.0
    %2664 = vmatpush1.xpose.msra.mxu0 0.0
    %2665 = vmatprep.subr.mxu0 0.0
    %2666 = vmatpush1.xpose.msra.mxu0 0.0
    %2667 = vmatprep.subr.mxu0 0.0
    %2668 = vmatpush1.xpose.msra.mxu0 0.0
    %2669 = vmatprep.subr.mxu0 0.0
    %2670 = vmatpush1.xpose.msra.mxu0 0.0
    %2671 = vmatprep.subr.mxu0 0.0
    %2672 = vmatpush1.xpose.msra.mxu0 0.0
    %2673 = vmatprep.subr.mxu0 0.0
    %2674 = vmatpush1.xpose.msra.mxu0 0.0
    %2675 = vmatprep.subr.mxu0 0.0
    %2676 = vmatpush1.xpose.msra.mxu0 0.0
    %2677 = vmatprep.subr.mxu0 0.0
    %2678 = vmatpush1.xpose.msra.mxu0 0.0
    %2679 = vmatprep.subr.mxu0 0.0
    %2680 = vmatpush1.xpose.msra.mxu0 0.0
    %2681 = vmatprep.subr.mxu0 0.0
    %2682 = vmatpush1.xpose.msra.mxu0 0.0
    %2683 = vmatprep.subr.mxu0 0.0
    %2684 = vmatpush1.xpose.msra.mxu0 0.0
    %2685 = vmatprep.subr.mxu0 0.0
    %2686 = vmatpush1.xpose.msra.mxu0 0.0
    %2687 = vmatprep.subr.mxu0 0.0
    %2688 = vmatpush1.xpose.msra.mxu0 0.0
    %2689 = vmatprep.subr.mxu0 0.0
    %2690 = vmatpush1.xpose.msra.mxu0 0.0
    %2691 = vmatprep.subr.mxu0 0.0
    %2692 = vmatpush1.xpose.msra.mxu0 0.0
    %2693 = vmatprep.subr.mxu0 0.0
    %2694 = vmatpush1.xpose.msra.mxu0 0.0
    %2695 = vmatprep.subr.mxu0 0.0
    %2696 = vmatpush1.xpose.msra.mxu0 0.0
    %2697 = vmatprep.subr.mxu0 0.0
    %2698 = vmatpush1.xpose.msra.mxu0 0.0
    %2699 = vmatprep.subr.mxu0 0.0
    %2700 = vmatpush1.xpose.msra.mxu0 0.0
    %2701 = vmatprep.subr.mxu0 0.0
    %2702 = vmatpush1.xpose.msra.mxu0 0.0
    %2703 = vmatprep.subr.mxu0 0.0
    %2704 = vmatpush1.xpose.msra.mxu0 0.0
    %2705 = vmatprep.subr.mxu0 0.0
    %2706 = vmatpush1.xpose.msra.mxu0 0.0
    %2707 = vmatprep.subr.mxu0 0.0
    %2708 = vmatpush1.xpose.msra.mxu0 0.0
    %2709 = vmatprep.subr.mxu0 0.0
    %2710 = vmatpush1.xpose.msra.mxu0 0.0
    %2711 = vmatprep.subr.mxu0 0.0
    %2712 = vmatpush1.xpose.msra.mxu0 0.0
    %2713 = vmatprep.subr.mxu0 0.0
    %2714 = vmatpush1.xpose.msra.mxu0 0.0
    %2715 = vmatprep.subr.mxu0 0.0
    %2716 = vmatpush1.xpose.msra.mxu0 0.0
    %2717 = vmatprep.subr.mxu0 0.0
    %2718 = vmatpush1.xpose.msra.mxu0 0.0
    %2719 = vmatprep.subr.mxu0 0.0
    %2720 = vmatpush1.xpose.msra.mxu0 0.0
    %2721 = vmatprep.mubr.f32.mxu0 0.0
    %2722 = vmatmul.mubr.f32.gmra.mrb[0].mxu0 %v2653
    %v2723 = vpop.f32.mrb[0].mxu0
    %v2724 = vadd.f32 0.0, %v2723
    %v2725 = vpop.f32.mrb[0].mxu0
    %2726 = vdwg.mxu0
    %v2727 = vsel %vm476, %v2487, 0
    %v2729 = vsel %vm476, %v2494, 0
    %2731 = vmatprep.subr.mxu0 0.0
    %2732 = vmatpush1.xpose.msra.mxu0 %v2729
    %2733 = vmatprep.subr.mxu0 0.0
    %2734 = vmatpush1.xpose.msra.mxu0 0.0
    %2735 = vmatprep.subr.mxu0 0.0
    %2736 = vmatpush1.xpose.msra.mxu0 0.0
    %2737 = vmatprep.subr.mxu0 0.0
    %2738 = vmatpush1.xpose.msra.mxu0 0.0
    %2739 = vmatprep.subr.mxu0 0.0
    %2740 = vmatpush1.xpose.msra.mxu0 0.0
    %2741 = vmatprep.subr.mxu0 0.0
    %2742 = vmatpush1.xpose.msra.mxu0 0.0
    %2743 = vmatprep.subr.mxu0 0.0
    %2744 = vmatpush1.xpose.msra.mxu0 0.0
    %2745 = vmatprep.subr.mxu0 0.0
    %2746 = vmatpush1.xpose.msra.mxu0 0.0
    %2747 = vmatprep.subr.mxu0 0.0
    %2748 = vmatpush1.xpose.msra.mxu0 0.0
    %2749 = vmatprep.subr.mxu0 0.0
    %2750 = vmatpush1.xpose.msra.mxu0 0.0
    %2751 = vmatprep.subr.mxu0 0.0
    %2752 = vmatpush1.xpose.msra.mxu0 0.0
    %2753 = vmatprep.subr.mxu0 0.0
    %2754 = vmatpush1.xpose.msra.mxu0 0.0
    %2755 = vmatprep.subr.mxu0 0.0
    %2756 = vmatpush1.xpose.msra.mxu0 0.0
    %2757 = vmatprep.subr.mxu0 0.0
    %2758 = vmatpush1.xpose.msra.mxu0 0.0
    %2759 = vmatprep.subr.mxu0 0.0
    %2760 = vmatpush1.xpose.msra.mxu0 0.0
    %2761 = vmatprep.subr.mxu0 0.0
    %2762 = vmatpush1.xpose.msra.mxu0 0.0
    %2763 = vmatprep.subr.mxu0 0.0
    %2764 = vmatpush1.xpose.msra.mxu0 0.0
    %2765 = vmatprep.subr.mxu0 0.0
    %2766 = vmatpush1.xpose.msra.mxu0 0.0
    %2767 = vmatprep.subr.mxu0 0.0
    %2768 = vmatpush1.xpose.msra.mxu0 0.0
    %2769 = vmatprep.subr.mxu0 0.0
    %2770 = vmatpush1.xpose.msra.mxu0 0.0
    %2771 = vmatprep.subr.mxu0 0.0
    %2772 = vmatpush1.xpose.msra.mxu0 0.0
    %2773 = vmatprep.subr.mxu0 0.0
    %2774 = vmatpush1.xpose.msra.mxu0 0.0
    %2775 = vmatprep.subr.mxu0 0.0
    %2776 = vmatpush1.xpose.msra.mxu0 0.0
    %2777 = vmatprep.subr.mxu0 0.0
    %2778 = vmatpush1.xpose.msra.mxu0 0.0
    %2779 = vmatprep.subr.mxu0 0.0
    %2780 = vmatpush1.xpose.msra.mxu0 0.0
    %2781 = vmatprep.subr.mxu0 0.0
    %2782 = vmatpush1.xpose.msra.mxu0 0.0
    %2783 = vmatprep.subr.mxu0 0.0
    %2784 = vmatpush1.xpose.msra.mxu0 0.0
    %2785 = vmatprep.subr.mxu0 0.0
    %2786 = vmatpush1.xpose.msra.mxu0 0.0
    %2787 = vmatprep.subr.mxu0 0.0
    %2788 = vmatpush1.xpose.msra.mxu0 0.0
    %2789 = vmatprep.subr.mxu0 0.0
    %2790 = vmatpush1.xpose.msra.mxu0 0.0
    %2791 = vmatprep.subr.mxu0 0.0
    %2792 = vmatpush1.xpose.msra.mxu0 0.0
    %2793 = vmatprep.subr.mxu0 0.0
    %2794 = vmatpush1.xpose.msra.mxu0 0.0
    %2795 = vmatprep.mubr.f32.mxu0 0.0
    %2796 = vmatmul.mubr.f32.gmra.mrb[0].mxu0 %v2727
    %v2797 = vpop.f32.mrb[0].mxu0
    %v2798 = vadd.f32 0.0, %v2797
    %v2799 = vpop.f32.mrb[0].mxu0
    %2800 = vdwg.mxu0
    %v2801 = vmul.f32 %v2576, 0.35355338
    %v2802 = vmul.f32 %v2650, 0.35355338
    %v2803 = vmul.f32 %v2724, 0.35355338
    %v2804 = vmul.f32 %v2798, 0.35355338
    %v2805 = vsel %vm783, %v2801, -1e+09
    %v2806 = vsel %vm783, %v2802, -1e+09
    %v2807 = vsel %vm783, %v2803, -1e+09
    %v2808 = vsel %vm783, %v2804, -1e+09
    %v2809 = vsel %vm476, %v2805, -inf
    %2810 = vmax.xlane.f32.xlu0 %v2809
    %v2811 = vpop.xlane.xlu0 %2810
    %v2812 = vsel %vm476, %v2806, -inf
    %2813 = vmax.xlane.f32.xlu0 %v2812
    %v2814 = vpop.xlane.xlu0 %2813
    %v2815 = vsel %vm476, %v2807, -inf
    %2816 = vmax.xlane.f32.xlu0 %v2815
    %v2817 = vpop.xlane.xlu0 %2816
    %v2818 = vsel %vm476, %v2808, -inf
    %2819 = vmax.xlane.f32.xlu0 %v2818
    %v2820 = vpop.xlane.xlu0 %2819
    %v2821 = vsub.f32 %v2805, %v2811
    %v2822 = vsub.f32 %v2806, %v2814
    %v2823 = vsub.f32 %v2807, %v2817
    %v2824 = vsub.f32 %v2808, %v2820
    %v2825 = vmul.f32 %v2821, 1.442695
    %v2826 = vpow.pop %v2825
    %v2827 = vmul.f32 %v2822, 1.442695
    %v2828 = vpow.pop %v2827
    %v2829 = vmul.f32 %v2823, 1.442695
    %v2830 = vpow.pop %v2829
    %v2831 = vmul.f32 %v2824, 1.442695
    %v2832 = vpow.pop %v2831
    %v2833 = vsel %vm476, %v2826, 0.0
    %2834 = vadd.xlane.f32.xlu0 %v2833
    %v2835 = vpop.xlane.xlu0 %2834
    %v2836 = vsel %vm476, %v2828, 0.0
    %2837 = vadd.xlane.f32.xlu0 %v2836
    %v2838 = vpop.xlane.xlu0 %2837
    %v2839 = vsel %vm476, %v2830, 0.0
    %2840 = vadd.xlane.f32.xlu0 %v2839
    %v2841 = vpop.xlane.xlu0 %2840
    %v2842 = vsel %vm476, %v2832, 0.0
    %2843 = vadd.xlane.f32.xlu0 %v2842
    %v2844 = vpop.xlane.xlu0 %2843
    %v2845 = vrcp.pop %v2835
    %v2846 = vrcp.pop %v2838
    %v2847 = vrcp.pop %v2841
    %v2848 = vrcp.pop %v2844
    %v2849 = vmul.f32 %v2826, %v2845
    %v2850 = vmul.f32 %v2828, %v2846
    %v2851 = vmul.f32 %v2830, %v2847
    %v2852 = vmul.f32 %v2832, %v2848
    %v2854 = vsel %vm476, %v2849, 0
    %2856 = vmatprep.subr.mxu0 0.0
    %2857 = vmatpush1.msra.mxu0 %v2473
    %2858 = vmatprep.subr.mxu0 0.0
    %2859 = vmatpush1.msra.mxu0 0.0
    %2860 = vmatprep.subr.mxu0 0.0
    %2861 = vmatpush1.msra.mxu0 0.0
    %2862 = vmatprep.subr.mxu0 0.0
    %2863 = vmatpush1.msra.mxu0 0.0
    %2864 = vmatprep.subr.mxu0 0.0
    %2865 = vmatpush1.msra.mxu0 0.0
    %2866 = vmatprep.subr.mxu0 0.0
    %2867 = vmatpush1.msra.mxu0 0.0
    %2868 = vmatprep.subr.mxu0 0.0
    %2869 = vmatpush1.msra.mxu0 0.0
    %2870 = vmatprep.subr.mxu0 0.0
    %2871 = vmatpush1.msra.mxu0 0.0
    %2872 = vmatprep.subr.mxu0 0.0
    %2873 = vmatpush1.msra.mxu0 0.0
    %2874 = vmatprep.subr.mxu0 0.0
    %2875 = vmatpush1.msra.mxu0 0.0
    %2876 = vmatprep.subr.mxu0 0.0
    %2877 = vmatpush1.msra.mxu0 0.0
    %2878 = vmatprep.subr.mxu0 0.0
    %2879 = vmatpush1.msra.mxu0 0.0
    %2880 = vmatprep.subr.mxu0 0.0
    %2881 = vmatpush1.msra.mxu0 0.0
    %2882 = vmatprep.subr.mxu0 0.0
    %2883 = vmatpush1.msra.mxu0 0.0
    %2884 = vmatprep.subr.mxu0 0.0
    %2885 = vmatpush1.msra.mxu0 0.0
    %2886 = vmatprep.subr.mxu0 0.0
    %2887 = vmatpush1.msra.mxu0 0.0
    %2888 = vmatprep.subr.mxu0 0.0
    %2889 = vmatpush1.msra.mxu0 0.0
    %2890 = vmatprep.subr.mxu0 0.0
    %2891 = vmatpush1.msra.mxu0 0.0
    %2892 = vmatprep.subr.mxu0 0.0
    %2893 = vmatpush1.msra.mxu0 0.0
    %2894 = vmatprep.subr.mxu0 0.0
    %2895 = vmatpush1.msra.mxu0 0.0
    %2896 = vmatprep.subr.mxu0 0.0
    %2897 = vmatpush1.msra.mxu0 0.0
    %2898 = vmatprep.subr.mxu0 0.0
    %2899 = vmatpush1.msra.mxu0 0.0
    %2900 = vmatprep.subr.mxu0 0.0
    %2901 = vmatpush1.msra.mxu0 0.0
    %2902 = vmatprep.subr.mxu0 0.0
    %2903 = vmatpush1.msra.mxu0 0.0
    %2904 = vmatprep.subr.mxu0 0.0
    %2905 = vmatpush1.msra.mxu0 0.0
    %2906 = vmatprep.subr.mxu0 0.0
    %2907 = vmatpush1.msra.mxu0 0.0
    %2908 = vmatprep.subr.mxu0 0.0
    %2909 = vmatpush1.msra.mxu0 0.0
    %2910 = vmatprep.subr.mxu0 0.0
    %2911 = vmatpush1.msra.mxu0 0.0
    %2912 = vmatprep.subr.mxu0 0.0
    %2913 = vmatpush1.msra.mxu0 0.0
    %2914 = vmatprep.subr.mxu0 0.0
    %2915 = vmatpush1.msra.mxu0 0.0
    %2916 = vmatprep.subr.mxu0 0.0
    %2917 = vmatpush1.msra.mxu0 0.0
    %2918 = vmatprep.subr.mxu0 0.0
    %2919 = vmatpush1.msra.mxu0 0.0
    %2920 = vmatprep.mubr.f32.mxu0 0.0
    %2921 = vmatmul.mubr.f32.gmra.mrb[0].mxu0 %v2854
    %v2922 = vpop.f32.mrb[0].mxu0
    %v2923 = vadd.f32 0.0, %v2922
    %v2924 = vpop.f32.mrb[0].mxu0
    %2925 = vdwg.mxu0
    %v2927 = vsel %vm476, %v2850, 0
    %2929 = vmatprep.subr.mxu0 0.0
    %2930 = vmatpush1.msra.mxu0 %v2497
    %2931 = vmatprep.subr.mxu0 0.0
    %2932 = vmatpush1.msra.mxu0 0.0
    %2933 = vmatprep.subr.mxu0 0.0
    %2934 = vmatpush1.msra.mxu0 0.0
    %2935 = vmatprep.subr.mxu0 0.0
    %2936 = vmatpush1.msra.mxu0 0.0
    %2937 = vmatprep.subr.mxu0 0.0
    %2938 = vmatpush1.msra.mxu0 0.0
    %2939 = vmatprep.subr.mxu0 0.0
    %2940 = vmatpush1.msra.mxu0 0.0
    %2941 = vmatprep.subr.mxu0 0.0
    %2942 = vmatpush1.msra.mxu0 0.0
    %2943 = vmatprep.subr.mxu0 0.0
    %2944 = vmatpush1.msra.mxu0 0.0
    %2945 = vmatprep.subr.mxu0 0.0
    %2946 = vmatpush1.msra.mxu0 0.0
    %2947 = vmatprep.subr.mxu0 0.0
    %2948 = vmatpush1.msra.mxu0 0.0
    %2949 = vmatprep.subr.mxu0 0.0
    %2950 = vmatpush1.msra.mxu0 0.0
    %2951 = vmatprep.subr.mxu0 0.0
    %2952 = vmatpush1.msra.mxu0 0.0
    %2953 = vmatprep.subr.mxu0 0.0
    %2954 = vmatpush1.msra.mxu0 0.0
    %2955 = vmatprep.subr.mxu0 0.0
    %2956 = vmatpush1.msra.mxu0 0.0
    %2957 = vmatprep.subr.mxu0 0.0
    %2958 = vmatpush1.msra.mxu0 0.0
    %2959 = vmatprep.subr.mxu0 0.0
    %2960 = vmatpush1.msra.mxu0 0.0
    %2961 = vmatprep.subr.mxu0 0.0
    %2962 = vmatpush1.msra.mxu0 0.0
    %2963 = vmatprep.subr.mxu0 0.0
    %2964 = vmatpush1.msra.mxu0 0.0
    %2965 = vmatprep.subr.mxu0 0.0
    %2966 = vmatpush1.msra.mxu0 0.0
    %2967 = vmatprep.subr.mxu0 0.0
    %2968 = vmatpush1.msra.mxu0 0.0
    %2969 = vmatprep.subr.mxu0 0.0
    %2970 = vmatpush1.msra.mxu0 0.0
    %2971 = vmatprep.subr.mxu0 0.0
    %2972 = vmatpush1.msra.mxu0 0.0
    %2973 = vmatprep.subr.mxu0 0.0
    %2974 = vmatpush1.msra.mxu0 0.0
    %2975 = vmatprep.subr.mxu0 0.0
    %2976 = vmatpush1.msra.mxu0 0.0
    %2977 = vmatprep.subr.mxu0 0.0
    %2978 = vmatpush1.msra.mxu0 0.0
    %2979 = vmatprep.subr.mxu0 0.0
    %2980 = vmatpush1.msra.mxu0 0.0
    %2981 = vmatprep.subr.mxu0 0.0
    %2982 = vmatpush1.msra.mxu0 0.0
    %2983 = vmatprep.subr.mxu0 0.0
    %2984 = vmatpush1.msra.mxu0 0.0
    %2985 = vmatprep.subr.mxu0 0.0
    %2986 = vmatpush1.msra.mxu0 0.0
    %2987 = vmatprep.subr.mxu0 0.0
    %2988 = vmatpush1.msra.mxu0 0.0
    %2989 = vmatprep.subr.mxu0 0.0
    %2990 = vmatpush1.msra.mxu0 0.0
    %2991 = vmatprep.subr.mxu0 0.0
    %2992 = vmatpush1.msra.mxu0 0.0
    %2993 = vmatprep.mubr.f32.mxu0 0.0
    %2994 = vmatmul.mubr.f32.gmra.mrb[0].mxu0 %v2927
    %v2995 = vpop.f32.mrb[0].mxu0
    %v2996 = vadd.f32 0.0, %v2995
    %v2997 = vpop.f32.mrb[0].mxu0
    %2998 = vdwg.mxu0
    %v3000 = vsel %vm476, %v2851, 0
    %3002 = vmatprep.subr.mxu0 0.0
    %3003 = vmatpush1.msra.mxu0 %v2500
    %3004 = vmatprep.subr.mxu0 0.0
    %3005 = vmatpush1.msra.mxu0 0.0
    %3006 = vmatprep.subr.mxu0 0.0
    %3007 = vmatpush1.msra.mxu0 0.0
    %3008 = vmatprep.subr.mxu0 0.0
    %3009 = vmatpush1.msra.mxu0 0.0
    %3010 = vmatprep.subr.mxu0 0.0
    %3011 = vmatpush1.msra.mxu0 0.0
    %3012 = vmatprep.subr.mxu0 0.0
    %3013 = vmatpush1.msra.mxu0 0.0
    %3014 = vmatprep.subr.mxu0 0.0
    %3015 = vmatpush1.msra.mxu0 0.0
    %3016 = vmatprep.subr.mxu0 0.0
    %3017 = vmatpush1.msra.mxu0 0.0
    %3018 = vmatprep.subr.mxu0 0.0
    %3019 = vmatpush1.msra.mxu0 0.0
    %3020 = vmatprep.subr.mxu0 0.0
    %3021 = vmatpush1.msra.mxu0 0.0
    %3022 = vmatprep.subr.mxu0 0.0
    %3023 = vmatpush1.msra.mxu0 0.0
    %3024 = vmatprep.subr.mxu0 0.0
    %3025 = vmatpush1.msra.mxu0 0.0
    %3026 = vmatprep.subr.mxu0 0.0
    %3027 = vmatpush1.msra.mxu0 0.0
    %3028 = vmatprep.subr.mxu0 0.0
    %3029 = vmatpush1.msra.mxu0 0.0
    %3030 = vmatprep.subr.mxu0 0.0
    %3031 = vmatpush1.msra.mxu0 0.0
    %3032 = vmatprep.subr.mxu0 0.0
    %3033 = vmatpush1.msra.mxu0 0.0
    %3034 = vmatprep.subr.mxu0 0.0
    %3035 = vmatpush1.msra.mxu0 0.0
    %3036 = vmatprep.subr.mxu0 0.0
    %3037 = vmatpush1.msra.mxu0 0.0
    %3038 = vmatprep.subr.mxu0 0.0
    %3039 = vmatpush1.msra.mxu0 0.0
    %3040 = vmatprep.subr.mxu0 0.0
    %3041 = vmatpush1.msra.mxu0 0.0
    %3042 = vmatprep.subr.mxu0 0.0
    %3043 = vmatpush1.msra.mxu0 0.0
    %3044 = vmatprep.subr.mxu0 0.0
    %3045 = vmatpush1.msra.mxu0 0.0
    %3046 = vmatprep.subr.mxu0 0.0
    %3047 = vmatpush1.msra.mxu0 0.0
    %3048 = vmatprep.subr.mxu0 0.0
    %3049 = vmatpush1.msra.mxu0 0.0
    %3050 = vmatprep.subr.mxu0 0.0
    %3051 = vmatpush1.msra.mxu0 0.0
    %3052 = vmatprep.subr.mxu0 0.0
    %3053 = vmatpush1.msra.mxu0 0.0
    %3054 = vmatprep.subr.mxu0 0.0
    %3055 = vmatpush1.msra.mxu0 0.0
    %3056 = vmatprep.subr.mxu0 0.0
    %3057 = vmatpush1.msra.mxu0 0.0
    %3058 = vmatprep.subr.mxu0 0.0
    %3059 = vmatpush1.msra.mxu0 0.0
    %3060 = vmatprep.subr.mxu0 0.0
    %3061 = vmatpush1.msra.mxu0 0.0
    %3062 = vmatprep.subr.mxu0 0.0
    %3063 = vmatpush1.msra.mxu0 0.0
    %3064 = vmatprep.subr.mxu0 0.0
    %3065 = vmatpush1.msra.mxu0 0.0
    %3066 = vmatprep.mubr.f32.mxu0 0.0
    %3067 = vmatmul.mubr.f32.gmra.mrb[0].mxu0 %v3000
    %v3068 = vpop.f32.mrb[0].mxu0
    %v3069 = vadd.f32 0.0, %v3068
    %v3070 = vpop.f32.mrb[0].mxu0
    %3071 = vdwg.mxu0
    %v3073 = vsel %vm476, %v2852, 0
    %3075 = vmatprep.subr.mxu0 0.0
    %3076 = vmatpush1.msra.mxu0 %v2503
    %3077 = vmatprep.subr.mxu0 0.0
    %3078 = vmatpush1.msra.mxu0 0.0
    %3079 = vmatprep.subr.mxu0 0.0
    %3080 = vmatpush1.msra.mxu0 0.0
    %3081 = vmatprep.subr.mxu0 0.0
    %3082 = vmatpush1.msra.mxu0 0.0
    %3083 = vmatprep.subr.mxu0 0.0
    %3084 = vmatpush1.msra.mxu0 0.0
    %3085 = vmatprep.subr.mxu0 0.0
    %3086 = vmatpush1.msra.mxu0 0.0
    %3087 = vmatprep.subr.mxu0 0.0
    %3088 = vmatpush1.msra.mxu0 0.0
    %3089 = vmatprep.subr.mxu0 0.0
    %3090 = vmatpush1.msra.mxu0 0.0
    %3091 = vmatprep.subr.mxu0 0.0
    %3092 = vmatpush1.msra.mxu0 0.0
    %3093 = vmatprep.subr.mxu0 0.0
    %3094 = vmatpush1.msra.mxu0 0.0
    %3095 = vmatprep.subr.mxu0 0.0
    %3096 = vmatpush1.msra.mxu0 0.0
    %3097 = vmatprep.subr.mxu0 0.0
    %3098 = vmatpush1.msra.mxu0 0.0
    %3099 = vmatprep.subr.mxu0 0.0
    %3100 = vmatpush1.msra.mxu0 0.0
    %3101 = vmatprep.subr.mxu0 0.0
    %3102 = vmatpush1.msra.mxu0 0.0
    %3103 = vmatprep.subr.mxu0 0.0
    %3104 = vmatpush1.msra.mxu0 0.0
    %3105 = vmatprep.subr.mxu0 0.0
    %3106 = vmatpush1.msra.mxu0 0.0
    %3107 = vmatprep.subr.mxu0 0.0
    %3108 = vmatpush1.msra.mxu0 0.0
    %3109 = vmatprep.subr.mxu0 0.0
    %3110 = vmatpush1.msra.mxu0 0.0
    %3111 = vmatprep.subr.mxu0 0.0
    %3112 = vmatpush1.msra.mxu0 0.0
    %3113 = vmatprep.subr.mxu0 0.0
    %3114 = vmatpush1.msra.mxu0 0.0
    %3115 = vmatprep.subr.mxu0 0.0
    %3116 = vmatpush1.msra.mxu0 0.0
    %3117 = vmatprep.subr.mxu0 0.0
    %3118 = vmatpush1.msra.mxu0 0.0
    %3119 = vmatprep.subr.mxu0 0.0
    %3120 = vmatpush1.msra.mxu0 0.0
    %3121 = vmatprep.subr.mxu0 0.0
    %3122 = vmatpush1.msra.mxu0 0.0
    %3123 = vmatprep.subr.mxu0 0.0
    %3124 = vmatpush1.msra.mxu0 0.0
    %3125 = vmatprep.subr.mxu0 0.0
    %3126 = vmatpush1.msra.mxu0 0.0
    %3127 = vmatprep.subr.mxu0 0.0
    %3128 = vmatpush1.msra.mxu0 0.0
    %3129 = vmatprep.subr.mxu0 0.0
    %3130 = vmatpush1.msra.mxu0 0.0
    %3131 = vmatprep.subr.mxu0 0.0
    %3132 = vmatpush1.msra.mxu0 0.0
    %3133 = vmatprep.subr.mxu0 0.0
    %3134 = vmatpush1.msra.mxu0 0.0
    %3135 = vmatprep.subr.mxu0 0.0
    %3136 = vmatpush1.msra.mxu0 0.0
    %3137 = vmatprep.subr.mxu0 0.0
    %3138 = vmatpush1.msra.mxu0 0.0
    %3139 = vmatprep.mubr.f32.mxu0 0.0
    %3140 = vmatmul.mubr.f32.gmra.mrb[0].mxu0 %v3073
    %v3141 = vpop.f32.mrb[0].mxu0
    %v3142 = vadd.f32 0.0, %v3141
    %v3143 = vpop.f32.mrb[0].mxu0
    %3144 = vdwg.mxu0
    %3146 = vrot.lane.b32.xlu0 %v2996, 8
    %v3147 = vpop.permute.xlu0 %3146
    %3150 = vrot.lane.b32.xlu0 %v3069, 16
    %v3151 = vpop.permute.xlu0 %3150
    %3154 = vrot.lane.b32.xlu0 %v3142, 24
    %v3155 = vpop.permute.xlu0 %3154
    %v3157 = vsel %vm476, %v2923, %v3147
    %v3158 = vsel %vm1137, %v3157, %v3151
    %v3159 = vsel %vm1139, %v3158, %v3155
    %3161 = vrot.lane.b32.xlu0 %v2316, 120
    %v3162 = vpop.permute.xlu0 %3161
    %3163 = vrot.lane.b32.xlu0 %v2316, 112
    %v3164 = vpop.permute.xlu0 %3163
    %3165 = vrot.lane.b32.xlu0 %v2316, 104
    %v3166 = vpop.permute.xlu0 %3165
    %3168 = vrot.lane.b32.xlu0 %v2397, 120
    %v3169 = vpop.permute.xlu0 %3168
    %3170 = vrot.lane.b32.xlu0 %v2397, 112
    %v3171 = vpop.permute.xlu0 %3170
    %3172 = vrot.lane.b32.xlu0 %v2397, 104
    %v3173 = vpop.permute.xlu0 %3172
    %3175 = vrot.lane.b32.xlu0 %v2478, 120
    %v3176 = vpop.permute.xlu0 %3175
    %3178 = vrot.lane.b32.xlu0 %v2478, 112
    %v3179 = vpop.permute.xlu0 %3178
    %3181 = vrot.lane.b32.xlu0 %v2478, 104
    %v3182 = vpop.permute.xlu0 %3181
    %v3184 = vsel %vm476, %v2316, 0
    %v3186 = vsel %vm476, %v2397, 0
    %3188 = vmatprep.subr.mxu0 0.0
    %3189 = vmatpush1.xpose.msra.mxu0 %v3186
    %3190 = vmatprep.subr.mxu0 0.0
    %3191 = vmatpush1.xpose.msra.mxu0 0.0
    %3192 = vmatprep.subr.mxu0 0.0
    %3193 = vmatpush1.xpose.msra.mxu0 0.0
    %3194 = vmatprep.subr.mxu0 0.0
    %3195 = vmatpush1.xpose.msra.mxu0 0.0
    %3196 = vmatprep.subr.mxu0 0.0
    %3197 = vmatpush1.xpose.msra.mxu0 0.0
    %3198 = vmatprep.subr.mxu0 0.0
    %3199 = vmatpush1.xpose.msra.mxu0 0.0
    %3200 = vmatprep.subr.mxu0 0.0
    %3201 = vmatpush1.xpose.msra.mxu0 0.0
    %3202 = vmatprep.subr.mxu0 0.0
    %3203 = vmatpush1.xpose.msra.mxu0 0.0
    %3204 = vmatprep.subr.mxu0 0.0
    %3205 = vmatpush1.xpose.msra.mxu0 0.0
    %3206 = vmatprep.subr.mxu0 0.0
    %3207 = vmatpush1.xpose.msra.mxu0 0.0
    %3208 = vmatprep.subr.mxu0 0.0
    %3209 = vmatpush1.xpose.msra.mxu0 0.0
    %3210 = vmatprep.subr.mxu0 0.0
    %3211 = vmatpush1.xpose.msra.mxu0 0.0
    %3212 = vmatprep.subr.mxu0 0.0
    %3213 = vmatpush1.xpose.msra.mxu0 0.0
    %3214 = vmatprep.subr.mxu0 0.0
    %3215 = vmatpush1.xpose.msra.mxu0 0.0
    %3216 = vmatprep.subr.mxu0 0.0
    %3217 = vmatpush1.xpose.msra.mxu0 0.0
    %3218 = vmatprep.subr.mxu0 0.0
    %3219 = vmatpush1.xpose.msra.mxu0 0.0
    %3220 = vmatprep.subr.mxu0 0.0
    %3221 = vmatpush1.xpose.msra.mxu0 0.0
    %3222 = vmatprep.subr.mxu0 0.0
    %3223 = vmatpush1.xpose.msra.mxu0 0.0
    %3224 = vmatprep.subr.mxu0 0.0
    %3225 = vmatpush1.xpose.msra.mxu0 0.0
    %3226 = vmatprep.subr.mxu0 0.0
    %3227 = vmatpush1.xpose.msra.mxu0 0.0
    %3228 = vmatprep.subr.mxu0 0.0
    %3229 = vmatpush1.xpose.msra.mxu0 0.0
    %3230 = vmatprep.subr.mxu0 0.0
    %3231 = vmatpush1.xpose.msra.mxu0 0.0
    %3232 = vmatprep.subr.mxu0 0.0
    %3233 = vmatpush1.xpose.msra.mxu0 0.0
    %3234 = vmatprep.subr.mxu0 0.0
    %3235 = vmatpush1.xpose.msra.mxu0 0.0
    %3236 = vmatprep.subr.mxu0 0.0
    %3237 = vmatpush1.xpose.msra.mxu0 0.0
    %3238 = vmatprep.subr.mxu0 0.0
    %3239 = vmatpush1.xpose.msra.mxu0 0.0
    %3240 = vmatprep.subr.mxu0 0.0
    %3241 = vmatpush1.xpose.msra.mxu0 0.0
    %3242 = vmatprep.subr.mxu0 0.0
    %3243 = vmatpush1.xpose.msra.mxu0 0.0
    %3244 = vmatprep.subr.mxu0 0.0
    %3245 = vmatpush1.xpose.msra.mxu0 0.0
    %3246 = vmatprep.subr.mxu0 0.0
    %3247 = vmatpush1.xpose.msra.mxu0 0.0
    %3248 = vmatprep.subr.mxu0 0.0
    %3249 = vmatpush1.xpose.msra.mxu0 0.0
    %3250 = vmatprep.subr.mxu0 0.0
    %3251 = vmatpush1.xpose.msra.mxu0 0.0
    %3252 = vmatprep.mubr.f32.mxu0 0.0
    %3253 = vmatmul.mubr.f32.gmra.mrb[0].mxu0 %v3184
    %v3254 = vpop.f32.mrb[0].mxu0
    %v3255 = vadd.f32 0.0, %v3254
    %v3256 = vpop.f32.mrb[0].mxu0
    %3257 = vdwg.mxu0
    %v3258 = vsel %vm476, %v3162, 0
    %v3260 = vsel %vm476, %v3169, 0
    %3262 = vmatprep.subr.mxu0 0.0
    %3263 = vmatpush1.xpose.msra.mxu0 %v3260
    %3264 = vmatprep.subr.mxu0 0.0
    %3265 = vmatpush1.xpose.msra.mxu0 0.0
    %3266 = vmatprep.subr.mxu0 0.0
    %3267 = vmatpush1.xpose.msra.mxu0 0.0
    %3268 = vmatprep.subr.mxu0 0.0
    %3269 = vmatpush1.xpose.msra.mxu0 0.0
    %3270 = vmatprep.subr.mxu0 0.0
    %3271 = vmatpush1.xpose.msra.mxu0 0.0
    %3272 = vmatprep.subr.mxu0 0.0
    %3273 = vmatpush1.xpose.msra.mxu0 0.0
    %3274 = vmatprep.subr.mxu0 0.0
    %3275 = vmatpush1.xpose.msra.mxu0 0.0
    %3276 = vmatprep.subr.mxu0 0.0
    %3277 = vmatpush1.xpose.msra.mxu0 0.0
    %3278 = vmatprep.subr.mxu0 0.0
    %3279 = vmatpush1.xpose.msra.mxu0 0.0
    %3280 = vmatprep.subr.mxu0 0.0
    %3281 = vmatpush1.xpose.msra.mxu0 0.0
    %3282 = vmatprep.subr.mxu0 0.0
    %3283 = vmatpush1.xpose.msra.mxu0 0.0
    %3284 = vmatprep.subr.mxu0 0.0
    %3285 = vmatpush1.xpose.msra.mxu0 0.0
    %3286 = vmatprep.subr.mxu0 0.0
    %3287 = vmatpush1.xpose.msra.mxu0 0.0
    %3288 = vmatprep.subr.mxu0 0.0
    %3289 = vmatpush1.xpose.msra.mxu0 0.0
    %3290 = vmatprep.subr.mxu0 0.0
    %3291 = vmatpush1.xpose.msra.mxu0 0.0
    %3292 = vmatprep.subr.mxu0 0.0
    %3293 = vmatpush1.xpose.msra.mxu0 0.0
    %3294 = vmatprep.subr.mxu0 0.0
    %3295 = vmatpush1.xpose.msra.mxu0 0.0
    %3296 = vmatprep.subr.mxu0 0.0
    %3297 = vmatpush1.xpose.msra.mxu0 0.0
    %3298 = vmatprep.subr.mxu0 0.0
    %3299 = vmatpush1.xpose.msra.mxu0 0.0
    %3300 = vmatprep.subr.mxu0 0.0
    %3301 = vmatpush1.xpose.msra.mxu0 0.0
    %3302 = vmatprep.subr.mxu0 0.0
    %3303 = vmatpush1.xpose.msra.mxu0 0.0
    %3304 = vmatprep.subr.mxu0 0.0
    %3305 = vmatpush1.xpose.msra.mxu0 0.0
    %3306 = vmatprep.subr.mxu0 0.0
    %3307 = vmatpush1.xpose.msra.mxu0 0.0
    %3308 = vmatprep.subr.mxu0 0.0
    %3309 = vmatpush1.xpose.msra.mxu0 0.0
    %3310 = vmatprep.subr.mxu0 0.0
    %3311 = vmatpush1.xpose.msra.mxu0 0.0
    %3312 = vmatprep.subr.mxu0 0.0
    %3313 = vmatpush1.xpose.msra.mxu0 0.0
    %3314 = vmatprep.subr.mxu0 0.0
    %3315 = vmatpush1.xpose.msra.mxu0 0.0
    %3316 = vmatprep.subr.mxu0 0.0
    %3317 = vmatpush1.xpose.msra.mxu0 0.0
    %3318 = vmatprep.subr.mxu0 0.0
    %3319 = vmatpush1.xpose.msra.mxu0 0.0
    %3320 = vmatprep.subr.mxu0 0.0
    %3321 = vmatpush1.xpose.msra.mxu0 0.0
    %3322 = vmatprep.subr.mxu0 0.0
    %3323 = vmatpush1.xpose.msra.mxu0 0.0
    %3324 = vmatprep.subr.mxu0 0.0
    %3325 = vmatpush1.xpose.msra.mxu0 0.0
    %3326 = vmatprep.mubr.f32.mxu0 0.0
    %3327 = vmatmul.mubr.f32.gmra.mrb[0].mxu0 %v3258
    %v3328 = vpop.f32.mrb[0].mxu0
    %v3329 = vadd.f32 0.0, %v3328
    %v3330 = vpop.f32.mrb[0].mxu0
    %3331 = vdwg.mxu0
    %v3332 = vsel %vm476, %v3164, 0
    %v3334 = vsel %vm476, %v3171, 0
    %3336 = vmatprep.subr.mxu0 0.0
    %3337 = vmatpush1.xpose.msra.mxu0 %v3334
    %3338 = vmatprep.subr.mxu0 0.0
    %3339 = vmatpush1.xpose.msra.mxu0 0.0
    %3340 = vmatprep.subr.mxu0 0.0
    %3341 = vmatpush1.xpose.msra.mxu0 0.0
    %3342 = vmatprep.subr.mxu0 0.0
    %3343 = vmatpush1.xpose.msra.mxu0 0.0
    %3344 = vmatprep.subr.mxu0 0.0
    %3345 = vmatpush1.xpose.msra.mxu0 0.0
    %3346 = vmatprep.subr.mxu0 0.0
    %3347 = vmatpush1.xpose.msra.mxu0 0.0
    %3348 = vmatprep.subr.mxu0 0.0
    %3349 = vmatpush1.xpose.msra.mxu0 0.0
    %3350 = vmatprep.subr.mxu0 0.0
    %3351 = vmatpush1.xpose.msra.mxu0 0.0
    %3352 = vmatprep.subr.mxu0 0.0
    %3353 = vmatpush1.xpose.msra.mxu0 0.0
    %3354 = vmatprep.subr.mxu0 0.0
    %3355 = vmatpush1.xpose.msra.mxu0 0.0
    %3356 = vmatprep.subr.mxu0 0.0
    %3357 = vmatpush1.xpose.msra.mxu0 0.0
    %3358 = vmatprep.subr.mxu0 0.0
    %3359 = vmatpush1.xpose.msra.mxu0 0.0
    %3360 = vmatprep.subr.mxu0 0.0
    %3361 = vmatpush1.xpose.msra.mxu0 0.0
    %3362 = vmatprep.subr.mxu0 0.0
    %3363 = vmatpush1.xpose.msra.mxu0 0.0
    %3364 = vmatprep.subr.mxu0 0.0
    %3365 = vmatpush1.xpose.msra.mxu0 0.0
    %3366 = vmatprep.subr.mxu0 0.0
    %3367 = vmatpush1.xpose.msra.mxu0 0.0
    %3368 = vmatprep.subr.mxu0 0.0
    %3369 = vmatpush1.xpose.msra.mxu0 0.0
    %3370 = vmatprep.subr.mxu0 0.0
    %3371 = vmatpush1.xpose.msra.mxu0 0.0
    %3372 = vmatprep.subr.mxu0 0.0
    %3373 = vmatpush1.xpose.msra.mxu0 0.0
    %3374 = vmatprep.subr.mxu0 0.0
    %3375 = vmatpush1.xpose.msra.mxu0 0.0
    %3376 = vmatprep.subr.mxu0 0.0
    %3377 = vmatpush1.xpose.msra.mxu0 0.0
    %3378 = vmatprep.subr.mxu0 0.0
    %3379 = vmatpush1.xpose.msra.mxu0 0.0
    %3380 = vmatprep.subr.mxu0 0.0
    %3381 = vmatpush1.xpose.msra.mxu0 0.0
    %3382 = vmatprep.subr.mxu0 0.0
    %3383 = vmatpush1.xpose.msra.mxu0 0.0
    %3384 = vmatprep.subr.mxu0 0.0
    %3385 = vmatpush1.xpose.msra.mxu0 0.0
    %3386 = vmatprep.subr.mxu0 0.0
    %3387 = vmatpush1.xpose.msra.mxu0 0.0
    %3388 = vmatprep.subr.mxu0 0.0
    %3389 = vmatpush1.xpose.msra.mxu0 0.0
    %3390 = vmatprep.subr.mxu0 0.0
    %3391 = vmatpush1.xpose.msra.mxu0 0.0
    %3392 = vmatprep.subr.mxu0 0.0
    %3393 = vmatpush1.xpose.msra.mxu0 0.0
    %3394 = vmatprep.subr.mxu0 0.0
    %3395 = vmatpush1.xpose.msra.mxu0 0.0
    %3396 = vmatprep.subr.mxu0 0.0
    %3397 = vmatpush1.xpose.msra.mxu0 0.0
    %3398 = vmatprep.subr.mxu0 0.0
    %3399 = vmatpush1.xpose.msra.mxu0 0.0
    %3400 = vmatprep.mubr.f32.mxu0 0.0
    %3401 = vmatmul.mubr.f32.gmra.mrb[0].mxu0 %v3332
    %v3402 = vpop.f32.mrb[0].mxu0
    %v3403 = vadd.f32 0.0, %v3402
    %v3404 = vpop.f32.mrb[0].mxu0
    %3405 = vdwg.mxu0
    %v3406 = vsel %vm476, %v3166, 0
    %v3408 = vsel %vm476, %v3173, 0
    %3410 = vmatprep.subr.mxu0 0.0
    %3411 = vmatpush1.xpose.msra.mxu0 %v3408
    %3412 = vmatprep.subr.mxu0 0.0
    %3413 = vmatpush1.xpose.msra.mxu0 0.0
    %3414 = vmatprep.subr.mxu0 0.0
    %3415 = vmatpush1.xpose.msra.mxu0 0.0
    %3416 = vmatprep.subr.mxu0 0.0
    %3417 = vmatpush1.xpose.msra.mxu0 0.0
    %3418 = vmatprep.subr.mxu0 0.0
    %3419 = vmatpush1.xpose.msra.mxu0 0.0
    %3420 = vmatprep.subr.mxu0 0.0
    %3421 = vmatpush1.xpose.msra.mxu0 0.0
    %3422 = vmatprep.subr.mxu0 0.0
    %3423 = vmatpush1.xpose.msra.mxu0 0.0
    %3424 = vmatprep.subr.mxu0 0.0
    %3425 = vmatpush1.xpose.msra.mxu0 0.0
    %3426 = vmatprep.subr.mxu0 0.0
    %3427 = vmatpush1.xpose.msra.mxu0 0.0
    %3428 = vmatprep.subr.mxu0 0.0
    %3429 = vmatpush1.xpose.msra.mxu0 0.0
    %3430 = vmatprep.subr.mxu0 0.0
    %3431 = vmatpush1.xpose.msra.mxu0 0.0
    %3432 = vmatprep.subr.mxu0 0.0
    %3433 = vmatpush1.xpose.msra.mxu0 0.0
    %3434 = vmatprep.subr.mxu0 0.0
    %3435 = vmatpush1.xpose.msra.mxu0 0.0
    %3436 = vmatprep.subr.mxu0 0.0
    %3437 = vmatpush1.xpose.msra.mxu0 0.0
    %3438 = vmatprep.subr.mxu0 0.0
    %3439 = vmatpush1.xpose.msra.mxu0 0.0
    %3440 = vmatprep.subr.mxu0 0.0
    %3441 = vmatpush1.xpose.msra.mxu0 0.0
    %3442 = vmatprep.subr.mxu0 0.0
    %3443 = vmatpush1.xpose.msra.mxu0 0.0
    %3444 = vmatprep.subr.mxu0 0.0
    %3445 = vmatpush1.xpose.msra.mxu0 0.0
    %3446 = vmatprep.subr.mxu0 0.0
    %3447 = vmatpush1.xpose.msra.mxu0 0.0
    %3448 = vmatprep.subr.mxu0 0.0
    %3449 = vmatpush1.xpose.msra.mxu0 0.0
    %3450 = vmatprep.subr.mxu0 0.0
    %3451 = vmatpush1.xpose.msra.mxu0 0.0
    %3452 = vmatprep.subr.mxu0 0.0
    %3453 = vmatpush1.xpose.msra.mxu0 0.0
    %3454 = vmatprep.subr.mxu0 0.0
    %3455 = vmatpush1.xpose.msra.mxu0 0.0
    %3456 = vmatprep.subr.mxu0 0.0
    %3457 = vmatpush1.xpose.msra.mxu0 0.0
    %3458 = vmatprep.subr.mxu0 0.0
    %3459 = vmatpush1.xpose.msra.mxu0 0.0
    %3460 = vmatprep.subr.mxu0 0.0
    %3461 = vmatpush1.xpose.msra.mxu0 0.0
    %3462 = vmatprep.subr.mxu0 0.0
    %3463 = vmatpush1.xpose.msra.mxu0 0.0
    %3464 = vmatprep.subr.mxu0 0.0
    %3465 = vmatpush1.xpose.msra.mxu0 0.0
    %3466 = vmatprep.subr.mxu0 0.0
    %3467 = vmatpush1.xpose.msra.mxu0 0.0
    %3468 = vmatprep.subr.mxu0 0.0
    %3469 = vmatpush1.xpose.msra.mxu0 0.0
    %3470 = vmatprep.subr.mxu0 0.0
    %3471 = vmatpush1.xpose.msra.mxu0 0.0
    %3472 = vmatprep.subr.mxu0 0.0
    %3473 = vmatpush1.xpose.msra.mxu0 0.0
    %3474 = vmatprep.mubr.f32.mxu0 0.0
    %3475 = vmatmul.mubr.f32.gmra.mrb[0].mxu0 %v3406
    %v3476 = vpop.f32.mrb[0].mxu0
    %v3477 = vadd.f32 0.0, %v3476
    %v3478 = vpop.f32.mrb[0].mxu0
    %3479 = vdwg.mxu0
    %v3480 = vmul.f32 %v3255, 0.35355338
    %v3481 = vmul.f32 %v3329, 0.35355338
    %v3482 = vmul.f32 %v3403, 0.35355338
    %v3483 = vmul.f32 %v3477, 0.35355338
    %v3484 = vsel %vm1469, %v3480, -1e+09
    %v3485 = vsel %vm1469, %v3481, -1e+09
    %v3486 = vsel %vm1469, %v3482, -1e+09
    %v3487 = vsel %vm1469, %v3483, -1e+09
    %v3488 = vsel %vm476, %v3484, -inf
    %3489 = vmax.xlane.f32.xlu0 %v3488
    %v3490 = vpop.xlane.xlu0 %3489
    %v3491 = vsel %vm476, %v3485, -inf
    %3492 = vmax.xlane.f32.xlu0 %v3491
    %v3493 = vpop.xlane.xlu0 %3492
    %v3494 = vsel %vm476, %v3486, -inf
    %3495 = vmax.xlane.f32.xlu0 %v3494
    %v3496 = vpop.xlane.xlu0 %3495
    %v3497 = vsel %vm476, %v3487, -inf
    %3498 = vmax.xlane.f32.xlu0 %v3497
    %v3499 = vpop.xlane.xlu0 %3498
    %v3500 = vsub.f32 %v3484, %v3490
    %v3501 = vsub.f32 %v3485, %v3493
    %v3502 = vsub.f32 %v3486, %v3496
    %v3503 = vsub.f32 %v3487, %v3499
    %v3504 = vmul.f32 %v3500, 1.442695
    %v3505 = vpow.pop %v3504
    %v3506 = vmul.f32 %v3501, 1.442695
    %v3507 = vpow.pop %v3506
    %v3508 = vmul.f32 %v3502, 1.442695
    %v3509 = vpow.pop %v3508
    %v3510 = vmul.f32 %v3503, 1.442695
    %v3511 = vpow.pop %v3510
    %v3512 = vsel %vm476, %v3505, 0.0
    %3513 = vadd.xlane.f32.xlu0 %v3512
    %v3514 = vpop.xlane.xlu0 %3513
    %v3515 = vsel %vm476, %v3507, 0.0
    %3516 = vadd.xlane.f32.xlu0 %v3515
    %v3517 = vpop.xlane.xlu0 %3516
    %v3518 = vsel %vm476, %v3509, 0.0
    %3519 = vadd.xlane.f32.xlu0 %v3518
    %v3520 = vpop.xlane.xlu0 %3519
    %v3521 = vsel %vm476, %v3511, 0.0
    %3522 = vadd.xlane.f32.xlu0 %v3521
    %v3523 = vpop.xlane.xlu0 %3522
    %v3524 = vrcp.pop %v3514
    %v3525 = vrcp.pop %v3517
    %v3526 = vrcp.pop %v3520
    %v3527 = vrcp.pop %v3523
    %v3528 = vmul.f32 %v3505, %v3524
    %v3529 = vmul.f32 %v3507, %v3525
    %v3530 = vmul.f32 %v3509, %v3526
    %v3531 = vmul.f32 %v3511, %v3527
    %v3533 = vsel %vm476, %v3528, 0
    %3535 = vmatprep.subr.mxu0 0.0
    %3536 = vmatpush1.msra.mxu0 %v2478
    %3537 = vmatprep.subr.mxu0 0.0
    %3538 = vmatpush1.msra.mxu0 0.0
    %3539 = vmatprep.subr.mxu0 0.0
    %3540 = vmatpush1.msra.mxu0 0.0
    %3541 = vmatprep.subr.mxu0 0.0
    %3542 = vmatpush1.msra.mxu0 0.0
    %3543 = vmatprep.subr.mxu0 0.0
    %3544 = vmatpush1.msra.mxu0 0.0
    %3545 = vmatprep.subr.mxu0 0.0
    %3546 = vmatpush1.msra.mxu0 0.0
    %3547 = vmatprep.subr.mxu0 0.0
    %3548 = vmatpush1.msra.mxu0 0.0
    %3549 = vmatprep.subr.mxu0 0.0
    %3550 = vmatpush1.msra.mxu0 0.0
    %3551 = vmatprep.subr.mxu0 0.0
    %3552 = vmatpush1.msra.mxu0 0.0
    %3553 = vmatprep.subr.mxu0 0.0
    %3554 = vmatpush1.msra.mxu0 0.0
    %3555 = vmatprep.subr.mxu0 0.0
    %3556 = vmatpush1.msra.mxu0 0.0
    %3557 = vmatprep.subr.mxu0 0.0
    %3558 = vmatpush1.msra.mxu0 0.0
    %3559 = vmatprep.subr.mxu0 0.0
    %3560 = vmatpush1.msra.mxu0 0.0
    %3561 = vmatprep.subr.mxu0 0.0
    %3562 = vmatpush1.msra.mxu0 0.0
    %3563 = vmatprep.subr.mxu0 0.0
    %3564 = vmatpush1.msra.mxu0 0.0
    %3565 = vmatprep.subr.mxu0 0.0
    %3566 = vmatpush1.msra.mxu0 0.0
    %3567 = vmatprep.subr.mxu0 0.0
    %3568 = vmatpush1.msra.mxu0 0.0
    %3569 = vmatprep.subr.mxu0 0.0
    %3570 = vmatpush1.msra.mxu0 0.0
    %3571 = vmatprep.subr.mxu0 0.0
    %3572 = vmatpush1.msra.mxu0 0.0
    %3573 = vmatprep.subr.mxu0 0.0
    %3574 = vmatpush1.msra.mxu0 0.0
    %3575 = vmatprep.subr.mxu0 0.0
    %3576 = vmatpush1.msra.mxu0 0.0
    %3577 = vmatprep.subr.mxu0 0.0
    %3578 = vmatpush1.msra.mxu0 0.0
    %3579 = vmatprep.subr.mxu0 0.0
    %3580 = vmatpush1.msra.mxu0 0.0
    %3581 = vmatprep.subr.mxu0 0.0
    %3582 = vmatpush1.msra.mxu0 0.0
    %3583 = vmatprep.subr.mxu0 0.0
    %3584 = vmatpush1.msra.mxu0 0.0
    %3585 = vmatprep.subr.mxu0 0.0
    %3586 = vmatpush1.msra.mxu0 0.0
    %3587 = vmatprep.subr.mxu0 0.0
    %3588 = vmatpush1.msra.mxu0 0.0
    %3589 = vmatprep.subr.mxu0 0.0
    %3590 = vmatpush1.msra.mxu0 0.0
    %3591 = vmatprep.subr.mxu0 0.0
    %3592 = vmatpush1.msra.mxu0 0.0
    %3593 = vmatprep.subr.mxu0 0.0
    %3594 = vmatpush1.msra.mxu0 0.0
    %3595 = vmatprep.subr.mxu0 0.0
    %3596 = vmatpush1.msra.mxu0 0.0
    %3597 = vmatprep.subr.mxu0 0.0
    %3598 = vmatpush1.msra.mxu0 0.0
    %3599 = vmatprep.mubr.f32.mxu0 0.0
    %3600 = vmatmul.mubr.f32.gmra.mrb[0].mxu0 %v3533
    %v3601 = vpop.f32.mrb[0].mxu0
    %v3602 = vadd.f32 0.0, %v3601
    %v3603 = vpop.f32.mrb[0].mxu0
    %3604 = vdwg.mxu0
    %v3606 = vsel %vm476, %v3529, 0
    %3608 = vmatprep.subr.mxu0 0.0
    %3609 = vmatpush1.msra.mxu0 %v3176
    %3610 = vmatprep.subr.mxu0 0.0
    %3611 = vmatpush1.msra.mxu0 0.0
    %3612 = vmatprep.subr.mxu0 0.0
    %3613 = vmatpush1.msra.mxu0 0.0
    %3614 = vmatprep.subr.mxu0 0.0
    %3615 = vmatpush1.msra.mxu0 0.0
    %3616 = vmatprep.subr.mxu0 0.0
    %3617 = vmatpush1.msra.mxu0 0.0
    %3618 = vmatprep.subr.mxu0 0.0
    %3619 = vmatpush1.msra.mxu0 0.0
    %3620 = vmatprep.subr.mxu0 0.0
    %3621 = vmatpush1.msra.mxu0 0.0
    %3622 = vmatprep.subr.mxu0 0.0
    %3623 = vmatpush1.msra.mxu0 0.0
    %3624 = vmatprep.subr.mxu0 0.0
    %3625 = vmatpush1.msra.mxu0 0.0
    %3626 = vmatprep.subr.mxu0 0.0
    %3627 = vmatpush1.msra.mxu0 0.0
    %3628 = vmatprep.subr.mxu0 0.0
    %3629 = vmatpush1.msra.mxu0 0.0
    %3630 = vmatprep.subr.mxu0 0.0
    %3631 = vmatpush1.msra.mxu0 0.0
    %3632 = vmatprep.subr.mxu0 0.0
    %3633 = vmatpush1.msra.mxu0 0.0
    %3634 = vmatprep.subr.mxu0 0.0
    %3635 = vmatpush1.msra.mxu0 0.0
    %3636 = vmatprep.subr.mxu0 0.0
    %3637 = vmatpush1.msra.mxu0 0.0
    %3638 = vmatprep.subr.mxu0 0.0
    %3639 = vmatpush1.msra.mxu0 0.0
    %3640 = vmatprep.subr.mxu0 0.0
    %3641 = vmatpush1.msra.mxu0 0.0
    %3642 = vmatprep.subr.mxu0 0.0
    %3643 = vmatpush1.msra.mxu0 0.0
    %3644 = vmatprep.subr.mxu0 0.0
    %3645 = vmatpush1.msra.mxu0 0.0
    %3646 = vmatprep.subr.mxu0 0.0
    %3647 = vmatpush1.msra.mxu0 0.0
    %3648 = vmatprep.subr.mxu0 0.0
    %3649 = vmatpush1.msra.mxu0 0.0
    %3650 = vmatprep.subr.mxu0 0.0
    %3651 = vmatpush1.msra.mxu0 0.0
    %3652 = vmatprep.subr.mxu0 0.0
    %3653 = vmatpush1.msra.mxu0 0.0
    %3654 = vmatprep.subr.mxu0 0.0
    %3655 = vmatpush1.msra.mxu0 0.0
    %3656 = vmatprep.subr.mxu0 0.0
    %3657 = vmatpush1.msra.mxu0 0.0
    %3658 = vmatprep.subr.mxu0 0.0
    %3659 = vmatpush1.msra.mxu0 0.0
    %3660 = vmatprep.subr.mxu0 0.0
    %3661 = vmatpush1.msra.mxu0 0.0
    %3662 = vmatprep.subr.mxu0 0.0
    %3663 = vmatpush1.msra.mxu0 0.0
    %3664 = vmatprep.subr.mxu0 0.0
    %3665 = vmatpush1.msra.mxu0 0.0
    %3666 = vmatprep.subr.mxu0 0.0
    %3667 = vmatpush1.msra.mxu0 0.0
    %3668 = vmatprep.subr.mxu0 0.0
    %3669 = vmatpush1.msra.mxu0 0.0
    %3670 = vmatprep.subr.mxu0 0.0
    %3671 = vmatpush1.msra.mxu0 0.0
    %3672 = vmatprep.mubr.f32.mxu0 0.0
    %3673 = vmatmul.mubr.f32.gmra.mrb[0].mxu0 %v3606
    %v3674 = vpop.f32.mrb[0].mxu0
    %v3675 = vadd.f32 0.0, %v3674
    %v3676 = vpop.f32.mrb[0].mxu0
    %3677 = vdwg.mxu0
    %v3679 = vsel %vm476, %v3530, 0
    %3681 = vmatprep.subr.mxu0 0.0
    %3682 = vmatpush1.msra.mxu0 %v3179
    %3683 = vmatprep.subr.mxu0 0.0
    %3684 = vmatpush1.msra.mxu0 0.0
    %3685 = vmatprep.subr.mxu0 0.0
    %3686 = vmatpush1.msra.mxu0 0.0
    %3687 = vmatprep.subr.mxu0 0.0
    %3688 = vmatpush1.msra.mxu0 0.0
    %3689 = vmatprep.subr.mxu0 0.0
    %3690 = vmatpush1.msra.mxu0 0.0
    %3691 = vmatprep.subr.mxu0 0.0
    %3692 = vmatpush1.msra.mxu0 0.0
    %3693 = vmatprep.subr.mxu0 0.0
    %3694 = vmatpush1.msra.mxu0 0.0
    %3695 = vmatprep.subr.mxu0 0.0
    %3696 = vmatpush1.msra.mxu0 0.0
    %3697 = vmatprep.subr.mxu0 0.0
    %3698 = vmatpush1.msra.mxu0 0.0
    %3699 = vmatprep.subr.mxu0 0.0
    %3700 = vmatpush1.msra.mxu0 0.0
    %3701 = vmatprep.subr.mxu0 0.0
    %3702 = vmatpush1.msra.mxu0 0.0
    %3703 = vmatprep.subr.mxu0 0.0
    %3704 = vmatpush1.msra.mxu0 0.0
    %3705 = vmatprep.subr.mxu0 0.0
    %3706 = vmatpush1.msra.mxu0 0.0
    %3707 = vmatprep.subr.mxu0 0.0
    %3708 = vmatpush1.msra.mxu0 0.0
    %3709 = vmatprep.subr.mxu0 0.0
    %3710 = vmatpush1.msra.mxu0 0.0
    %3711 = vmatprep.subr.mxu0 0.0
    %3712 = vmatpush1.msra.mxu0 0.0
    %3713 = vmatprep.subr.mxu0 0.0
    %3714 = vmatpush1.msra.mxu0 0.0
    %3715 = vmatprep.subr.mxu0 0.0
    %3716 = vmatpush1.msra.mxu0 0.0
    %3717 = vmatprep.subr.mxu0 0.0
    %3718 = vmatpush1.msra.mxu0 0.0
    %3719 = vmatprep.subr.mxu0 0.0
    %3720 = vmatpush1.msra.mxu0 0.0
    %3721 = vmatprep.subr.mxu0 0.0
    %3722 = vmatpush1.msra.mxu0 0.0
    %3723 = vmatprep.subr.mxu0 0.0
    %3724 = vmatpush1.msra.mxu0 0.0
    %3725 = vmatprep.subr.mxu0 0.0
    %3726 = vmatpush1.msra.mxu0 0.0
    %3727 = vmatprep.subr.mxu0 0.0
    %3728 = vmatpush1.msra.mxu0 0.0
    %3729 = vmatprep.subr.mxu0 0.0
    %3730 = vmatpush1.msra.mxu0 0.0
    %3731 = vmatprep.subr.mxu0 0.0
    %3732 = vmatpush1.msra.mxu0 0.0
    %3733 = vmatprep.subr.mxu0 0.0
    %3734 = vmatpush1.msra.mxu0 0.0
    %3735 = vmatprep.subr.mxu0 0.0
    %3736 = vmatpush1.msra.mxu0 0.0
    %3737 = vmatprep.subr.mxu0 0.0
    %3738 = vmatpush1.msra.mxu0 0.0
    %3739 = vmatprep.subr.mxu0 0.0
    %3740 = vmatpush1.msra.mxu0 0.0
    %3741 = vmatprep.subr.mxu0 0.0
    %3742 = vmatpush1.msra.mxu0 0.0
    %3743 = vmatprep.subr.mxu0 0.0
    %3744 = vmatpush1.msra.mxu0 0.0
    %3745 = vmatprep.mubr.f32.mxu0 0.0
    %3746 = vmatmul.mubr.f32.gmra.mrb[0].mxu0 %v3679
    %v3747 = vpop.f32.mrb[0].mxu0
    %v3748 = vadd.f32 0.0, %v3747
    %v3749 = vpop.f32.mrb[0].mxu0
    %3750 = vdwg.mxu0
    %v3752 = vsel %vm476, %v3531, 0
    %3754 = vmatprep.subr.mxu0 0.0
    %3755 = vmatpush1.msra.mxu0 %v3182
    %3756 = vmatprep.subr.mxu0 0.0
    %3757 = vmatpush1.msra.mxu0 0.0
    %3758 = vmatprep.subr.mxu0 0.0
    %3759 = vmatpush1.msra.mxu0 0.0
    %3760 = vmatprep.subr.mxu0 0.0
    %3761 = vmatpush1.msra.mxu0 0.0
    %3762 = vmatprep.subr.mxu0 0.0
    %3763 = vmatpush1.msra.mxu0 0.0
    %3764 = vmatprep.subr.mxu0 0.0
    %3765 = vmatpush1.msra.mxu0 0.0
    %3766 = vmatprep.subr.mxu0 0.0
    %3767 = vmatpush1.msra.mxu0 0.0
    %3768 = vmatprep.subr.mxu0 0.0
    %3769 = vmatpush1.msra.mxu0 0.0
    %3770 = vmatprep.subr.mxu0 0.0
    %3771 = vmatpush1.msra.mxu0 0.0
    %3772 = vmatprep.subr.mxu0 0.0
    %3773 = vmatpush1.msra.mxu0 0.0
    %3774 = vmatprep.subr.mxu0 0.0
    %3775 = vmatpush1.msra.mxu0 0.0
    %3776 = vmatprep.subr.mxu0 0.0
    %3777 = vmatpush1.msra.mxu0 0.0
    %3778 = vmatprep.subr.mxu0 0.0
    %3779 = vmatpush1.msra.mxu0 0.0
    %3780 = vmatprep.subr.mxu0 0.0
    %3781 = vmatpush1.msra.mxu0 0.0
    %3782 = vmatprep.subr.mxu0 0.0
    %3783 = vmatpush1.msra.mxu0 0.0
    %3784 = vmatprep.subr.mxu0 0.0
    %3785 = vmatpush1.msra.mxu0 0.0
    %3786 = vmatprep.subr.mxu0 0.0
    %3787 = vmatpush1.msra.mxu0 0.0
    %3788 = vmatprep.subr.mxu0 0.0
    %3789 = vmatpush1.msra.mxu0 0.0
    %3790 = vmatprep.subr.mxu0 0.0
    %3791 = vmatpush1.msra.mxu0 0.0
    %3792 = vmatprep.subr.mxu0 0.0
    %3793 = vmatpush1.msra.mxu0 0.0
    %3794 = vmatprep.subr.mxu0 0.0
    %3795 = vmatpush1.msra.mxu0 0.0
    %3796 = vmatprep.subr.mxu0 0.0
    %3797 = vmatpush1.msra.mxu0 0.0
    %3798 = vmatprep.subr.mxu0 0.0
    %3799 = vmatpush1.msra.mxu0 0.0
    %3800 = vmatprep.subr.mxu0 0.0
    %3801 = vmatpush1.msra.mxu0 0.0
    %3802 = vmatprep.subr.mxu0 0.0
    %3803 = vmatpush1.msra.mxu0 0.0
    %3804 = vmatprep.subr.mxu0 0.0
    %3805 = vmatpush1.msra.mxu0 0.0
    %3806 = vmatprep.subr.mxu0 0.0
    %3807 = vmatpush1.msra.mxu0 0.0
    %3808 = vmatprep.subr.mxu0 0.0
    %3809 = vmatpush1.msra.mxu0 0.0
    %3810 = vmatprep.subr.mxu0 0.0
    %3811 = vmatpush1.msra.mxu0 0.0
    %3812 = vmatprep.subr.mxu0 0.0
    %3813 = vmatpush1.msra.mxu0 0.0
    %3814 = vmatprep.subr.mxu0 0.0
    %3815 = vmatpush1.msra.mxu0 0.0
    %3816 = vmatprep.subr.mxu0 0.0
    %3817 = vmatpush1.msra.mxu0 0.0
    %3818 = vmatprep.mubr.f32.mxu0 0.0
    %3819 = vmatmul.mubr.f32.gmra.mrb[0].mxu0 %v3752
    %v3820 = vpop.f32.mrb[0].mxu0
    %v3821 = vadd.f32 0.0, %v3820
    %v3822 = vpop.f32.mrb[0].mxu0
    %3823 = vdwg.mxu0
    %3825 = vrot.lane.b32.xlu0 %v3675, 8
    %v3826 = vpop.permute.xlu0 %3825
    %3829 = vrot.lane.b32.xlu0 %v3748, 16
    %v3830 = vpop.permute.xlu0 %3829
    %3833 = vrot.lane.b32.xlu0 %v3821, 24
    %v3834 = vpop.permute.xlu0 %3833
    %v3836 = vsel %vm476, %v3602, %v3826
    %v3837 = vsel %vm1137, %v3836, %v3830
    %v3838 = vsel %vm1139, %v3837, %v3834
    %v3840 = vlaneseq
    %v3841 = vshrl.u32 %v3840, 7
    %v3842 = vsub.s32 0, %v3841
    %v3843 = vrot.slane %v2205, %v3842
    %v3846 = vsel %vm208, %v3159, 0
    %v3849 = vsel %vm208, %v3838, 0
    %3851 = vmatprep.subr.mxu0 0.0
    %3852 = vmatpush1.msra.mxu0 %v2200
    %3853 = vmatprep.subr.mxu0 0.0
    %3854 = vmatpush1.msra.mxu0 %v2201
    %3855 = vmatprep.subr.mxu0 0.0
    %3856 = vmatpush1.msra.mxu0 %v2202
    %3857 = vmatprep.subr.mxu0 0.0
    %3858 = vmatpush1.msra.mxu0 %v2203
    %3859 = vmatprep.subr.mxu0 0.0
    %3860 = vmatpush1.msra.mxu0 0.0
    %3861 = vmatprep.subr.mxu0 0.0
    %3862 = vmatpush1.msra.mxu0 0.0
    %3863 = vmatprep.subr.mxu0 0.0
    %3864 = vmatpush1.msra.mxu0 0.0
    %3865 = vmatprep.subr.mxu0 0.0
    %3866 = vmatpush1.msra.mxu0 0.0
    %3867 = vmatprep.subr.mxu0 0.0
    %3868 = vmatpush1.msra.mxu0 0.0
    %3869 = vmatprep.subr.mxu0 0.0
    %3870 = vmatpush1.msra.mxu0 0.0
    %3871 = vmatprep.subr.mxu0 0.0
    %3872 = vmatpush1.msra.mxu0 0.0
    %3873 = vmatprep.subr.mxu0 0.0
    %3874 = vmatpush1.msra.mxu0 0.0
    %3875 = vmatprep.subr.mxu0 0.0
    %3876 = vmatpush1.msra.mxu0 0.0
    %3877 = vmatprep.subr.mxu0 0.0
    %3878 = vmatpush1.msra.mxu0 0.0
    %3879 = vmatprep.subr.mxu0 0.0
    %3880 = vmatpush1.msra.mxu0 0.0
    %3881 = vmatprep.subr.mxu0 0.0
    %3882 = vmatpush1.msra.mxu0 0.0
    %3883 = vmatprep.subr.mxu0 0.0
    %3884 = vmatpush1.msra.mxu0 0.0
    %3885 = vmatprep.subr.mxu0 0.0
    %3886 = vmatpush1.msra.mxu0 0.0
    %3887 = vmatprep.subr.mxu0 0.0
    %3888 = vmatpush1.msra.mxu0 0.0
    %3889 = vmatprep.subr.mxu0 0.0
    %3890 = vmatpush1.msra.mxu0 0.0
    %3891 = vmatprep.subr.mxu0 0.0
    %3892 = vmatpush1.msra.mxu0 0.0
    %3893 = vmatprep.subr.mxu0 0.0
    %3894 = vmatpush1.msra.mxu0 0.0
    %3895 = vmatprep.subr.mxu0 0.0
    %3896 = vmatpush1.msra.mxu0 0.0
    %3897 = vmatprep.subr.mxu0 0.0
    %3898 = vmatpush1.msra.mxu0 0.0
    %3899 = vmatprep.subr.mxu0 0.0
    %3900 = vmatpush1.msra.mxu0 0.0
    %3901 = vmatprep.subr.mxu0 0.0
    %3902 = vmatpush1.msra.mxu0 0.0
    %3903 = vmatprep.subr.mxu0 0.0
    %3904 = vmatpush1.msra.mxu0 0.0
    %3905 = vmatprep.subr.mxu0 0.0
    %3906 = vmatpush1.msra.mxu0 0.0
    %3907 = vmatprep.subr.mxu0 0.0
    %3908 = vmatpush1.msra.mxu0 0.0
    %3909 = vmatprep.subr.mxu0 0.0
    %3910 = vmatpush1.msra.mxu0 0.0
    %3911 = vmatprep.subr.mxu0 0.0
    %3912 = vmatpush1.msra.mxu0 0.0
    %3913 = vmatprep.subr.mxu0 0.0
    %3914 = vmatpush1.msra.mxu0 0.0
    %3915 = vmatprep.mubr.f32.mxu0 0.0
    %3916 = vmatmul.mubr.f32.gmra.mrb[0].mxu0 %v3846
    %v3917 = vpop.f32.mrb[0].mxu0
    %v3918 = vadd.f32 %v3843, %v3917
    %v3919 = vpop.f32.mrb[0].mxu0
    %3920 = vmatprep.mubr.f32.mxu0 0.0
    %3921 = vmatmul.mubr.f32.gmra.mrb[0].mxu0 %v3849
    %v3922 = vpop.f32.mrb[0].mxu0
    %v3923 = vadd.f32 %v3843, %v3922
    %v3924 = vpop.f32.mrb[0].mxu0
    %3925 = vdwg.mxu0
    %v3926 = vadd.f32 %v2176, %v3918
    %v3927 = vadd.f32 %v2177, %v3923
    %v3928 = vsel %vm208, %v3926, 0.0
    %3929 = vadd.xlane.f32.xlu0 %v3928
    %v3930 = vpop.xlane.xlu0 %3929
    %v3931 = vsel %vm208, %v3927, 0.0
    %3932 = vadd.xlane.f32.xlu0 %v3931
    %v3933 = vpop.xlane.xlu0 %3932
    %v3934 = vmul.f32 %v3930, %v1920
    %v3935 = vmul.f32 %v3933, %v1920
    %v3936 = vsub.f32 %v3926, %v3934
    %v3937 = vsub.f32 %v3927, %v3935
    %v3938 = vmul.f32 %v3936, %v3936
    %v3939 = vmul.f32 %v3937, %v3937
    %v3940 = vsel %vm208, %v3938, 0.0
    %3941 = vadd.xlane.f32.xlu0 %v3940
    %v3942 = vpop.xlane.xlu0 %3941
    %v3943 = vsel %vm208, %v3939, 0.0
    %3944 = vadd.xlane.f32.xlu0 %v3943
    %v3945 = vpop.xlane.xlu0 %3944
    %v3946 = vmul.f32 %v3942, %v1920
    %v3947 = vmul.f32 %v3945, %v1920
    %v3948 = vadd.f32 %v3946, 1e-05
    %v3949 = vadd.f32 %v3947, 1e-05
    %v3950 = vrsqrt.pop %v3948
    %v3951 = vrsqrt.pop %v3949
    %v3952 = vmul.f32 %v3936, %v3950
    %v3953 = vmul.f32 %v3937, %v3951
    %v3955 = vlaneseq
    %v3956 = vshrl.u32 %v3955, 7
    %v3957 = vsub.s32 0, %v3956
    %v3958 = vrot.slane %v2225, %v3957
    %v3960 = vmul.f32 %v3952, %v3958
    %v3961 = vmul.f32 %v3953, %v3958
    %v3963 = vlaneseq
    %v3964 = vshrl.u32 %v3963, 7
    %v3965 = vsub.s32 0, %v3964
    %v3966 = vrot.slane %v2227, %v3965
    %v3968 = vadd.f32 %v3960, %v3966
    %v3969 = vadd.f32 %v3961, %v3966
    %v3971 = vlaneseq
    %v3972 = vshrl.u32 %v3971, 7
    %v3973 = vsub.s32 0, %v3972
    %v3974 = vrot.slane %v2212, %v3973
    %v3977 = vsel %vm208, %v3968, 0
    %v3980 = vsel %vm208, %v3969, 0
    %3982 = vmatprep.subr.mxu0 0.0
    %3983 = vmatpush1.msra.mxu0 %v2207
    %3984 = vmatprep.subr.mxu0 0.0
    %3985 = vmatpush1.msra.mxu0 %v2208
    %3986 = vmatprep.subr.mxu0 0.0
    %3987 = vmatpush1.msra.mxu0 %v2209
    %3988 = vmatprep.subr.mxu0 0.0
    %3989 = vmatpush1.msra.mxu0 %v2210
    %3990 = vmatprep.subr.mxu0 0.0
    %3991 = vmatpush1.msra.mxu0 0.0
    %3992 = vmatprep.subr.mxu0 0.0
    %3993 = vmatpush1.msra.mxu0 0.0
    %3994 = vmatprep.subr.mxu0 0.0
    %3995 = vmatpush1.msra.mxu0 0.0
    %3996 = vmatprep.subr.mxu0 0.0
    %3997 = vmatpush1.msra.mxu0 0.0
    %3998 = vmatprep.subr.mxu0 0.0
    %3999 = vmatpush1.msra.mxu0 0.0
    %4000 = vmatprep.subr.mxu0 0.0
    %4001 = vmatpush1.msra.mxu0 0.0
    %4002 = vmatprep.subr.mxu0 0.0
    %4003 = vmatpush1.msra.mxu0 0.0
    %4004 = vmatprep.subr.mxu0 0.0
    %4005 = vmatpush1.msra.mxu0 0.0
    %4006 = vmatprep.subr.mxu0 0.0
    %4007 = vmatpush1.msra.mxu0 0.0
    %4008 = vmatprep.subr.mxu0 0.0
    %4009 = vmatpush1.msra.mxu0 0.0
    %4010 = vmatprep.subr.mxu0 0.0
    %4011 = vmatpush1.msra.mxu0 0.0
    %4012 = vmatprep.subr.mxu0 0.0
    %4013 = vmatpush1.msra.mxu0 0.0
    %4014 = vmatprep.subr.mxu0 0.0
    %4015 = vmatpush1.msra.mxu0 0.0
    %4016 = vmatprep.subr.mxu0 0.0
    %4017 = vmatpush1.msra.mxu0 0.0
    %4018 = vmatprep.subr.mxu0 0.0
    %4019 = vmatpush1.msra.mxu0 0.0
    %4020 = vmatprep.subr.mxu0 0.0
    %4021 = vmatpush1.msra.mxu0 0.0
    %4022 = vmatprep.subr.mxu0 0.0
    %4023 = vmatpush1.msra.mxu0 0.0
    %4024 = vmatprep.subr.mxu0 0.0
    %4025 = vmatpush1.msra.mxu0 0.0
    %4026 = vmatprep.subr.mxu0 0.0
    %4027 = vmatpush1.msra.mxu0 0.0
    %4028 = vmatprep.subr.mxu0 0.0
    %4029 = vmatpush1.msra.mxu0 0.0
    %4030 = vmatprep.subr.mxu0 0.0
    %4031 = vmatpush1.msra.mxu0 0.0
    %4032 = vmatprep.subr.mxu0 0.0
    %4033 = vmatpush1.msra.mxu0 0.0
    %4034 = vmatprep.subr.mxu0 0.0
    %4035 = vmatpush1.msra.mxu0 0.0
    %4036 = vmatprep.subr.mxu0 0.0
    %4037 = vmatpush1.msra.mxu0 0.0
    %4038 = vmatprep.subr.mxu0 0.0
    %4039 = vmatpush1.msra.mxu0 0.0
    %4040 = vmatprep.subr.mxu0 0.0
    %4041 = vmatpush1.msra.mxu0 0.0
    %4042 = vmatprep.subr.mxu0 0.0
    %4043 = vmatpush1.msra.mxu0 0.0
    %4044 = vmatprep.subr.mxu0 0.0
    %4045 = vmatpush1.msra.mxu0 0.0
    %4046 = vmatprep.mubr.f32.mxu0 0.0
    %4047 = vmatmul.mubr.f32.gmra.mrb[0].mxu0 %v3977
    %v4048 = vpop.f32.mrb[0].mxu0
    %v4049 = vadd.f32 %v3974, %v4048
    %v4050 = vpop.f32.mrb[0].mxu0
    %4051 = vmatprep.mubr.f32.mxu0 0.0
    %4052 = vmatmul.mubr.f32.gmra.mrb[0].mxu0 %v3980
    %v4053 = vpop.f32.mrb[0].mxu0
    %v4054 = vadd.f32 %v3974, %v4053
    %v4055 = vpop.f32.mrb[0].mxu0
    %4056 = vdwg.mxu0
    %v4057 = vmax.f32 %v4049, 0.0
    %v4058 = vmax.f32 %v4054, 0.0
    %v4060 = vlaneseq
    %v4061 = vshrl.u32 %v4060, 7
    %v4062 = vsub.s32 0, %v4061
    %v4063 = vrot.slane %v2223, %v4062
    %v4066 = vsel %vm2052, %v4057, 0
    %v4069 = vsel %vm2052, %v4058, 0
    %4071 = vmatprep.subr.mxu0 0.0
    %4072 = vmatpush1.msra.mxu0 %v2214
    %4073 = vmatprep.subr.mxu0 0.0
    %4074 = vmatpush1.msra.mxu0 %v2215
    %4075 = vmatprep.subr.mxu0 0.0
    %4076 = vmatpush1.msra.mxu0 %v2216
    %4077 = vmatprep.subr.mxu0 0.0
    %4078 = vmatpush1.msra.mxu0 %v2217
    %4079 = vmatprep.subr.mxu0 0.0
    %4080 = vmatpush1.msra.mxu0 %v2218
    %4081 = vmatprep.subr.mxu0 0.0
    %4082 = vmatpush1.msra.mxu0 %v2219
    %4083 = vmatprep.subr.mxu0 0.0
    %4084 = vmatpush1.msra.mxu0 %v2220
    %4085 = vmatprep.subr.mxu0 0.0
    %4086 = vmatpush1.msra.mxu0 %v2221
    %4087 = vmatprep.subr.mxu0 0.0
    %4088 = vmatpush1.msra.mxu0 0.0
    %4089 = vmatprep.subr.mxu0 0.0
    %4090 = vmatpush1.msra.mxu0 0.0
    %4091 = vmatprep.subr.mxu0 0.0
    %4092 = vmatpush1.msra.mxu0 0.0
    %4093 = vmatprep.subr.mxu0 0.0
    %4094 = vmatpush1.msra.mxu0 0.0
    %4095 = vmatprep.subr.mxu0 0.0
    %4096 = vmatpush1.msra.mxu0 0.0
    %4097 = vmatprep.subr.mxu0 0.0
    %4098 = vmatpush1.msra.mxu0 0.0
    %4099 = vmatprep.subr.mxu0 0.0
    %4100 = vmatpush1.msra.mxu0 0.0
    %4101 = vmatprep.subr.mxu0 0.0
    %4102 = vmatpush1.msra.mxu0 0.0
    %4103 = vmatprep.subr.mxu0 0.0
    %4104 = vmatpush1.msra.mxu0 0.0
    %4105 = vmatprep.subr.mxu0 0.0
    %4106 = vmatpush1.msra.mxu0 0.0
    %4107 = vmatprep.subr.mxu0 0.0
    %4108 = vmatpush1.msra.mxu0 0.0
    %4109 = vmatprep.subr.mxu0 0.0
    %4110 = vmatpush1.msra.mxu0 0.0
    %4111 = vmatprep.subr.mxu0 0.0
    %4112 = vmatpush1.msra.mxu0 0.0
    %4113 = vmatprep.subr.mxu0 0.0
    %4114 = vmatpush1.msra.mxu0 0.0
    %4115 = vmatprep.subr.mxu0 0.0
    %4116 = vmatpush1.msra.mxu0 0.0
    %4117 = vmatprep.subr.mxu0 0.0
    %4118 = vmatpush1.msra.mxu0 0.0
    %4119 = vmatprep.subr.mxu0 0.0
    %4120 = vmatpush1.msra.mxu0 0.0
    %4121 = vmatprep.subr.mxu0 0.0
    %4122 = vmatpush1.msra.mxu0 0.0
    %4123 = vmatprep.subr.mxu0 0.0
    %4124 = vmatpush1.msra.mxu0 0.0
    %4125 = vmatprep.subr.mxu0 0.0
    %4126 = vmatpush1.msra.mxu0 0.0
    %4127 = vmatprep.subr.mxu0 0.0
    %4128 = vmatpush1.msra.mxu0 0.0
    %4129 = vmatprep.subr.mxu0 0.0
    %4130 = vmatpush1.msra.mxu0 0.0
    %4131 = vmatprep.subr.mxu0 0.0
    %4132 = vmatpush1.msra.mxu0 0.0
    %4133 = vmatprep.subr.mxu0 0.0
    %4134 = vmatpush1.msra.mxu0 0.0
    %4135 = vmatprep.mubr.f32.mxu0 0.0
    %4136 = vmatmul.mubr.f32.gmra.mrb[0].mxu0 %v4066
    %v4137 = vpop.f32.mrb[0].mxu0
    %v4138 = vadd.f32 %v4063, %v4137
    %v4139 = vpop.f32.mrb[0].mxu0
    %4140 = vmatprep.mubr.f32.mxu0 0.0
    %4141 = vmatmul.mubr.f32.gmra.mrb[0].mxu0 %v4069
    %v4142 = vpop.f32.mrb[0].mxu0
    %v4143 = vadd.f32 %v4063, %v4142
    %v4144 = vpop.f32.mrb[0].mxu0
    %4145 = vdwg.mxu0
    %v4146 = vadd.f32 %v3968, %v4138
    %v4147 = vadd.f32 %v3969, %v4143
    %v4148 = vsel %vm208, %v4146, 0.0
    %4149 = vadd.xlane.f32.xlu0 %v4148
    %v4150 = vpop.xlane.xlu0 %4149
    %v4151 = vsel %vm208, %v4147, 0.0
    %4152 = vadd.xlane.f32.xlu0 %v4151
    %v4153 = vpop.xlane.xlu0 %4152
    %v4154 = vmul.f32 %v4150, %v1920
    %v4155 = vmul.f32 %v4153, %v1920
    %v4156 = vsub.f32 %v4146, %v4154
    %v4157 = vsub.f32 %v4147, %v4155
    %v4158 = vmul.f32 %v4156, %v4156
    %v4159 = vmul.f32 %v4157, %v4157
    %v4160 = vsel %vm208, %v4158, 0.0
    %4161 = vadd.xlane.f32.xlu0 %v4160
    %v4162 = vpop.xlane.xlu0 %4161
    %v4163 = vsel %vm208, %v4159, 0.0
    %4164 = vadd.xlane.f32.xlu0 %v4163
    %v4165 = vpop.xlane.xlu0 %4164
    %v4166 = vmul.f32 %v4162, %v1920
    %v4167 = vmul.f32 %v4165, %v1920
    %v4168 = vadd.f32 %v4166, 1e-05
    %v4169 = vadd.f32 %v4167, 1e-05
    %v4170 = vrsqrt.pop %v4168
    %v4171 = vrsqrt.pop %v4169
    %v4172 = vmul.f32 %v4156, %v4170
    %v4173 = vmul.f32 %v4157, %v4171
    %v4175 = vlaneseq
    %v4176 = vshrl.u32 %v4175, 7
    %v4177 = vsub.s32 0, %v4176
    %v4178 = vrot.slane %v2229, %v4177
    %v4180 = vmul.f32 %v4172, %v4178
    %v4181 = vmul.f32 %v4173, %v4178
    %v4183 = vlaneseq
    %v4184 = vshrl.u32 %v4183, 7
    %v4185 = vsub.s32 0, %v4184
    %v4186 = vrot.slane %v2231, %v4185
    %v4188 = vadd.f32 %v4180, %v4186
    %v4189 = vadd.f32 %v4181, %v4186
    %v4190 = vld [vmem:[%s18] sm:$0xff]
    %v4191 = vld [vmem:[%s18 + $0x8] sm:$0xff]
    %v4192 = vld [vmem:[%s18 + $0x10] sm:$0xff]
    %v4193 = vld [vmem:[%s18 + $0x18] sm:$0xff]
    %v4194 = vld [vmem:[%s19] sm:$0x1]
    %v4196 = vlaneseq
    %v4197 = vshrl.u32 %v4196, 7
    %v4198 = vsub.s32 0, %v4197
    %v4199 = vrot.slane %v4194, %v4198
    %v4203 = vrot.slane %v4189, 7
    %vm4204 = vcmask 1041409
    %v4205 = vsel %vm4204, %v4203, %v4188
    %v4206 = vsel %vm208, %v4205, 0
    %4208 = vmatprep.subr.mxu0 0.0
    %4209 = vmatpush1.msra.mxu0 %v4190
    %4210 = vmatprep.subr.mxu0 0.0
    %4211 = vmatpush1.msra.mxu0 %v4191
    %4212 = vmatprep.subr.mxu0 0.0
    %4213 = vmatpush1.msra.mxu0 %v4192
    %4214 = vmatprep.subr.mxu0 0.0
    %4215 = vmatpush1.msra.mxu0 %v4193
    %4216 = vmatprep.subr.mxu0 0.0
    %4217 = vmatpush1.msra.mxu0 0.0
    %4218 = vmatprep.subr.mxu0 0.0
    %4219 = vmatpush1.msra.mxu0 0.0
    %4220 = vmatprep.subr.mxu0 0.0
    %4221 = vmatpush1.msra.mxu0 0.0
    %4222 = vmatprep.subr.mxu0 0.0
    %4223 = vmatpush1.msra.mxu0 0.0
    %4224 = vmatprep.subr.mxu0 0.0
    %4225 = vmatpush1.msra.mxu0 0.0
    %4226 = vmatprep.subr.mxu0 0.0
    %4227 = vmatpush1.msra.mxu0 0.0
    %4228 = vmatprep.subr.mxu0 0.0
    %4229 = vmatpush1.msra.mxu0 0.0
    %4230 = vmatprep.subr.mxu0 0.0
    %4231 = vmatpush1.msra.mxu0 0.0
    %4232 = vmatprep.subr.mxu0 0.0
    %4233 = vmatpush1.msra.mxu0 0.0
    %4234 = vmatprep.subr.mxu0 0.0
    %4235 = vmatpush1.msra.mxu0 0.0
    %4236 = vmatprep.subr.mxu0 0.0
    %4237 = vmatpush1.msra.mxu0 0.0
    %4238 = vmatprep.subr.mxu0 0.0
    %4239 = vmatpush1.msra.mxu0 0.0
    %4240 = vmatprep.subr.mxu0 0.0
    %4241 = vmatpush1.msra.mxu0 0.0
    %4242 = vmatprep.subr.mxu0 0.0
    %4243 = vmatpush1.msra.mxu0 0.0
    %4244 = vmatprep.subr.mxu0 0.0
    %4245 = vmatpush1.msra.mxu0 0.0
    %4246 = vmatprep.subr.mxu0 0.0
    %4247 = vmatpush1.msra.mxu0 0.0
    %4248 = vmatprep.subr.mxu0 0.0
    %4249 = vmatpush1.msra.mxu0 0.0
    %4250 = vmatprep.subr.mxu0 0.0
    %4251 = vmatpush1.msra.mxu0 0.0
    %4252 = vmatprep.subr.mxu0 0.0
    %4253 = vmatpush1.msra.mxu0 0.0
    %4254 = vmatprep.subr.mxu0 0.0
    %4255 = vmatpush1.msra.mxu0 0.0
    %4256 = vmatprep.subr.mxu0 0.0
    %4257 = vmatpush1.msra.mxu0 0.0
    %4258 = vmatprep.subr.mxu0 0.0
    %4259 = vmatpush1.msra.mxu0 0.0
    %4260 = vmatprep.subr.mxu0 0.0
    %4261 = vmatpush1.msra.mxu0 0.0
    %4262 = vmatprep.subr.mxu0 0.0
    %4263 = vmatpush1.msra.mxu0 0.0
    %4264 = vmatprep.subr.mxu0 0.0
    %4265 = vmatpush1.msra.mxu0 0.0
    %4266 = vmatprep.subr.mxu0 0.0
    %4267 = vmatpush1.msra.mxu0 0.0
    %4268 = vmatprep.subr.mxu0 0.0
    %4269 = vmatpush1.msra.mxu0 0.0
    %4270 = vmatprep.subr.mxu0 0.0
    %4271 = vmatpush1.msra.mxu0 0.0
    %4272 = vmatprep.mubr.f32.mxu0 0.0
    %4273 = vmatmul.mubr.f32.gmra.mrb[0].mxu0 %v4206
    %v4274 = vpop.f32.mrb[0].mxu0
    %v4275 = vadd.f32 %v4199, %v4274
    %v4276 = vpop.f32.mrb[0].mxu0
    %4277 = vdwg.mxu0
    %4278 = vst [vmem:[#allocation14] sm:$0x3] %v4275
    // Predicated region
    $region110: #{tpu_custom_call.1} parent=1 // pred_check
      _
    $region111: #{tpu_custom_call.1} parent=1 // pred_check_branch
      %4280 = sbr.rel (0) target = $region113
    $region112: #{tpu_custom_call.1} parent=1 // pred_region
      %s4282 = ssub.s32 32, 32
      %4283 = vsyncadd [#allocation4], %s4282
      %s4285 = sshll.u32 [#allocation14], 4
      %s4286 = int_to_ptr.vmem [resolvable:$true] %s4285
      %4288 = dma.vmem_to_hbm [thread:$0]  %s4286, 32, %s20, [#allocation4]
    $region113: #{tpu_custom_call.1} parent=1 // pred_fallthru
      _
    // Predicated region
    $region114: #{tpu_custom_call.1} parent=1 // pred_check
      _
    $region115: #{tpu_custom_call.1} parent=1 // pred_check_branch
      %4290 = sbr.rel (0) target = $region117
    $region116: #{tpu_custom_call.1} parent=1 // pred_region
      %4291 = dma.done [#allocation4], 32
    $region117: #{tpu_custom_call.1} parent=1 // pred_fallthru
      _
    %4292 = vsyncpa [#allocation3], 1
    %4293 = vsyncpa [#allocation6], 1
    %4294 = vsyncpa [#allocation9], 1
    %4295 = vsyncpa [#allocation12], 1
    %4296 = vsyncpa [#allocation4], 1

</llo_original>
